<compile_context>
chip_gen: v7x
topology: tpu7x:2x2x1
jax: 0.10.0
libtpu: 0.0.40
codegen_flags: <defaults>
</compile_context>

<pallas_src>
import functools

import jax
import jax.numpy as jnp
from jax.experimental import pallas as pl
from jax.experimental.pallas import tpu as pltpu

K1P = 32           # conv1 im2col K (25) padded to a sublane multiple
C1 = 32            # conv1 out channels 20 -> 32  (conv2 K = 25*32 = 800)
C2 = 64            # conv2 out channels 50 -> 64  (fc1   K = 16*64 = 1024)
FC_H = 512         # fc1 hidden 500 -> 512
FC_O = 128         # fc2 classes 10 -> 128 (lane dense for the softmax reduction)
NEG_BIG = -1e30    # bias fill for padded classes (exp underflows to exactly 0)


def _round_up(x, m):
    return (x + m - 1) // m * m


def _choose_tile(m, tm_max):
    # >=2 grid steps when M allows (v7x: 2 TensorCores over "parallel" axes),
    # 16-row granularity (native bf16 sublane packing), capped by tm_max.
    half = _round_up(max((m + 1) // 2, 16), 16)
    return min(tm_max, half)


# ----------------------------------------------------------------------------
# Pallas kernels
# ----------------------------------------------------------------------------
def _linear_kernel(x_ref, w_ref, b_ref, o_ref, *, apply_relu):
    # bf16 operands, f32 accumulation on the MXU; f32 epilogue on the VPU.
    acc = jnp.dot(x_ref[...], w_ref[...], preferred_element_type=jnp.float32)
    acc = acc + b_ref[...]
    if apply_relu:
        acc = jnp.maximum(acc, 0.0)
    o_ref[...] = acc.astype(o_ref.dtype)


def _maxpool_kernel(x_ref, o_ref):
    # x block: (bs, 4, PH*PW, C) -- the 4 pool taps as a leading dim.
    o_ref[...] = jnp.maximum(jnp.maximum(x_ref[:, 0], x_ref[:, 1]),
                             jnp.maximum(x_ref[:, 2], x_ref[:, 3]))


def _fc_tail_kernel(x_ref, w1_ref, b1_ref, w2_ref, b2_ref, o_ref):
    # fc1 + ReLU + fc2 + log_softmax fused; hidden (tm, 512) never leaves VMEM.
    h = jnp.dot(x_ref[...], w1_ref[...], preferred_element_type=jnp.float32)
    h = jnp.maximum(h + b1_ref[...], 0.0)
    logits = jnp.dot(h.astype(w2_ref.dtype), w2_ref[...],
                     preferred_element_type=jnp.float32)
    logits = logits + b2_ref[...]                      # padded classes get -1e30
    m = jnp.max(logits, axis=-1, keepdims=True)
    s = logits - m
    lse = jnp.log(jnp.sum(jnp.exp(s), axis=-1, keepdims=True))
    o_ref[...] = (s - lse).astype(o_ref.dtype)


# ----------------------------------------------------------------------------
# Pallas wrappers
# ----------------------------------------------------------------------------
def pallas_linear(x, w, b, *, relu, out_dtype=jnp.float32, tm_max=1024):
    """y = x @ w + b (optionally ReLU). x: (M, K), w: (K, Np) bf16, b: (1, Np) f32."""
    M, K = x.shape
    _, Np = w.shape
    tm = _choose_tile(M, tm_max)
    Mp = _round_up(M, tm)
    if Mp != M:
        x = jnp.pad(x, ((0, Mp - M), (0, 0)))
    out = pl.pallas_call(
        functools.partial(_linear_kernel, apply_relu=relu),
        out_shape=jax.ShapeDtypeStruct((Mp, Np), out_dtype),
        grid=(Mp // tm,),
        in_specs=[
            pl.BlockSpec((tm, K), lambda i: (i, 0)),
            pl.BlockSpec((K, Np), lambda i: (0, 0)),
            pl.BlockSpec((1, Np), lambda i: (0, 0)),
        ],
        out_specs=pl.BlockSpec((tm, Np), lambda i: (i, 0)),
        compiler_params=pltpu.CompilerParams(
            dimension_semantics=("parallel",)),
    )(x.astype(jnp.bfloat16), w, b)
    return out[:M] if Mp != M else out


def pallas_maxpool2x2_nhwc(y, *, c_keep, bs_max=8):
    """2x2 max pool, stride 2, channels-last, keeping only the first c_keep channels.

    y: (N, OH, OW, C).  The channel slice feeds the next layer's (smaller)
    contraction, so the pool and the feeding transpose only touch c_keep lanes.
    """
    n, oh, ow, c = y.shape
    ph, pw = oh // 2, ow // 2
    ys = y[..., :c_keep]
    # (N, OH, OW, Ck) -> (N, 4, PH*PW, Ck): the 4 pool taps as a leading dim.
    yr = (ys.reshape(n, ph, 2, pw, 2, c_keep)
            .transpose(0, 2, 4, 1, 3, 5)
            .reshape(n, 4, ph * pw, c_keep))
    bs = max(1, min(bs_max, n // 2)) if n >= 2 else 1   # batch the grid, keep >=2 steps
    npad = _round_up(n, bs)
    if npad != n:
        yr = jnp.pad(yr, ((0, npad - n), (0, 0), (0, 0), (0, 0)))
    out = pl.pallas_call(
        _maxpool_kernel,
        out_shape=jax.ShapeDtypeStruct((npad, ph * pw, c_keep), y.dtype),
        grid=(npad // bs,),
        in_specs=[pl.BlockSpec((bs, 4, ph * pw, c_keep), lambda i: (i, 0, 0, 0))],
        out_specs=pl.BlockSpec((bs, ph * pw, c_keep), lambda i: (i, 0, 0)),
        compiler_params=pltpu.CompilerParams(
            dimension_semantics=("parallel",)),
    )(yr)
    return out[:n].reshape(n, ph, pw, c_keep)


def pallas_fc_tail(x, w1, b1, w2, b2, *, tm_max=1024):
    """log_softmax(relu(x @ w1 + b1) @ w2 + b2) in one kernel. x: (M, K)."""
    M, K = x.shape
    H = w1.shape[1]
    C = w2.shape[1]
    tm = _choose_tile(M, tm_max)
    Mp = _round_up(M, tm)
    if Mp != M:
        x = jnp.pad(x, ((0, Mp - M), (0, 0)))
    out = pl.pallas_call(
        _fc_tail_kernel,
        out_shape=jax.ShapeDtypeStruct((Mp, C), jnp.float32),
        grid=(Mp // tm,),
        in_specs=[
            pl.BlockSpec((tm, K), lambda i: (i, 0)),
            pl.BlockSpec((K, H), lambda i: (0, 0)),
            pl.BlockSpec((1, H), lambda i: (0, 0)),
            pl.BlockSpec((H, C), lambda i: (0, 0)),
            pl.BlockSpec((1, C), lambda i: (0, 0)),
        ],
        out_specs=pl.BlockSpec((tm, C), lambda i: (i, 0)),
        compiler_params=pltpu.CompilerParams(
            dimension_semantics=("parallel",)),
    )(x.astype(jnp.bfloat16), w1, b1, w2, b2)
    return out[:M]


# ----------------------------------------------------------------------------
# Glue: im2col in NHWC, (i, j, c)-ordered columns (slicing/stack only)
# ----------------------------------------------------------------------------
def im2col_nhwc(x, kh, kw):
    n, h, w, c = x.shape
    oh, ow = h - kh + 1, w - kw + 1
    cols = [x[:, i:i + oh, j:j + ow, :] for i in range(kh) for j in range(kw)]
    patches = jnp.stack(cols, axis=3)                    # (n, oh, ow, kh*kw, c)
    return patches.reshape(n * oh * ow, kh * kw * c), oh, ow


# ----------------------------------------------------------------------------
# Params: PyTorch-layout init + one-time prepack (outside the jitted forward)
# ----------------------------------------------------------------------------
def init_params(key):
    ks = jax.random.split(key, 8)
    p = {}
    p["conv1_w"] = 0.1 * jax.random.normal(ks[0], (20, 1, 5, 5), jnp.float32)
    p["conv1_b"] = 0.1 * jax.random.normal(ks[1], (20,), jnp.float32)
    p["conv2_w"] = 0.05 * jax.random.normal(ks[2], (50, 20, 5, 5), jnp.float32)
    p["conv2_b"] = 0.05 * jax.random.normal(ks[3], (50,), jnp.float32)
    # fc1 rows ordered (c, h, w) to mimic PyTorch's x.view(-1, 4*4*50) flatten.
    p["fc1_w"] = 0.05 * jax.random.normal(ks[4], (800, 500), jnp.float32)
    p["fc1_b"] = 0.05 * jax.random.normal(ks[5], (500,), jnp.float32)
    p["fc2_w"] = 0.05 * jax.random.normal(ks[6], (500, 10), jnp.float32)
    p["fc2_b"] = 0.05 * jax.random.normal(ks[7], (10,), jnp.float32)
    return p


def prepack_params(p):
    """One-time weight repacking (pad / transpose / bf16 cast) done outside jit."""
    q = {}
    # conv1: (20,1,5,5) -> (kh,kw,cin,cout) -> (25,20), pad K 25->32, cout 20->C1.
    w1 = jnp.transpose(p["conv1_w"], (2, 3, 1, 0)).reshape(25, 20)
    q["w1"] = jnp.pad(w1, ((0, K1P - 25), (0, C1 - 20))).astype(jnp.bfloat16)
    q["b1"] = jnp.pad(p["conv1_b"], (0, C1 - 20)).reshape(1, C1).astype(jnp.float32)
    # conv2: (50,20,5,5) -> (kh,kw,cin,cout), pad cin 20->C1, cout 50->C2 -> (800, 64).
    w2 = jnp.transpose(p["conv2_w"], (2, 3, 1, 0))
    w2 = jnp.pad(w2, ((0, 0), (0, 0), (0, C1 - 20), (0, C2 - 50)))
    q["w2"] = w2.reshape(25 * C1, C2).astype(jnp.bfloat16)
    q["b2"] = jnp.pad(p["conv2_b"], (0, C2 - 50)).reshape(1, C2).astype(jnp.float32)
    # fc1: rows from PyTorch (c,h,w) flatten -> ours (h, w, c_pad64); hidden 500->512.
    wf1 = p["fc1_w"].reshape(50, 4, 4, 500)
    wf1 = jnp.pad(wf1, ((0, C2 - 50), (0, 0), (0, 0), (0, FC_H - 500)))
    wf1 = jnp.transpose(wf1, (1, 2, 0, 3)).reshape(4 * 4 * C2, FC_H)
    q["wf1"] = wf1.astype(jnp.bfloat16)
    q["bf1"] = jnp.pad(p["fc1_b"], (0, FC_H - 500)).reshape(1, FC_H).astype(jnp.float32)
    # fc2: hidden 500->512, classes 10->128; padded class biases -1e30.
    q["wf2"] = jnp.pad(p["fc2_w"], ((0, FC_H - 500), (0, FC_O - 10))).astype(jnp.bfloat16)
    q["bf2"] = jnp.pad(p["fc2_b"], (0, FC_O - 10),
                       constant_values=NEG_BIG).reshape(1, FC_O).astype(jnp.float32)
    return q


# ----------------------------------------------------------------------------
# Forward
# ----------------------------------------------------------------------------
def net_forward(packed, x):
    # x: (N, 1, 28, 28) NCHW float32
    n = x.shape[0]
    bf16 = jnp.bfloat16

    # ---- conv1 + ReLU (im2col + padded matmul, bf16 MXU; K=32 streaming pass) ----
    x_nhwc = jnp.transpose(x, (0, 2, 3, 1))                         # (N,28,28,1)
    p1, oh1, ow1 = im2col_nhwc(x_nhwc, 5, 5)                        # (N*576, 25)
    p1 = jnp.pad(p1, ((0, 0), (0, K1P - 25)))                       # K 25 -> 32
    y1 = pallas_linear(p1, packed["w1"], packed["b1"], relu=True,
                       out_dtype=bf16, tm_max=2048)                 # (N*576, 32)
    y1 = y1.reshape(n, oh1, ow1, C1)                                # (N,24,24,32)
    y1 = pallas_maxpool2x2_nhwc(y1, c_keep=C1)                      # (N,12,12,32)

    # ---- conv2 + ReLU (K = 25*32 = 800; padded cin rows are zero, so exact) ----
    p2, oh2, ow2 = im2col_nhwc(y1, 5, 5)                            # (N*64, 800)
    y2 = pallas_linear(p2, packed["w2"], packed["b2"], relu=True,
                       out_dtype=bf16, tm_max=1024)                 # (N*64, 64)
    y2 = y2.reshape(n, oh2, ow2, C2)                                # (N,8,8,64)
    y2 = pallas_maxpool2x2_nhwc(y2, c_keep=C2)                      # (N,4,4,64)

    # ---- fused fc1 + ReLU + fc2 + log_softmax (single pallas_call, K=1024) ----
    feat = y2.reshape(n, 4 * 4 * C2)                                # rows (h, w, c_pad)
    out = pallas_fc_tail(feat, packed["wf1"], packed["bf1"],
                         packed["wf2"], packed["bf2"], tm_max=1024)  # (N, 128) f32
    return out[:, :10]                                               # real classes


if __name__ == "__main__":
    key = jax.random.PRNGKey(0)
    k_param, k_input = jax.random.split(key)
    params = init_params(k_param)
    packed = prepack_params(params)          # one-time repack, outside the jitted forward
    x = jax.random.normal(k_input, (2, 1, 28, 28), jnp.float32)

    fwd = jax.jit(net_forward)
    out = jax.block_until_ready(fwd(packed, x))

    assert out.shape == (2, 10)
    # log_softmax rows should (approximately) normalize: sum(exp) == 1
    assert jnp.allclose(jnp.sum(jnp.exp(out), axis=1), 1.0, atol=1e-4)
    print("KERNEL_OK")
</pallas_src>

<mosaic_0001>
module attributes {stable_mosaic.version = 11 : i64} {
  func.func @_linear_kernel(%arg0: i32, %arg1: memref<576x32xbf16, #tpu.memory_space<vmem>>, %arg2: memref<32x32xbf16, #tpu.memory_space<vmem>>, %arg3: memref<1x32xf32, #tpu.memory_space<vmem>>, %arg4: memref<576x32xbf16, #tpu.memory_space<vmem>>) attributes {dimension_semantics = [#tpu.dimension_semantics<parallel>], iteration_bounds = array<i64: 2>, scalar_prefetch = 0 : i64, scratch_operands = 0 : i64, tpu.core_type = #tpu.core_type<tc>, window_params = [{transform_indices = @transform_0, window_bounds = array<i64: 576, 32>}, {pipeline_mode = #tpu.pipeline_mode<synchronous>, transform_indices = @transform_1, window_bounds = array<i64: 32, 32>}, {pipeline_mode = #tpu.pipeline_mode<synchronous>, transform_indices = @transform_2, window_bounds = array<i64: 1, 32>}, {transform_indices = @transform_3, window_bounds = array<i64: 576, 32>}]} {
    %c0 = arith.constant 0 : index
    %c0_0 = arith.constant 0 : index
    %0 = vector.load %arg1[%c0, %c0_0] : memref<576x32xbf16, #tpu.memory_space<vmem>>, vector<576x32xbf16>
    %c0_1 = arith.constant 0 : index
    %c0_2 = arith.constant 0 : index
    %1 = vector.load %arg2[%c0_1, %c0_2] : memref<32x32xbf16, #tpu.memory_space<vmem>>, vector<32x32xbf16>
    %cst = arith.constant dense<0.000000e+00> : vector<576x32xf32>
    %2 = tpu.matmul %0, %1, %cst {dimension_numbers = #tpu.dot_dimension_numbers<[1], [0], [0], [1], [0, 0, 1, 1], [], []>} : vector<576x32xbf16>, vector<32x32xbf16>, vector<576x32xf32> -> vector<576x32xf32>
    %c0_3 = arith.constant 0 : index
    %c0_4 = arith.constant 0 : index
    %3 = vector.load %arg3[%c0_3, %c0_4] : memref<1x32xf32, #tpu.memory_space<vmem>>, vector<1x32xf32>
    %4 = vector.broadcast %3 : vector<1x32xf32> to vector<576x32xf32>
    %5 = arith.addf %2, %4 : vector<576x32xf32>
    %cst_5 = arith.constant 0.000000e+00 : f32
    %6 = vector.broadcast %cst_5 : f32 to vector<576x32xf32>
    %7 = arith.maximumf %5, %6 : vector<576x32xf32>
    %8 = arith.truncf %7 : vector<576x32xf32> to vector<576x32xbf16>
    %c0_6 = arith.constant 0 : index
    %c0_7 = arith.constant 0 : index
    %9 = vector.load %arg4[%c0_6, %c0_7] : memref<576x32xbf16, #tpu.memory_space<vmem>>, vector<576x32xbf16>
    tpu.vector_store %arg4[%c0_6, %c0_7], %8 {strides = array<i32>} : memref<576x32xbf16, #tpu.memory_space<vmem>>, vector<576x32xbf16>,
    return
  }
  func.func @transform_0(%arg0: i32) -> (i32, i32) {
    %c0_i32 = arith.constant 0 : i32
    %c0_i32_0 = arith.constant 0 : i32
    return %arg0, %c0_i32 : i32, i32
  }
  func.func @transform_1(%arg0: i32) -> (i32, i32) {
    %c0_i32 = arith.constant 0 : i32
    %c0_i32_0 = arith.constant 0 : i32
    %c0_i32_1 = arith.constant 0 : i32
    return %c0_i32, %c0_i32_0 : i32, i32
  }
  func.func @transform_2(%arg0: i32) -> (i32, i32) {
    %c0_i32 = arith.constant 0 : i32
    %c0_i32_0 = arith.constant 0 : i32
    %c0_i32_1 = arith.constant 0 : i32
    return %c0_i32, %c0_i32_0 : i32, i32
  }
  func.func @transform_3(%arg0: i32) -> (i32, i32) {
    %c0_i32 = arith.constant 0 : i32
    %c0_i32_0 = arith.constant 0 : i32
    return %arg0, %c0_i32 : i32, i32
  }
}

module attributes {stable_mosaic.version = 11 : i64} {
  func.func @_maxpool_kernel(%arg0: i32, %arg1: memref<1x4x144x32xbf16, #tpu.memory_space<vmem>>, %arg2: memref<1x144x32xbf16, #tpu.memory_space<vmem>>) attributes {dimension_semantics = [#tpu.dimension_semantics<parallel>], iteration_bounds = array<i64: 2>, scalar_prefetch = 0 : i64, scratch_operands = 0 : i64, tpu.core_type = #tpu.core_type<tc>, window_params = [{transform_indices = @transform_0, window_bounds = array<i64: 1, 4, 144, 32>}, {transform_indices = @transform_1, window_bounds = array<i64: 1, 144, 32>}]} {
    %c0 = arith.constant 0 : index
    %c0_0 = arith.constant 0 : index
    %c0_1 = arith.constant 0 : index
    %c0_2 = arith.constant 0 : index
    %0 = vector.load %arg1[%c0, %c0_0, %c0_1, %c0_2] : memref<1x4x144x32xbf16, #tpu.memory_space<vmem>>, vector<1x1x144x32xbf16>
    %1 = vector.shape_cast %0 : vector<1x1x144x32xbf16> to vector<1x144x32xbf16>
    %c0_3 = arith.constant 0 : index
    %c1 = arith.constant 1 : index
    %c0_4 = arith.constant 0 : index
    %c0_5 = arith.constant 0 : index
    %2 = vector.load %arg1[%c0_3, %c1, %c0_4, %c0_5] : memref<1x4x144x32xbf16, #tpu.memory_space<vmem>>, vector<1x1x144x32xbf16>
    %3 = vector.shape_cast %2 : vector<1x1x144x32xbf16> to vector<1x144x32xbf16>
    %4 = arith.maximumf %1, %3 : vector<1x144x32xbf16>
    %c0_6 = arith.constant 0 : index
    %c2 = arith.constant 2 : index
    %c0_7 = arith.constant 0 : index
    %c0_8 = arith.constant 0 : index
    %5 = vector.load %arg1[%c0_6, %c2, %c0_7, %c0_8] : memref<1x4x144x32xbf16, #tpu.memory_space<vmem>>, vector<1x1x144x32xbf16>
    %6 = vector.shape_cast %5 : vector<1x1x144x32xbf16> to vector<1x144x32xbf16>
    %c0_9 = arith.constant 0 : index
    %c3 = arith.constant 3 : index
    %c0_10 = arith.constant 0 : index
    %c0_11 = arith.constant 0 : index
    %7 = vector.load %arg1[%c0_9, %c3, %c0_10, %c0_11] : memref<1x4x144x32xbf16, #tpu.memory_space<vmem>>, vector<1x1x144x32xbf16>
    %8 = vector.shape_cast %7 : vector<1x1x144x32xbf16> to vector<1x144x32xbf16>
    %9 = arith.maximumf %6, %8 : vector<1x144x32xbf16>
    %10 = arith.maximumf %4, %9 : vector<1x144x32xbf16>
    %c0_12 = arith.constant 0 : index
    %c0_13 = arith.constant 0 : index
    %c0_14 = arith.constant 0 : index
    %11 = vector.load %arg2[%c0_12, %c0_13, %c0_14] : memref<1x144x32xbf16, #tpu.memory_space<vmem>>, vector<1x144x32xbf16>
    tpu.vector_store %arg2[%c0_12, %c0_13, %c0_14], %10 {strides = array<i32>} : memref<1x144x32xbf16, #tpu.memory_space<vmem>>, vector<1x144x32xbf16>,
    return
  }
  func.func @transform_0(%arg0: i32) -> (i32, i32, i32, i32) {
    %c0_i32 = arith.constant 0 : i32
    %c0_i32_0 = arith.constant 0 : i32
    %c0_i32_1 = arith.constant 0 : i32
    %c0_i32_2 = arith.constant 0 : i32
    return %arg0, %c0_i32, %c0_i32_0, %c0_i32_1 : i32, i32, i32, i32
  }
  func.func @transform_1(%arg0: i32) -> (i32, i32, i32) {
    %c0_i32 = arith.constant 0 : i32
    %c0_i32_0 = arith.constant 0 : i32
    %c0_i32_1 = arith.constant 0 : i32
    return %arg0, %c0_i32, %c0_i32_0 : i32, i32, i32
  }
}

module attributes {stable_mosaic.version = 11 : i64} {
  func.func @_linear_kernel(%arg0: i32, %arg1: memref<64x800xbf16, #tpu.memory_space<vmem>>, %arg2: memref<800x64xbf16, #tpu.memory_space<vmem>>, %arg3: memref<1x64xf32, #tpu.memory_space<vmem>>, %arg4: memref<64x64xbf16, #tpu.memory_space<vmem>>) attributes {dimension_semantics = [#tpu.dimension_semantics<parallel>], iteration_bounds = array<i64: 2>, scalar_prefetch = 0 : i64, scratch_operands = 0 : i64, tpu.core_type = #tpu.core_type<tc>, window_params = [{transform_indices = @transform_0, window_bounds = array<i64: 64, 800>}, {pipeline_mode = #tpu.pipeline_mode<synchronous>, transform_indices = @transform_1, window_bounds = array<i64: 800, 64>}, {pipeline_mode = #tpu.pipeline_mode<synchronous>, transform_indices = @transform_2, window_bounds = array<i64: 1, 64>}, {transform_indices = @transform_3, window_bounds = array<i64: 64, 64>}]} {
    %c0 = arith.constant 0 : index
    %c0_0 = arith.constant 0 : index
    %0 = vector.load %arg1[%c0, %c0_0] : memref<64x800xbf16, #tpu.memory_space<vmem>>, vector<64x800xbf16>
    %c0_1 = arith.constant 0 : index
    %c0_2 = arith.constant 0 : index
    %1 = vector.load %arg2[%c0_1, %c0_2] : memref<800x64xbf16, #tpu.memory_space<vmem>>, vector<800x64xbf16>
    %cst = arith.constant dense<0.000000e+00> : vector<64x64xf32>
    %2 = tpu.matmul %0, %1, %cst {dimension_numbers = #tpu.dot_dimension_numbers<[1], [0], [0], [1], [0, 0, 1, 1], [], []>} : vector<64x800xbf16>, vector<800x64xbf16>, vector<64x64xf32> -> vector<64x64xf32>
    %c0_3 = arith.constant 0 : index
    %c0_4 = arith.constant 0 : index
    %3 = vector.load %arg3[%c0_3, %c0_4] : memref<1x64xf32, #tpu.memory_space<vmem>>, vector<1x64xf32>
    %4 = vector.broadcast %3 : vector<1x64xf32> to vector<64x64xf32>
    %5 = arith.addf %2, %4 : vector<64x64xf32>
    %cst_5 = arith.constant 0.000000e+00 : f32
    %6 = vector.broadcast %cst_5 : f32 to vector<64x64xf32>
    %7 = arith.maximumf %5, %6 : vector<64x64xf32>
    %8 = arith.truncf %7 : vector<64x64xf32> to vector<64x64xbf16>
    %c0_6 = arith.constant 0 : index
    %c0_7 = arith.constant 0 : index
    %9 = vector.load %arg4[%c0_6, %c0_7] : memref<64x64xbf16, #tpu.memory_space<vmem>>, vector<64x64xbf16>
    tpu.vector_store %arg4[%c0_6, %c0_7], %8 {strides = array<i32>} : memref<64x64xbf16, #tpu.memory_space<vmem>>, vector<64x64xbf16>,
    return
  }
  func.func @transform_0(%arg0: i32) -> (i32, i32) {
    %c0_i32 = arith.constant 0 : i32
    %c0_i32_0 = arith.constant 0 : i32
    return %arg0, %c0_i32 : i32, i32
  }
  func.func @transform_1(%arg0: i32) -> (i32, i32) {
    %c0_i32 = arith.constant 0 : i32
    %c0_i32_0 = arith.constant 0 : i32
    %c0_i32_1 = arith.constant 0 : i32
    return %c0_i32, %c0_i32_0 : i32, i32
  }
  func.func @transform_2(%arg0: i32) -> (i32, i32) {
    %c0_i32 = arith.constant 0 : i32
    %c0_i32_0 = arith.constant 0 : i32
    %c0_i32_1 = arith.constant 0 : i32
    return %c0_i32, %c0_i32_0 : i32, i32
  }
  func.func @transform_3(%arg0: i32) -> (i32, i32) {
    %c0_i32 = arith.constant 0 : i32
    %c0_i32_0 = arith.constant 0 : i32
    return %arg0, %c0_i32 : i32, i32
  }
}

module attributes {stable_mosaic.version = 11 : i64} {
  func.func @_maxpool_kernel(%arg0: i32, %arg1: memref<1x4x16x64xbf16, #tpu.memory_space<vmem>>, %arg2: memref<1x16x64xbf16, #tpu.memory_space<vmem>>) attributes {dimension_semantics = [#tpu.dimension_semantics<parallel>], iteration_bounds = array<i64: 2>, scalar_prefetch = 0 : i64, scratch_operands = 0 : i64, tpu.core_type = #tpu.core_type<tc>, window_params = [{transform_indices = @transform_0, window_bounds = array<i64: 1, 4, 16, 64>}, {transform_indices = @transform_1, window_bounds = array<i64: 1, 16, 64>}]} {
    %c0 = arith.constant 0 : index
    %c0_0 = arith.constant 0 : index
    %c0_1 = arith.constant 0 : index
    %c0_2 = arith.constant 0 : index
    %0 = vector.load %arg1[%c0, %c0_0, %c0_1, %c0_2] : memref<1x4x16x64xbf16, #tpu.memory_space<vmem>>, vector<1x1x16x64xbf16>
    %1 = vector.shape_cast %0 : vector<1x1x16x64xbf16> to vector<1x16x64xbf16>
    %c0_3 = arith.constant 0 : index
    %c1 = arith.constant 1 : index
    %c0_4 = arith.constant 0 : index
    %c0_5 = arith.constant 0 : index
    %2 = vector.load %arg1[%c0_3, %c1, %c0_4, %c0_5] : memref<1x4x16x64xbf16, #tpu.memory_space<vmem>>, vector<1x1x16x64xbf16>
    %3 = vector.shape_cast %2 : vector<1x1x16x64xbf16> to vector<1x16x64xbf16>
    %4 = arith.maximumf %1, %3 : vector<1x16x64xbf16>
    %c0_6 = arith.constant 0 : index
    %c2 = arith.constant 2 : index
    %c0_7 = arith.constant 0 : index
    %c0_8 = arith.constant 0 : index
    %5 = vector.load %arg1[%c0_6, %c2, %c0_7, %c0_8] : memref<1x4x16x64xbf16, #tpu.memory_space<vmem>>, vector<1x1x16x64xbf16>
    %6 = vector.shape_cast %5 : vector<1x1x16x64xbf16> to vector<1x16x64xbf16>
    %c0_9 = arith.constant 0 : index
    %c3 = arith.constant 3 : index
    %c0_10 = arith.constant 0 : index
    %c0_11 = arith.constant 0 : index
    %7 = vector.load %arg1[%c0_9, %c3, %c0_10, %c0_11] : memref<1x4x16x64xbf16, #tpu.memory_space<vmem>>, vector<1x1x16x64xbf16>
    %8 = vector.shape_cast %7 : vector<1x1x16x64xbf16> to vector<1x16x64xbf16>
    %9 = arith.maximumf %6, %8 : vector<1x16x64xbf16>
    %10 = arith.maximumf %4, %9 : vector<1x16x64xbf16>
    %c0_12 = arith.constant 0 : index
    %c0_13 = arith.constant 0 : index
    %c0_14 = arith.constant 0 : index
    %11 = vector.load %arg2[%c0_12, %c0_13, %c0_14] : memref<1x16x64xbf16, #tpu.memory_space<vmem>>, vector<1x16x64xbf16>
    tpu.vector_store %arg2[%c0_12, %c0_13, %c0_14], %10 {strides = array<i32>} : memref<1x16x64xbf16, #tpu.memory_space<vmem>>, vector<1x16x64xbf16>,
    return
  }
  func.func @transform_0(%arg0: i32) -> (i32, i32, i32, i32) {
    %c0_i32 = arith.constant 0 : i32
    %c0_i32_0 = arith.constant 0 : i32
    %c0_i32_1 = arith.constant 0 : i32
    %c0_i32_2 = arith.constant 0 : i32
    return %arg0, %c0_i32, %c0_i32_0, %c0_i32_1 : i32, i32, i32, i32
  }
  func.func @transform_1(%arg0: i32) -> (i32, i32, i32) {
    %c0_i32 = arith.constant 0 : i32
    %c0_i32_0 = arith.constant 0 : i32
    %c0_i32_1 = arith.constant 0 : i32
    return %arg0, %c0_i32, %c0_i32_0 : i32, i32, i32
  }
}

module attributes {stable_mosaic.version = 11 : i64} {
  func.func @_fc_tail_kernel(%arg0: i32, %arg1: memref<16x1024xbf16, #tpu.memory_space<vmem>>, %arg2: memref<1024x512xbf16, #tpu.memory_space<vmem>>, %arg3: memref<1x512xf32, #tpu.memory_space<vmem>>, %arg4: memref<512x128xbf16, #tpu.memory_space<vmem>>, %arg5: memref<1x128xf32, #tpu.memory_space<vmem>>, %arg6: memref<16x128xf32, #tpu.memory_space<vmem>>) attributes {dimension_semantics = [#tpu.dimension_semantics<parallel>], iteration_bounds = array<i64: 1>, scalar_prefetch = 0 : i64, scratch_operands = 0 : i64, tpu.core_type = #tpu.core_type<tc>, window_params = [{transform_indices = @transform_0, window_bounds = array<i64: 16, 1024>}, {pipeline_mode = #tpu.pipeline_mode<synchronous>, transform_indices = @transform_1, window_bounds = array<i64: 1024, 512>}, {pipeline_mode = #tpu.pipeline_mode<synchronous>, transform_indices = @transform_2, window_bounds = array<i64: 1, 512>}, {pipeline_mode = #tpu.pipeline_mode<synchronous>, transform_indices = @transform_3, window_bounds = array<i64: 512, 128>}, {pipeline_mode = #tpu.pipeline_mode<synchronous>, transform_indices = @transform_4, window_bounds = array<i64: 1, 128>}, {transform_indices = @transform_5, window_bounds = array<i64: 16, 128>}]} {
    %c0 = arith.constant 0 : index
    %c0_0 = arith.constant 0 : index
    %0 = vector.load %arg1[%c0, %c0_0] : memref<16x1024xbf16, #tpu.memory_space<vmem>>, vector<16x1024xbf16>
    %c0_1 = arith.constant 0 : index
    %c0_2 = arith.constant 0 : index
    %1 = vector.load %arg2[%c0_1, %c0_2] : memref<1024x512xbf16, #tpu.memory_space<vmem>>, vector<1024x512xbf16>
    %cst = arith.constant dense<0.000000e+00> : vector<16x512xf32>
    %2 = tpu.matmul %0, %1, %cst {dimension_numbers = #tpu.dot_dimension_numbers<[1], [0], [0], [1], [0, 0, 1, 1], [], []>} : vector<16x1024xbf16>, vector<1024x512xbf16>, vector<16x512xf32> -> vector<16x512xf32>
    %c0_3 = arith.constant 0 : index
    %c0_4 = arith.constant 0 : index
    %3 = vector.load %arg3[%c0_3, %c0_4] : memref<1x512xf32, #tpu.memory_space<vmem>>, vector<1x512xf32>
    %4 = vector.broadcast %3 : vector<1x512xf32> to vector<16x512xf32>
    %5 = arith.addf %2, %4 : vector<16x512xf32>
    %cst_5 = arith.constant 0.000000e+00 : f32
    %6 = vector.broadcast %cst_5 : f32 to vector<16x512xf32>
    %7 = arith.maximumf %5, %6 : vector<16x512xf32>
    %8 = arith.truncf %7 : vector<16x512xf32> to vector<16x512xbf16>
    %c0_6 = arith.constant 0 : index
    %c0_7 = arith.constant 0 : index
    %9 = vector.load %arg4[%c0_6, %c0_7] : memref<512x128xbf16, #tpu.memory_space<vmem>>, vector<512x128xbf16>
    %cst_8 = arith.constant dense<0.000000e+00> : vector<16x128xf32>
    %10 = tpu.matmul %8, %9, %cst_8 {dimension_numbers = #tpu.dot_dimension_numbers<[1], [0], [0], [1], [0, 0, 1, 1], [], []>} : vector<16x512xbf16>, vector<512x128xbf16>, vector<16x128xf32> -> vector<16x128xf32>
    %c0_9 = arith.constant 0 : index
    %c0_10 = arith.constant 0 : index
    %11 = vector.load %arg5[%c0_9, %c0_10] : memref<1x128xf32, #tpu.memory_space<vmem>>, vector<1x128xf32>
    %12 = vector.broadcast %11 : vector<1x128xf32> to vector<16x128xf32>
    %13 = arith.addf %10, %12 : vector<16x128xf32>
    %cst_11 = arith.constant dense<0xFF800000> : vector<16xf32>
    %14 = vector.multi_reduction <maximumf>, %13, %cst_11 [1] : vector<16x128xf32> to vector<16xf32>
    %15 = vector.shape_cast %14 : vector<16xf32> to vector<16x1xf32>
    %16 = vector.broadcast %15 : vector<16x1xf32> to vector<16x128xf32>
    %17 = arith.subf %13, %16 : vector<16x128xf32>
    %18 = math.exp %17 : vector<16x128xf32>
    %cst_12 = arith.constant dense<0.000000e+00> : vector<16xf32>
    %19 = vector.multi_reduction <add>, %18, %cst_12 [1] : vector<16x128xf32> to vector<16xf32>
    %20 = vector.shape_cast %19 : vector<16xf32> to vector<16x1xf32>
    %21 = math.log %20 : vector<16x1xf32>
    %22 = vector.broadcast %21 : vector<16x1xf32> to vector<16x128xf32>
    %23 = arith.subf %17, %22 : vector<16x128xf32>
    %c0_13 = arith.constant 0 : index
    %c0_14 = arith.constant 0 : index
    %24 = vector.load %arg6[%c0_13, %c0_14] : memref<16x128xf32, #tpu.memory_space<vmem>>, vector<16x128xf32>
    tpu.vector_store %arg6[%c0_13, %c0_14], %23 {strides = array<i32>} : memref<16x128xf32, #tpu.memory_space<vmem>>, vector<16x128xf32>,
    return
  }
  func.func @transform_0(%arg0: i32) -> (i32, i32) {
    %c0_i32 = arith.constant 0 : i32
    %c0_i32_0 = arith.constant 0 : i32
    return %arg0, %c0_i32 : i32, i32
  }
  func.func @transform_1(%arg0: i32) -> (i32, i32) {
    %c0_i32 = arith.constant 0 : i32
    %c0_i32_0 = arith.constant 0 : i32
    %c0_i32_1 = arith.constant 0 : i32
    return %c0_i32, %c0_i32_0 : i32, i32
  }
  func.func @transform_2(%arg0: i32) -> (i32, i32) {
    %c0_i32 = arith.constant 0 : i32
    %c0_i32_0 = arith.constant 0 : i32
    %c0_i32_1 = arith.constant 0 : i32
    return %c0_i32, %c0_i32_0 : i32, i32
  }
  func.func @transform_3(%arg0: i32) -> (i32, i32) {
    %c0_i32 = arith.constant 0 : i32
    %c0_i32_0 = arith.constant 0 : i32
    %c0_i32_1 = arith.constant 0 : i32
    return %c0_i32, %c0_i32_0 : i32, i32
  }
  func.func @transform_4(%arg0: i32) -> (i32, i32) {
    %c0_i32 = arith.constant 0 : i32
    %c0_i32_0 = arith.constant 0 : i32
    %c0_i32_1 = arith.constant 0 : i32
    return %c0_i32, %c0_i32_0 : i32, i32
  }
  func.func @transform_5(%arg0: i32) -> (i32, i32) {
    %c0_i32 = arith.constant 0 : i32
    %c0_i32_0 = arith.constant 0 : i32
    return %arg0, %c0_i32 : i32, i32
  }
}

</mosaic_0001>

<llo_original>
// kernel: net_forward.6
$region0: #{net_forward.6}
  #allocation0 [shape = 'u32[]', space=smem, size = 0x4, offset = 0x4, fixed_abs, tag = 'smem constant byte address 0x4 - core index']
  #allocation1 [shape = 'u32[144,128]{1,0:T(1,128)}', space=vmem, size = 0x12000, scoped, tag = 'internal scratch']
  %s0 = inlined_call_operand.vmem [shape: bf16[2,4,144,32], index: 0, kind: input, shape index: {}]
  %s1 = inlined_call_operand.vmem [shape: bf16[2,144,32], index: 1, kind: output, shape index: {}]
  %s2 = sld [smem:[#allocation0]]
  $region37: #{net_forward.6} parent=0
    _
  %s4 = ssub.s32 1, %s2
  %s5 = scalar_select 0, %s4, %s2
  loop: start=0, step=1, limit=4
  $region2: #{net_forward.6} parent=0 // loop_pre_header
    _
  $region3: #{net_forward.6} parent=0 // loop_header
    %s7 = sphi 0, %s11
    %p8 = scmp.ge.s32.totalorder %s7, 4
    %s17 = sphi 0, %s19
    %s20 = sphi 0, %s17
    %s21 = sphi 0, %s20
    %s37 = sphi 0, %s21
    %s43 = sphi 0, %s45
    %s46 = sphi 0, %s43
    %s47 = sphi 0, %s46
    %s63 = sphi 0, %s47
  $region4: #{net_forward.6} parent=0 // loop_header_branch
    %10 = sbr.rel (%p8) target = $region8
  $region5: #{net_forward.6} parent=0 // loop_body
    %s12 = ssub.s32 %s7, 1
    %s13 = ssub.s32 %s7, 2
    %s14 = sadd.s32 %s7, 1
    %s15 = ssub.s32 %s7, %s14
    %p16 = scmp.eq.s32.totalorder %s15, 0
    %s18 = sadd.s32 %s17, 1
    %s19 = scalar_select %p16, %s17, %s18
    %p22 = pneg %p16
    %p23 = scmp.eq.s32.totalorder %s7, 1
    %p24 = por %p22, %p23
    %p25 = scmp.ne.s32.totalorder %s17, %s20
    %p26 = scmp.eq.s32.totalorder %s7, 0
    %p27 = por %p25, %p26
    %p28 = scmp.ne.s32.totalorder %s17, %s20
    %p29 = scmp.eq.s32.totalorder %s12, 1
    %p30 = por %p28, %p29
    %p31 = scmp.ne.s32.totalorder %s20, %s21
    %p32 = scmp.eq.s32.totalorder %s12, 0
    %p33 = por %p31, %p32
    %p34 = scmp.ne.s32.totalorder %s20, %s21
    %p35 = scmp.eq.s32.totalorder %s13, 1
    %p36 = por %p34, %p35
    %p38 = scmp.ne.s32.totalorder %s21, %s37
    %p39 = scmp.eq.s32.totalorder %s13, 0
    %p40 = por %p38, %p39
    %s41 = ssub.s32 %s7, %s14
    %p42 = scmp.eq.s32.totalorder %s41, 0
    %s44 = sadd.s32 %s43, 1
    %s45 = scalar_select %p42, %s43, %s44
    %p48 = pneg %p42
    %p49 = scmp.eq.s32.totalorder %s7, 1
    %p50 = por %p48, %p49
    %p51 = scmp.ne.s32.totalorder %s43, %s46
    %p52 = scmp.eq.s32.totalorder %s7, 0
    %p53 = por %p51, %p52
    %p54 = scmp.ne.s32.totalorder %s43, %s46
    %p55 = scmp.eq.s32.totalorder %s12, 1
    %p56 = por %p54, %p55
    %p57 = scmp.ne.s32.totalorder %s46, %s47
    %p58 = scmp.eq.s32.totalorder %s12, 0
    %p59 = por %p57, %p58
    %p60 = scmp.ne.s32.totalorder %s46, %s47
    %p61 = scmp.eq.s32.totalorder %s13, 1
    %p62 = por %p60, %p61
    %p64 = scmp.ne.s32.totalorder %s47, %s63
    %p65 = scmp.eq.s32.totalorder %s13, 0
    %p66 = por %p64, %p65
    %p67 = scmp.le.s32.totalorder 1, %s7
    %p68 = scmp.lt.s32.totalorder %s7, 3
    %p69 = pnand %p67, %p68
    %p70 = pneg %p69
    // Predicated region
    $region9: #{net_forward.6} parent=5 // pred_check
      _
    $region10: #{net_forward.6} parent=5 // pred_check_branch
      %72 = sbr.rel (%p69) target = $region12
    $region11: #{net_forward.6} parent=5 // pred_region
      %s73 = ssub.s32 %s7, 1
    $region12: #{net_forward.6} parent=5 // pred_fallthru
      _
    %p74 = scmp.lt.s32.totalorder %s7, 2
    // Predicated region
    $region13: #{net_forward.6} parent=5 // pred_check
      %p75 = pneg %p74
    $region14: #{net_forward.6} parent=5 // pred_check_branch
      %77 = sbr.rel (%p75) target = $region16
    $region15: #{net_forward.6} parent=5 // pred_region
      // Predicated region
      $region17: #{net_forward.6} parent=15 // pred_check
        %p78 = pneg %p27
      $region18: #{net_forward.6} parent=15 // pred_check_branch
        %80 = sbr.rel (%p78) target = $region20
      $region19: #{net_forward.6} parent=15 // pred_region
        %p81 = scmp.lt.s32.totalorder %s7, 1
        %s82 = scalar_select %p81, %s7, 1
        %s83 = smul.addr %s82, 72
        %s84 = smul.addr %s83, 4
        %s85 = scalar_lea.vmem %s0, %s84
      $region20: #{net_forward.6} parent=15 // pred_fallthru
        _
    $region16: #{net_forward.6} parent=5 // pred_fallthru
      _
    %p86 = scmp.le.s32.totalorder 1, %s7
    %p87 = scmp.lt.s32.totalorder %s7, 3
    %p88 = pnand %p86, %p87
    %p89 = pneg %p88
    // Predicated region
    $region21: #{net_forward.6} parent=5 // pred_check
      _
    $region22: #{net_forward.6} parent=5 // pred_check_branch
      %91 = sbr.rel (%p88) target = $region24
    $region23: #{net_forward.6} parent=5 // pred_region
      %s92 = ssub.s32 %s7, 1
      %p93 = scmp.lt.s32.totalorder %s12, 1
      %s94 = scalar_select %p93, %s12, 1
      %s95 = smul.addr %s94, 72
      %s96 = smul.addr %s95, 4
      %s97 = scalar_lea.vmem %s0, %s96
      %p98 = pneg %p33
      %p99 = pneg %p30
      %p100 = pneg %p59
      %p101 = pneg %p56
      %p102 = scmp.lt.s32.totalorder %s12, 1
      %s103 = scalar_select %p102, %s12, 1
      %s104 = smul.addr %s103, 18
      %s105 = smul.addr %s104, 4
      %s106 = scalar_lea.vmem %s1, %s105
      %p107 = scmp.lt.s32.totalorder %s12, 1
      %s108 = scalar_select %p107, %s12, 1
      %s109 = smul.addr %s108, 72
      %s110 = smul.addr %s109, 4
      %s111 = scalar_lea.vmem %s0, %s110
      %p112 = scmp.lt.s32.totalorder %s12, 1
      %s113 = scalar_select %p112, %s12, 1
      %s114 = smul.addr %s113, 18
      %s115 = smul.addr %s114, 4
      %s116 = scalar_lea.vmem %s1, %s115
      %v117 = vld [vmem:[%s111] sm:$0xf]
      %v118 = vld [vmem:[%s111 + $0x4] sm:$0xf]
      %v119 = vld [vmem:[%s111 + $0x8] sm:$0xf]
      %v120 = vld [vmem:[%s111 + $0xc] sm:$0xf]
      %v121 = vld [vmem:[%s111 + $0x10] sm:$0xf]
      %v122 = vld [vmem:[%s111 + $0x14] sm:$0xf]
      %v123 = vld [vmem:[%s111 + $0x18] sm:$0xf]
      %v124 = vld [vmem:[%s111 + $0x1c] sm:$0xf]
      %v125 = vld [vmem:[%s111 + $0x20] sm:$0xf]
      %v126 = vld [vmem:[%s111 + $0x24] sm:$0xf]
      %v127 = vld [vmem:[%s111 + $0x28] sm:$0xf]
      %v128 = vld [vmem:[%s111 + $0x2c] sm:$0xf]
      %v129 = vld [vmem:[%s111 + $0x30] sm:$0xf]
      %v130 = vld [vmem:[%s111 + $0x34] sm:$0xf]
      %v131 = vld [vmem:[%s111 + $0x38] sm:$0xf]
      %v132 = vld [vmem:[%s111 + $0x3c] sm:$0xf]
      %v133 = vld [vmem:[%s111 + $0x40] sm:$0xf]
      %v134 = vld [vmem:[%s111 + $0x44] sm:$0xf]
      %s135 = scalar_lea.vmem %s111, 72
      %v136 = vld [vmem:[%s135] sm:$0xf]
      %v137 = vld [vmem:[%s135 + $0x4] sm:$0xf]
      %v138 = vld [vmem:[%s135 + $0x8] sm:$0xf]
      %v139 = vld [vmem:[%s135 + $0xc] sm:$0xf]
      %v140 = vld [vmem:[%s135 + $0x10] sm:$0xf]
      %v141 = vld [vmem:[%s135 + $0x14] sm:$0xf]
      %v142 = vld [vmem:[%s135 + $0x18] sm:$0xf]
      %v143 = vld [vmem:[%s135 + $0x1c] sm:$0xf]
      %v144 = vld [vmem:[%s135 + $0x20] sm:$0xf]
      %v145 = vld [vmem:[%s135 + $0x24] sm:$0xf]
      %v146 = vld [vmem:[%s135 + $0x28] sm:$0xf]
      %v147 = vld [vmem:[%s135 + $0x2c] sm:$0xf]
      %v148 = vld [vmem:[%s135 + $0x30] sm:$0xf]
      %v149 = vld [vmem:[%s135 + $0x34] sm:$0xf]
      %v150 = vld [vmem:[%s135 + $0x38] sm:$0xf]
      %v151 = vld [vmem:[%s135 + $0x3c] sm:$0xf]
      %v152 = vld [vmem:[%s135 + $0x40] sm:$0xf]
      %v153 = vld [vmem:[%s135 + $0x44] sm:$0xf]
      %v154 = vmax.bf16 %v117, %v136
      %v155 = vmax.bf16 %v118, %v137
      %v156 = vmax.bf16 %v119, %v138
      %v157 = vmax.bf16 %v120, %v139
      %v158 = vmax.bf16 %v121, %v140
      %v159 = vmax.bf16 %v122, %v141
      %v160 = vmax.bf16 %v123, %v142
      %v161 = vmax.bf16 %v124, %v143
      %v162 = vmax.bf16 %v125, %v144
      %v163 = vmax.bf16 %v126, %v145
      %v164 = vmax.bf16 %v127, %v146
      %v165 = vmax.bf16 %v128, %v147
      %v166 = vmax.bf16 %v129, %v148
      %v167 = vmax.bf16 %v130, %v149
      %v168 = vmax.bf16 %v131, %v150
      %v169 = vmax.bf16 %v132, %v151
      %v170 = vmax.bf16 %v133, %v152
      %v171 = vmax.bf16 %v134, %v153
      %s172 = scalar_lea.vmem %s111, 144
      %v173 = vld [vmem:[%s172] sm:$0xf]
      %v174 = vld [vmem:[%s172 + $0x4] sm:$0xf]
      %v175 = vld [vmem:[%s172 + $0x8] sm:$0xf]
      %v176 = vld [vmem:[%s172 + $0xc] sm:$0xf]
      %v177 = vld [vmem:[%s172 + $0x10] sm:$0xf]
      %v178 = vld [vmem:[%s172 + $0x14] sm:$0xf]
      %v179 = vld [vmem:[%s172 + $0x18] sm:$0xf]
      %v180 = vld [vmem:[%s172 + $0x1c] sm:$0xf]
      %v181 = vld [vmem:[%s172 + $0x20] sm:$0xf]
      %v182 = vld [vmem:[%s172 + $0x24] sm:$0xf]
      %v183 = vld [vmem:[%s172 + $0x28] sm:$0xf]
      %v184 = vld [vmem:[%s172 + $0x2c] sm:$0xf]
      %v185 = vld [vmem:[%s172 + $0x30] sm:$0xf]
      %v186 = vld [vmem:[%s172 + $0x34] sm:$0xf]
      %v187 = vld [vmem:[%s172 + $0x38] sm:$0xf]
      %v188 = vld [vmem:[%s172 + $0x3c] sm:$0xf]
      %v189 = vld [vmem:[%s172 + $0x40] sm:$0xf]
      %v190 = vld [vmem:[%s172 + $0x44] sm:$0xf]
      %s191 = scalar_lea.vmem %s111, 216
      %v192 = vld [vmem:[%s191] sm:$0xf]
      %v193 = vld [vmem:[%s191 + $0x4] sm:$0xf]
      %v194 = vld [vmem:[%s191 + $0x8] sm:$0xf]
      %v195 = vld [vmem:[%s191 + $0xc] sm:$0xf]
      %v196 = vld [vmem:[%s191 + $0x10] sm:$0xf]
      %v197 = vld [vmem:[%s191 + $0x14] sm:$0xf]
      %v198 = vld [vmem:[%s191 + $0x18] sm:$0xf]
      %v199 = vld [vmem:[%s191 + $0x1c] sm:$0xf]
      %v200 = vld [vmem:[%s191 + $0x20] sm:$0xf]
      %v201 = vld [vmem:[%s191 + $0x24] sm:$0xf]
      %v202 = vld [vmem:[%s191 + $0x28] sm:$0xf]
      %v203 = vld [vmem:[%s191 + $0x2c] sm:$0xf]
      %v204 = vld [vmem:[%s191 + $0x30] sm:$0xf]
      %v205 = vld [vmem:[%s191 + $0x34] sm:$0xf]
      %v206 = vld [vmem:[%s191 + $0x38] sm:$0xf]
      %v207 = vld [vmem:[%s191 + $0x3c] sm:$0xf]
      %v208 = vld [vmem:[%s191 + $0x40] sm:$0xf]
      %v209 = vld [vmem:[%s191 + $0x44] sm:$0xf]
      %v210 = vmax.bf16 %v173, %v192
      %v211 = vmax.bf16 %v174, %v193
      %v212 = vmax.bf16 %v175, %v194
      %v213 = vmax.bf16 %v176, %v195
      %v214 = vmax.bf16 %v177, %v196
      %v215 = vmax.bf16 %v178, %v197
      %v216 = vmax.bf16 %v179, %v198
      %v217 = vmax.bf16 %v180, %v199
      %v218 = vmax.bf16 %v181, %v200
      %v219 = vmax.bf16 %v182, %v201
      %v220 = vmax.bf16 %v183, %v202
      %v221 = vmax.bf16 %v184, %v203
      %v222 = vmax.bf16 %v185, %v204
      %v223 = vmax.bf16 %v186, %v205
      %v224 = vmax.bf16 %v187, %v206
      %v225 = vmax.bf16 %v188, %v207
      %v226 = vmax.bf16 %v189, %v208
      %v227 = vmax.bf16 %v190, %v209
      %v228 = vmax.bf16 %v154, %v210
      %v229 = vmax.bf16 %v155, %v211
      %v230 = vmax.bf16 %v156, %v212
      %v231 = vmax.bf16 %v157, %v213
      %v232 = vmax.bf16 %v158, %v214
      %v233 = vmax.bf16 %v159, %v215
      %v234 = vmax.bf16 %v160, %v216
      %v235 = vmax.bf16 %v161, %v217
      %v236 = vmax.bf16 %v162, %v218
      %v237 = vmax.bf16 %v163, %v219
      %v238 = vmax.bf16 %v164, %v220
      %v239 = vmax.bf16 %v165, %v221
      %v240 = vmax.bf16 %v166, %v222
      %v241 = vmax.bf16 %v167, %v223
      %v242 = vmax.bf16 %v168, %v224
      %v243 = vmax.bf16 %v169, %v225
      %v244 = vmax.bf16 %v170, %v226
      %v245 = vmax.bf16 %v171, %v227
      %vm246 = vcmask 257024
      %247 = vst.msk [vmem:[%s116] sm:$0xf] %vm246, %v228
      %248 = vst.msk [vmem:[%s116 + $0x4] sm:$0xf] %vm246, %v229
      %249 = vst.msk [vmem:[%s116 + $0x8] sm:$0xf] %vm246, %v230
      %250 = vst.msk [vmem:[%s116 + $0xc] sm:$0xf] %vm246, %v231
      %251 = vst.msk [vmem:[%s116 + $0x10] sm:$0xf] %vm246, %v232
      %252 = vst.msk [vmem:[%s116 + $0x14] sm:$0xf] %vm246, %v233
      %253 = vst.msk [vmem:[%s116 + $0x18] sm:$0xf] %vm246, %v234
      %254 = vst.msk [vmem:[%s116 + $0x1c] sm:$0xf] %vm246, %v235
      %255 = vst.msk [vmem:[%s116 + $0x20] sm:$0xf] %vm246, %v236
      %256 = vst.msk [vmem:[%s116 + $0x24] sm:$0xf] %vm246, %v237
      %257 = vst.msk [vmem:[%s116 + $0x28] sm:$0xf] %vm246, %v238
      %258 = vst.msk [vmem:[%s116 + $0x2c] sm:$0xf] %vm246, %v239
      %259 = vst.msk [vmem:[%s116 + $0x30] sm:$0xf] %vm246, %v240
      %260 = vst.msk [vmem:[%s116 + $0x34] sm:$0xf] %vm246, %v241
      %261 = vst.msk [vmem:[%s116 + $0x38] sm:$0xf] %vm246, %v242
      %262 = vst.msk [vmem:[%s116 + $0x3c] sm:$0xf] %vm246, %v243
      %263 = vst.msk [vmem:[%s116 + $0x40] sm:$0xf] %vm246, %v244
      %264 = vst.msk [vmem:[%s116 + $0x44] sm:$0xf] %vm246, %v245
      %p265 = scmp.lt.s32.totalorder %s12, 1
      %s266 = scalar_select %p265, %s12, 1
      %s267 = smul.addr %s266, 18
      %s268 = smul.addr %s267, 4
      %s269 = scalar_lea.vmem %s1, %s268
      // Predicated region
      $region25: #{net_forward.6} parent=23 // pred_check
        %p270 = pneg %p56
      $region26: #{net_forward.6} parent=23 // pred_check_branch
        %272 = sbr.rel (%p270) target = $region28
      $region27: #{net_forward.6} parent=23 // pred_region
        _
      $region28: #{net_forward.6} parent=23 // pred_fallthru
        _
    $region24: #{net_forward.6} parent=5 // pred_fallthru
      _
    %p273 = scmp.le.s32.totalorder 2, %s7
    // Predicated region
    $region29: #{net_forward.6} parent=5 // pred_check
      %p274 = pneg %p273
    $region30: #{net_forward.6} parent=5 // pred_check_branch
      %276 = sbr.rel (%p274) target = $region32
    $region31: #{net_forward.6} parent=5 // pred_region
      %s277 = ssub.s32 %s7, 2
      // Predicated region
      $region33: #{net_forward.6} parent=31 // pred_check
        %p278 = pneg %p62
      $region34: #{net_forward.6} parent=31 // pred_check_branch
        %280 = sbr.rel (%p278) target = $region36
      $region35: #{net_forward.6} parent=31 // pred_region
        %p281 = scmp.lt.s32.totalorder %s13, 1
        %s282 = scalar_select %p281, %s13, 1
        %s283 = smul.addr %s282, 18
        %s284 = smul.addr %s283, 4
        %s285 = scalar_lea.vmem %s1, %s284
      $region36: #{net_forward.6} parent=31 // pred_fallthru
        _
    $region32: #{net_forward.6} parent=5 // pred_fallthru
      _
  $region6: #{net_forward.6} parent=0 // loop_footer
    %s11 = sadd.s32 1, %s7
  $region7: #{net_forward.6} parent=0 // loop_footer_branch
    %6 = sbr.rel target = $region3
  $region8: #{net_forward.6} parent=0 // loop_exit
    _

// kernel: net_forward.5
$region0: #{net_forward.5}
  #allocation0 [shape = 'u32[]', space=smem, size = 0x4, offset = 0x4, fixed_abs, tag = 'smem constant byte address 0x4 - core index']
  #allocation1 [shape = 'u32[144,128]{1,0:T(1,128)}', space=vmem, size = 0x12000, scoped, tag = 'internal scratch']
  %s0 = inlined_call_operand.vmem [shape: bf16[1152,32], index: 0, kind: input, shape index: {}]
  %s1 = inlined_call_operand.vmem [shape: bf16[32,32], index: 1, kind: input, shape index: {}]
  %s2 = inlined_call_operand.vmem [shape: f32[1,32], index: 2, kind: input, shape index: {}]
  %s3 = inlined_call_operand.vmem [shape: bf16[1152,32], index: 3, kind: output, shape index: {}]
  %s4 = sld [smem:[#allocation0]]
  $region45: #{net_forward.5} parent=0
    _
  %s6 = ssub.s32 1, %s4
  %s7 = scalar_select 0, %s6, %s4
  loop: start=0, step=1, limit=4
  $region2: #{net_forward.5} parent=0 // loop_pre_header
    _
  $region3: #{net_forward.5} parent=0 // loop_header
    %s9 = sphi 0, %s13
    %p10 = scmp.ge.s32.totalorder %s9, 4
    %s19 = sphi 0, %s21
    %s22 = sphi 0, %s19
    %s23 = sphi 0, %s22
    %s39 = sphi 0, %s23
    %s43 = sphi 0, %s43
    %s45 = sphi 0, %s43
    %s46 = sphi 0, %s45
    %s60 = sphi 0, %s46
    %s64 = sphi 0, %s64
    %s66 = sphi 0, %s64
    %s67 = sphi 0, %s66
    %s81 = sphi 0, %s67
    %s87 = sphi 0, %s89
    %s90 = sphi 0, %s87
    %s91 = sphi 0, %s90
    %s107 = sphi 0, %s91
  $region4: #{net_forward.5} parent=0 // loop_header_branch
    %12 = sbr.rel (%p10) target = $region8
  $region5: #{net_forward.5} parent=0 // loop_body
    %s14 = ssub.s32 %s9, 1
    %s15 = ssub.s32 %s9, 2
    %s16 = sadd.s32 %s9, 1
    %s17 = ssub.s32 %s9, %s16
    %p18 = scmp.eq.s32.totalorder %s17, 0
    %s20 = sadd.s32 %s19, 1
    %s21 = scalar_select %p18, %s19, %s20
    %p24 = pneg %p18
    %p25 = scmp.eq.s32.totalorder %s9, 1
    %p26 = por %p24, %p25
    %p27 = scmp.ne.s32.totalorder %s19, %s22
    %p28 = scmp.eq.s32.totalorder %s9, 0
    %p29 = por %p27, %p28
    %p30 = scmp.ne.s32.totalorder %s19, %s22
    %p31 = scmp.eq.s32.totalorder %s14, 1
    %p32 = por %p30, %p31
    %p33 = scmp.ne.s32.totalorder %s22, %s23
    %p34 = scmp.eq.s32.totalorder %s14, 0
    %p35 = por %p33, %p34
    %p36 = scmp.ne.s32.totalorder %s22, %s23
    %p37 = scmp.eq.s32.totalorder %s15, 1
    %p38 = por %p36, %p37
    %p40 = scmp.ne.s32.totalorder %s23, %s39
    %p41 = scmp.eq.s32.totalorder %s15, 0
    %p42 = por %p40, %p41
    %s44 = sadd.s32 %s43, 1
    %p47 = scmp.eq.s32.totalorder %s9, 1
    %p48 = scmp.ne.s32.totalorder %s43, %s45
    %p49 = scmp.eq.s32.totalorder %s9, 0
    %p50 = por %p48, %p49
    %p51 = scmp.ne.s32.totalorder %s43, %s45
    %p52 = scmp.eq.s32.totalorder %s14, 1
    %p53 = por %p51, %p52
    %p54 = scmp.ne.s32.totalorder %s45, %s46
    %p55 = scmp.eq.s32.totalorder %s14, 0
    %p56 = por %p54, %p55
    %p57 = scmp.ne.s32.totalorder %s45, %s46
    %p58 = scmp.eq.s32.totalorder %s15, 1
    %p59 = por %p57, %p58
    %p61 = scmp.ne.s32.totalorder %s46, %s60
    %p62 = scmp.eq.s32.totalorder %s15, 0
    %p63 = por %p61, %p62
    %s65 = sadd.s32 %s64, 1
    %p68 = scmp.eq.s32.totalorder %s9, 1
    %p69 = scmp.ne.s32.totalorder %s64, %s66
    %p70 = scmp.eq.s32.totalorder %s9, 0
    %p71 = por %p69, %p70
    %p72 = scmp.ne.s32.totalorder %s64, %s66
    %p73 = scmp.eq.s32.totalorder %s14, 1
    %p74 = por %p72, %p73
    %p75 = scmp.ne.s32.totalorder %s66, %s67
    %p76 = scmp.eq.s32.totalorder %s14, 0
    %p77 = por %p75, %p76
    %p78 = scmp.ne.s32.totalorder %s66, %s67
    %p79 = scmp.eq.s32.totalorder %s15, 1
    %p80 = por %p78, %p79
    %p82 = scmp.ne.s32.totalorder %s67, %s81
    %p83 = scmp.eq.s32.totalorder %s15, 0
    %p84 = por %p82, %p83
    %s85 = ssub.s32 %s9, %s16
    %p86 = scmp.eq.s32.totalorder %s85, 0
    %s88 = sadd.s32 %s87, 1
    %s89 = scalar_select %p86, %s87, %s88
    %p92 = pneg %p86
    %p93 = scmp.eq.s32.totalorder %s9, 1
    %p94 = por %p92, %p93
    %p95 = scmp.ne.s32.totalorder %s87, %s90
    %p96 = scmp.eq.s32.totalorder %s9, 0
    %p97 = por %p95, %p96
    %p98 = scmp.ne.s32.totalorder %s87, %s90
    %p99 = scmp.eq.s32.totalorder %s14, 1
    %p100 = por %p98, %p99
    %p101 = scmp.ne.s32.totalorder %s90, %s91
    %p102 = scmp.eq.s32.totalorder %s14, 0
    %p103 = por %p101, %p102
    %p104 = scmp.ne.s32.totalorder %s90, %s91
    %p105 = scmp.eq.s32.totalorder %s15, 1
    %p106 = por %p104, %p105
    %p108 = scmp.ne.s32.totalorder %s91, %s107
    %p109 = scmp.eq.s32.totalorder %s15, 0
    %p110 = por %p108, %p109
    %p111 = scmp.le.s32.totalorder 1, %s9
    %p112 = scmp.lt.s32.totalorder %s9, 3
    %p113 = pnand %p111, %p112
    %p114 = pneg %p113
    // Predicated region
    $region9: #{net_forward.5} parent=5 // pred_check
      _
    $region10: #{net_forward.5} parent=5 // pred_check_branch
      %116 = sbr.rel (%p113) target = $region12
    $region11: #{net_forward.5} parent=5 // pred_region
      %s117 = ssub.s32 %s9, 1
      // Predicated region
      $region13: #{net_forward.5} parent=11 // pred_check
        %p118 = pneg %p56
      $region14: #{net_forward.5} parent=11 // pred_check_branch
        %120 = sbr.rel (%p118) target = $region16
      $region15: #{net_forward.5} parent=11 // pred_region
        _
      $region16: #{net_forward.5} parent=11 // pred_fallthru
        _
      // Predicated region
      $region17: #{net_forward.5} parent=11 // pred_check
        %p121 = pneg %p77
      $region18: #{net_forward.5} parent=11 // pred_check_branch
        %123 = sbr.rel (%p121) target = $region20
      $region19: #{net_forward.5} parent=11 // pred_region
        _
      $region20: #{net_forward.5} parent=11 // pred_fallthru
        _
    $region12: #{net_forward.5} parent=5 // pred_fallthru
      _
    %p124 = scmp.lt.s32.totalorder %s9, 2
    // Predicated region
    $region21: #{net_forward.5} parent=5 // pred_check
      %p125 = pneg %p124
    $region22: #{net_forward.5} parent=5 // pred_check_branch
      %127 = sbr.rel (%p125) target = $region24
    $region23: #{net_forward.5} parent=5 // pred_region
      // Predicated region
      $region25: #{net_forward.5} parent=23 // pred_check
        %p128 = pneg %p29
      $region26: #{net_forward.5} parent=23 // pred_check_branch
        %130 = sbr.rel (%p128) target = $region28
      $region27: #{net_forward.5} parent=23 // pred_region
        %s131 = smul.u32 72, %s9
        %p132 = scmp.lt.s32.totalorder %s131, 143
        %s133 = scalar_select %p132, %s131, 143
        %s134 = smul.addr %s133, 4
        %s135 = scalar_lea.vmem %s0, %s134
        %s136 = smul.u32 72, %s9
      $region28: #{net_forward.5} parent=23 // pred_fallthru
        _
    $region24: #{net_forward.5} parent=5 // pred_fallthru
      _
    %p137 = scmp.le.s32.totalorder 1, %s9
    %p138 = scmp.lt.s32.totalorder %s9, 3
    %p139 = pnand %p137, %p138
    %p140 = pneg %p139
    // Predicated region
    $region29: #{net_forward.5} parent=5 // pred_check
      _
    $region30: #{net_forward.5} parent=5 // pred_check_branch
      %142 = sbr.rel (%p139) target = $region32
    $region31: #{net_forward.5} parent=5 // pred_region
      %s143 = ssub.s32 %s9, 1
      %s144 = smul.u32 72, %s14
      %p145 = scmp.lt.s32.totalorder %s144, 143
      %s146 = scalar_select %p145, %s144, 143
      %s147 = smul.addr %s146, 4
      %s148 = scalar_lea.vmem %s0, %s147
      %p149 = pneg %p35
      %p150 = pneg %p32
      %p151 = pneg %p56
      %p152 = pneg %p53
      %p153 = pneg %p77
      %p154 = pneg %p74
      %p155 = pneg %p103
      %p156 = pneg %p100
      %s157 = smul.u32 72, %s14
      %p158 = scmp.lt.s32.totalorder %s157, 143
      %s159 = scalar_select %p158, %s157, 143
      %s160 = smul.addr %s159, 4
      %s161 = scalar_lea.vmem %s3, %s160
      %s162 = smul.u32 72, %s14
      %p163 = scmp.lt.s32.totalorder %s162, 143
      %s164 = scalar_select %p163, %s162, 143
      %s165 = smul.addr %s164, 4
      %s166 = scalar_lea.vmem %s0, %s165
      %s167 = smul.u32 72, %s14
      %s168 = smul.u32 72, %s14
      %p169 = scmp.lt.s32.totalorder %s168, 143
      %s170 = scalar_select %p169, %s168, 143
      %s171 = smul.addr %s170, 4
      %s172 = scalar_lea.vmem %s3, %s171
      %s173 = smul.u32 72, %s14
      %v175 = vld [vmem:[%s166] sm:$0xf]
      %v176 = vld [vmem:[%s166 + $0x4] sm:$0xf]
      %v177 = vld [vmem:[%s166 + $0x8] sm:$0xf]
      %v178 = vld [vmem:[%s166 + $0xc] sm:$0xf]
      %v179 = vld [vmem:[%s166 + $0x10] sm:$0xf]
      %v180 = vld [vmem:[%s166 + $0x14] sm:$0xf]
      %v181 = vld [vmem:[%s166 + $0x18] sm:$0xf]
      %v182 = vld [vmem:[%s166 + $0x1c] sm:$0xf]
      %v183 = vld [vmem:[%s166 + $0x20] sm:$0xf]
      %v184 = vld [vmem:[%s166 + $0x24] sm:$0xf]
      %v185 = vld [vmem:[%s166 + $0x28] sm:$0xf]
      %v186 = vld [vmem:[%s166 + $0x2c] sm:$0xf]
      %v187 = vld [vmem:[%s166 + $0x30] sm:$0xf]
      %v188 = vld [vmem:[%s166 + $0x34] sm:$0xf]
      %v189 = vld [vmem:[%s166 + $0x38] sm:$0xf]
      %v190 = vld [vmem:[%s166 + $0x3c] sm:$0xf]
      %v191 = vld [vmem:[%s166 + $0x40] sm:$0xf]
      %v192 = vld [vmem:[%s166 + $0x44] sm:$0xf]
      %v193 = vld [vmem:[%s166 + $0x48] sm:$0xf]
      %v194 = vld [vmem:[%s166 + $0x4c] sm:$0xf]
      %v195 = vld [vmem:[%s166 + $0x50] sm:$0xf]
      %v196 = vld [vmem:[%s166 + $0x54] sm:$0xf]
      %v197 = vld [vmem:[%s166 + $0x58] sm:$0xf]
      %v198 = vld [vmem:[%s166 + $0x5c] sm:$0xf]
      %v199 = vld [vmem:[%s166 + $0x60] sm:$0xf]
      %v200 = vld [vmem:[%s166 + $0x64] sm:$0xf]
      %v201 = vld [vmem:[%s166 + $0x68] sm:$0xf]
      %v202 = vld [vmem:[%s166 + $0x6c] sm:$0xf]
      %v203 = vld [vmem:[%s166 + $0x70] sm:$0xf]
      %v204 = vld [vmem:[%s166 + $0x74] sm:$0xf]
      %v205 = vld [vmem:[%s166 + $0x78] sm:$0xf]
      %v206 = vld [vmem:[%s166 + $0x7c] sm:$0xf]
      %v207 = vld [vmem:[%s166 + $0x80] sm:$0xf]
      %v208 = vld [vmem:[%s166 + $0x84] sm:$0xf]
      %v209 = vld [vmem:[%s166 + $0x88] sm:$0xf]
      %v210 = vld [vmem:[%s166 + $0x8c] sm:$0xf]
      %v211 = vld [vmem:[%s166 + $0x90] sm:$0xf]
      %v212 = vld [vmem:[%s166 + $0x94] sm:$0xf]
      %v213 = vld [vmem:[%s166 + $0x98] sm:$0xf]
      %v214 = vld [vmem:[%s166 + $0x9c] sm:$0xf]
      %v215 = vld [vmem:[%s166 + $0xa0] sm:$0xf]
      %v216 = vld [vmem:[%s166 + $0xa4] sm:$0xf]
      %v217 = vld [vmem:[%s166 + $0xa8] sm:$0xf]
      %v218 = vld [vmem:[%s166 + $0xac] sm:$0xf]
      %v219 = vld [vmem:[%s166 + $0xb0] sm:$0xf]
      %v220 = vld [vmem:[%s166 + $0xb4] sm:$0xf]
      %v221 = vld [vmem:[%s166 + $0xb8] sm:$0xf]
      %v222 = vld [vmem:[%s166 + $0xbc] sm:$0xf]
      %v223 = vld [vmem:[%s166 + $0xc0] sm:$0xf]
      %v224 = vld [vmem:[%s166 + $0xc4] sm:$0xf]
      %v225 = vld [vmem:[%s166 + $0xc8] sm:$0xf]
      %v226 = vld [vmem:[%s166 + $0xcc] sm:$0xf]
      %v227 = vld [vmem:[%s166 + $0xd0] sm:$0xf]
      %v228 = vld [vmem:[%s166 + $0xd4] sm:$0xf]
      %v229 = vld [vmem:[%s166 + $0xd8] sm:$0xf]
      %v230 = vld [vmem:[%s166 + $0xdc] sm:$0xf]
      %v231 = vld [vmem:[%s166 + $0xe0] sm:$0xf]
      %v232 = vld [vmem:[%s166 + $0xe4] sm:$0xf]
      %v233 = vld [vmem:[%s166 + $0xe8] sm:$0xf]
      %v234 = vld [vmem:[%s166 + $0xec] sm:$0xf]
      %v235 = vld [vmem:[%s166 + $0xf0] sm:$0xf]
      %v236 = vld [vmem:[%s166 + $0xf4] sm:$0xf]
      %v237 = vld [vmem:[%s166 + $0xf8] sm:$0xf]
      %v238 = vld [vmem:[%s166 + $0xfc] sm:$0xf]
      %v239 = vld [vmem:[%s166 + $0x100] sm:$0xf]
      %v240 = vld [vmem:[%s166 + $0x104] sm:$0xf]
      %v241 = vld [vmem:[%s166 + $0x108] sm:$0xf]
      %v242 = vld [vmem:[%s166 + $0x10c] sm:$0xf]
      %v243 = vld [vmem:[%s166 + $0x110] sm:$0xf]
      %v244 = vld [vmem:[%s166 + $0x114] sm:$0xf]
      %v245 = vld [vmem:[%s166 + $0x118] sm:$0xf]
      %v246 = vld [vmem:[%s166 + $0x11c] sm:$0xf]
      %v247 = vld [vmem:[%s1] sm:$0xf]
      %v248 = vld [vmem:[%s1 + $0x4] sm:$0xf]
      %v249 = vld [vmem:[%s1 + $0x8] sm:$0xf]
      %v250 = vld [vmem:[%s1 + $0xc] sm:$0xf]
      %v251 = vld [vmem:[%s2] sm:$0x1]
      %v253 = vlaneseq
      %v254 = vshrl.u32 %v253, 7
      %v255 = vsub.s32 0, %v254
      %v256 = vrot.slane %v251, %v255
      %v330 = vunpack.c.l.b16 %v175
      %v331 = vunpack.c.l.b16 %v176
      %v332 = vunpack.c.l.b16 %v177
      %v333 = vunpack.c.l.b16 %v178
      %v334 = vunpack.c.l.b16 %v179
      %v335 = vunpack.c.l.b16 %v180
      %v336 = vunpack.c.l.b16 %v181
      %v337 = vunpack.c.l.b16 %v182
      %v338 = vunpack.c.l.b16 %v183
      %v339 = vunpack.c.l.b16 %v184
      %v340 = vunpack.c.l.b16 %v185
      %v341 = vunpack.c.l.b16 %v186
      %v342 = vunpack.c.l.b16 %v187
      %v343 = vunpack.c.l.b16 %v188
      %v344 = vunpack.c.l.b16 %v189
      %v345 = vunpack.c.l.b16 %v190
      %v346 = vunpack.c.l.b16 %v191
      %v347 = vunpack.c.l.b16 %v192
      %v348 = vunpack.c.l.b16 %v193
      %v349 = vunpack.c.l.b16 %v194
      %v350 = vunpack.c.l.b16 %v195
      %v351 = vunpack.c.l.b16 %v196
      %v352 = vunpack.c.l.b16 %v197
      %v353 = vunpack.c.l.b16 %v198
      %v354 = vunpack.c.l.b16 %v199
      %v355 = vunpack.c.l.b16 %v200
      %v356 = vunpack.c.l.b16 %v201
      %v357 = vunpack.c.l.b16 %v202
      %v358 = vunpack.c.l.b16 %v203
      %v359 = vunpack.c.l.b16 %v204
      %v360 = vunpack.c.l.b16 %v205
      %v361 = vunpack.c.l.b16 %v206
      %v362 = vunpack.c.l.b16 %v207
      %v363 = vunpack.c.l.b16 %v208
      %v364 = vunpack.c.l.b16 %v209
      %v365 = vunpack.c.l.b16 %v210
      %v366 = vunpack.c.l.b16 %v211
      %v367 = vunpack.c.l.b16 %v212
      %v368 = vunpack.c.l.b16 %v213
      %v369 = vunpack.c.l.b16 %v214
      %v370 = vunpack.c.l.b16 %v215
      %v371 = vunpack.c.l.b16 %v216
      %v372 = vunpack.c.l.b16 %v217
      %v373 = vunpack.c.l.b16 %v218
      %v374 = vunpack.c.l.b16 %v219
      %v375 = vunpack.c.l.b16 %v220
      %v376 = vunpack.c.l.b16 %v221
      %v377 = vunpack.c.l.b16 %v222
      %v378 = vunpack.c.l.b16 %v223
      %v379 = vunpack.c.l.b16 %v224
      %v380 = vunpack.c.l.b16 %v225
      %v381 = vunpack.c.l.b16 %v226
      %v382 = vunpack.c.l.b16 %v227
      %v383 = vunpack.c.l.b16 %v228
      %v384 = vunpack.c.l.b16 %v229
      %v385 = vunpack.c.l.b16 %v230
      %v386 = vunpack.c.l.b16 %v231
      %v387 = vunpack.c.l.b16 %v232
      %v388 = vunpack.c.l.b16 %v233
      %v389 = vunpack.c.l.b16 %v234
      %v390 = vunpack.c.l.b16 %v235
      %v391 = vunpack.c.l.b16 %v236
      %v392 = vunpack.c.l.b16 %v237
      %v393 = vunpack.c.l.b16 %v238
      %v394 = vunpack.c.l.b16 %v239
      %v395 = vunpack.c.l.b16 %v240
      %v396 = vunpack.c.l.b16 %v241
      %v397 = vunpack.c.l.b16 %v242
      %v398 = vunpack.c.l.b16 %v243
      %v399 = vunpack.c.l.b16 %v244
      %v400 = vunpack.c.l.b16 %v245
      %v401 = vunpack.c.l.b16 %v246
      %v402 = vpack.c.b16 %v331, %v330
      %v403 = vpack.c.b16 %v333, %v332
      %v404 = vpack.c.b16 %v335, %v334
      %v405 = vpack.c.b16 %v337, %v336
      %v406 = vpack.c.b16 %v339, %v338
      %v407 = vpack.c.b16 %v341, %v340
      %v408 = vpack.c.b16 %v343, %v342
      %v409 = vpack.c.b16 %v345, %v344
      %v410 = vpack.c.b16 %v347, %v346
      %v411 = vpack.c.b16 %v349, %v348
      %v412 = vpack.c.b16 %v351, %v350
      %v413 = vpack.c.b16 %v353, %v352
      %v414 = vpack.c.b16 %v355, %v354
      %v415 = vpack.c.b16 %v357, %v356
      %v416 = vpack.c.b16 %v359, %v358
      %v417 = vpack.c.b16 %v361, %v360
      %v418 = vpack.c.b16 %v363, %v362
      %v419 = vpack.c.b16 %v365, %v364
      %v420 = vpack.c.b16 %v367, %v366
      %v421 = vpack.c.b16 %v369, %v368
      %v422 = vpack.c.b16 %v371, %v370
      %v423 = vpack.c.b16 %v373, %v372
      %v424 = vpack.c.b16 %v375, %v374
      %v425 = vpack.c.b16 %v377, %v376
      %v426 = vpack.c.b16 %v379, %v378
      %v427 = vpack.c.b16 %v381, %v380
      %v428 = vpack.c.b16 %v383, %v382
      %v429 = vpack.c.b16 %v385, %v384
      %v430 = vpack.c.b16 %v387, %v386
      %v431 = vpack.c.b16 %v389, %v388
      %v432 = vpack.c.b16 %v391, %v390
      %v433 = vpack.c.b16 %v393, %v392
      %v434 = vpack.c.b16 %v395, %v394
      %v435 = vpack.c.b16 %v397, %v396
      %v436 = vpack.c.b16 %v399, %v398
      %v437 = vpack.c.b16 %v401, %v400
      %v442 = vunpack.c.l.b16 %v247
      %v443 = vunpack.c.l.b16 %v248
      %v444 = vunpack.c.l.b16 %v249
      %v445 = vunpack.c.l.b16 %v250
      %v446 = vpack.c.b16 %v443, %v442
      %v447 = vpack.c.b16 %v445, %v444
      %vm450 = vcmask 261120
      %v452 = vsel %vm450, %v402, 0
      %v455 = vsel %vm450, %v403, 0
      %v458 = vsel %vm450, %v404, 0
      %v461 = vsel %vm450, %v405, 0
      %v464 = vsel %vm450, %v406, 0
      %v467 = vsel %vm450, %v407, 0
      %v470 = vsel %vm450, %v408, 0
      %v473 = vsel %vm450, %v409, 0
      %v476 = vsel %vm450, %v410, 0
      %v479 = vsel %vm450, %v411, 0
      %v482 = vsel %vm450, %v412, 0
      %v485 = vsel %vm450, %v413, 0
      %v488 = vsel %vm450, %v414, 0
      %v491 = vsel %vm450, %v415, 0
      %v494 = vsel %vm450, %v416, 0
      %v497 = vsel %vm450, %v417, 0
      %v500 = vsel %vm450, %v418, 0
      %v503 = vsel %vm450, %v419, 0
      %v506 = vsel %vm450, %v420, 0
      %v509 = vsel %vm450, %v421, 0
      %v512 = vsel %vm450, %v422, 0
      %v515 = vsel %vm450, %v423, 0
      %v518 = vsel %vm450, %v424, 0
      %v521 = vsel %vm450, %v425, 0
      %v524 = vsel %vm450, %v426, 0
      %v527 = vsel %vm450, %v427, 0
      %v530 = vsel %vm450, %v428, 0
      %v533 = vsel %vm450, %v429, 0
      %v536 = vsel %vm450, %v430, 0
      %v539 = vsel %vm450, %v431, 0
      %v542 = vsel %vm450, %v432, 0
      %v545 = vsel %vm450, %v433, 0
      %v548 = vsel %vm450, %v434, 0
      %v551 = vsel %vm450, %v435, 0
      %v554 = vsel %vm450, %v436, 0
      %v557 = vsel %vm450, %v437, 0
      %559 = vmatprep.subr.bf16.mxu0 0
      %560 = vmatpush1.bf16.msra.mxu0 %v446
      %561 = vmatprep.subr.bf16.mxu0 0
      %562 = vmatpush1.bf16.msra.mxu0 %v447
      %563 = vmatprep.subr.bf16.mxu0 0
      %564 = vmatpush1.bf16.msra.mxu0 0
      %565 = vmatprep.subr.bf16.mxu0 0
      %566 = vmatpush1.bf16.msra.mxu0 0
      %567 = vmatprep.subr.bf16.mxu0 0
      %568 = vmatpush1.bf16.msra.mxu0 0
      %569 = vmatprep.subr.bf16.mxu0 0
      %570 = vmatpush1.bf16.msra.mxu0 0
      %571 = vmatprep.subr.bf16.mxu0 0
      %572 = vmatpush1.bf16.msra.mxu0 0
      %573 = vmatprep.subr.bf16.mxu0 0
      %574 = vmatpush1.bf16.msra.mxu0 0
      %575 = vmatprep.subr.bf16.mxu0 0
      %576 = vmatpush1.bf16.msra.mxu0 0
      %577 = vmatprep.subr.bf16.mxu0 0
      %578 = vmatpush1.bf16.msra.mxu0 0
      %579 = vmatprep.subr.bf16.mxu0 0
      %580 = vmatpush1.bf16.msra.mxu0 0
      %581 = vmatprep.subr.bf16.mxu0 0
      %582 = vmatpush1.bf16.msra.mxu0 0
      %583 = vmatprep.subr.bf16.mxu0 0
      %584 = vmatpush1.bf16.msra.mxu0 0
      %585 = vmatprep.subr.bf16.mxu0 0
      %586 = vmatpush1.bf16.msra.mxu0 0
      %587 = vmatprep.subr.bf16.mxu0 0
      %588 = vmatpush1.bf16.msra.mxu0 0
      %589 = vmatprep.subr.bf16.mxu0 0
      %590 = vmatpush1.bf16.msra.mxu0 0
      %591 = vmatprep.mubr.bf16.mxu0 0
      %592 = vmatmul.mubr.bf16.gmra.mrb[0].mxu0 %v452
      %v593 = vpop.f32.mrb[0].mxu0
      %v594 = vadd.f32 %v256, %v593
      %v595 = vpop.f32.mrb[0].mxu0
      %v596 = vpop.f32.mrb[0].mxu0
      %v597 = vadd.f32 %v256, %v596
      %v598 = vpop.f32.mrb[0].mxu0
      %599 = vmatprep.mubr.bf16.mxu0 0
      %600 = vmatmul.mubr.bf16.gmra.mrb[0].mxu0 %v455
      %v601 = vpop.f32.mrb[0].mxu0
      %v602 = vadd.f32 %v256, %v601
      %v603 = vpop.f32.mrb[0].mxu0
      %v604 = vpop.f32.mrb[0].mxu0
      %v605 = vadd.f32 %v256, %v604
      %v606 = vpop.f32.mrb[0].mxu0
      %607 = vmatprep.mubr.bf16.mxu0 0
      %608 = vmatmul.mubr.bf16.gmra.mrb[0].mxu0 %v458
      %v609 = vpop.f32.mrb[0].mxu0
      %v610 = vadd.f32 %v256, %v609
      %v611 = vpop.f32.mrb[0].mxu0
      %v612 = vpop.f32.mrb[0].mxu0
      %v613 = vadd.f32 %v256, %v612
      %v614 = vpop.f32.mrb[0].mxu0
      %615 = vmatprep.mubr.bf16.mxu0 0
      %616 = vmatmul.mubr.bf16.gmra.mrb[0].mxu0 %v461
      %v617 = vpop.f32.mrb[0].mxu0
      %v618 = vadd.f32 %v256, %v617
      %v619 = vpop.f32.mrb[0].mxu0
      %v620 = vpop.f32.mrb[0].mxu0
      %v621 = vadd.f32 %v256, %v620
      %v622 = vpop.f32.mrb[0].mxu0
      %623 = vmatprep.mubr.bf16.mxu0 0
      %624 = vmatmul.mubr.bf16.gmra.mrb[0].mxu0 %v464
      %v625 = vpop.f32.mrb[0].mxu0
      %v626 = vadd.f32 %v256, %v625
      %v627 = vpop.f32.mrb[0].mxu0
      %v628 = vpop.f32.mrb[0].mxu0
      %v629 = vadd.f32 %v256, %v628
      %v630 = vpop.f32.mrb[0].mxu0
      %631 = vmatprep.mubr.bf16.mxu0 0
      %632 = vmatmul.mubr.bf16.gmra.mrb[0].mxu0 %v467
      %v633 = vpop.f32.mrb[0].mxu0
      %v634 = vadd.f32 %v256, %v633
      %v635 = vpop.f32.mrb[0].mxu0
      %v636 = vpop.f32.mrb[0].mxu0
      %v637 = vadd.f32 %v256, %v636
      %v638 = vpop.f32.mrb[0].mxu0
      %639 = vmatprep.mubr.bf16.mxu0 0
      %640 = vmatmul.mubr.bf16.gmra.mrb[0].mxu0 %v470
      %v641 = vpop.f32.mrb[0].mxu0
      %v642 = vadd.f32 %v256, %v641
      %v643 = vpop.f32.mrb[0].mxu0
      %v644 = vpop.f32.mrb[0].mxu0
      %v645 = vadd.f32 %v256, %v644
      %v646 = vpop.f32.mrb[0].mxu0
      %647 = vmatprep.mubr.bf16.mxu0 0
      %648 = vmatmul.mubr.bf16.gmra.mrb[0].mxu0 %v473
      %v649 = vpop.f32.mrb[0].mxu0
      %v650 = vadd.f32 %v256, %v649
      %v651 = vpop.f32.mrb[0].mxu0
      %v652 = vpop.f32.mrb[0].mxu0
      %v653 = vadd.f32 %v256, %v652
      %v654 = vpop.f32.mrb[0].mxu0
      %655 = vmatprep.mubr.bf16.mxu0 0
      %656 = vmatmul.mubr.bf16.gmra.mrb[0].mxu0 %v476
      %v657 = vpop.f32.mrb[0].mxu0
      %v658 = vadd.f32 %v256, %v657
      %v659 = vpop.f32.mrb[0].mxu0
      %v660 = vpop.f32.mrb[0].mxu0
      %v661 = vadd.f32 %v256, %v660
      %v662 = vpop.f32.mrb[0].mxu0
      %663 = vmatprep.mubr.bf16.mxu0 0
      %664 = vmatmul.mubr.bf16.gmra.mrb[0].mxu0 %v479
      %v665 = vpop.f32.mrb[0].mxu0
      %v666 = vadd.f32 %v256, %v665
      %v667 = vpop.f32.mrb[0].mxu0
      %v668 = vpop.f32.mrb[0].mxu0
      %v669 = vadd.f32 %v256, %v668
      %v670 = vpop.f32.mrb[0].mxu0
      %671 = vmatprep.mubr.bf16.mxu0 0
      %672 = vmatmul.mubr.bf16.gmra.mrb[0].mxu0 %v482
      %v673 = vpop.f32.mrb[0].mxu0
      %v674 = vadd.f32 %v256, %v673
      %v675 = vpop.f32.mrb[0].mxu0
      %v676 = vpop.f32.mrb[0].mxu0
      %v677 = vadd.f32 %v256, %v676
      %v678 = vpop.f32.mrb[0].mxu0
      %679 = vmatprep.mubr.bf16.mxu0 0
      %680 = vmatmul.mubr.bf16.gmra.mrb[0].mxu0 %v485
      %v681 = vpop.f32.mrb[0].mxu0
      %v682 = vadd.f32 %v256, %v681
      %v683 = vpop.f32.mrb[0].mxu0
      %v684 = vpop.f32.mrb[0].mxu0
      %v685 = vadd.f32 %v256, %v684
      %v686 = vpop.f32.mrb[0].mxu0
      %687 = vmatprep.mubr.bf16.mxu0 0
      %688 = vmatmul.mubr.bf16.gmra.mrb[0].mxu0 %v488
      %v689 = vpop.f32.mrb[0].mxu0
      %v690 = vadd.f32 %v256, %v689
      %v691 = vpop.f32.mrb[0].mxu0
      %v692 = vpop.f32.mrb[0].mxu0
      %v693 = vadd.f32 %v256, %v692
      %v694 = vpop.f32.mrb[0].mxu0
      %695 = vmatprep.mubr.bf16.mxu0 0
      %696 = vmatmul.mubr.bf16.gmra.mrb[0].mxu0 %v491
      %v697 = vpop.f32.mrb[0].mxu0
      %v698 = vadd.f32 %v256, %v697
      %v699 = vpop.f32.mrb[0].mxu0
      %v700 = vpop.f32.mrb[0].mxu0
      %v701 = vadd.f32 %v256, %v700
      %v702 = vpop.f32.mrb[0].mxu0
      %703 = vmatprep.mubr.bf16.mxu0 0
      %704 = vmatmul.mubr.bf16.gmra.mrb[0].mxu0 %v494
      %v705 = vpop.f32.mrb[0].mxu0
      %v706 = vadd.f32 %v256, %v705
      %v707 = vpop.f32.mrb[0].mxu0
      %v708 = vpop.f32.mrb[0].mxu0
      %v709 = vadd.f32 %v256, %v708
      %v710 = vpop.f32.mrb[0].mxu0
      %711 = vmatprep.mubr.bf16.mxu0 0
      %712 = vmatmul.mubr.bf16.gmra.mrb[0].mxu0 %v497
      %v713 = vpop.f32.mrb[0].mxu0
      %v714 = vadd.f32 %v256, %v713
      %v715 = vpop.f32.mrb[0].mxu0
      %v716 = vpop.f32.mrb[0].mxu0
      %v717 = vadd.f32 %v256, %v716
      %v718 = vpop.f32.mrb[0].mxu0
      %719 = vmatprep.mubr.bf16.mxu0 0
      %720 = vmatmul.mubr.bf16.gmra.mrb[0].mxu0 %v500
      %v721 = vpop.f32.mrb[0].mxu0
      %v722 = vadd.f32 %v256, %v721
      %v723 = vpop.f32.mrb[0].mxu0
      %v724 = vpop.f32.mrb[0].mxu0
      %v725 = vadd.f32 %v256, %v724
      %v726 = vpop.f32.mrb[0].mxu0
      %727 = vmatprep.mubr.bf16.mxu0 0
      %728 = vmatmul.mubr.bf16.gmra.mrb[0].mxu0 %v503
      %v729 = vpop.f32.mrb[0].mxu0
      %v730 = vadd.f32 %v256, %v729
      %v731 = vpop.f32.mrb[0].mxu0
      %v732 = vpop.f32.mrb[0].mxu0
      %v733 = vadd.f32 %v256, %v732
      %v734 = vpop.f32.mrb[0].mxu0
      %735 = vmatprep.mubr.bf16.mxu0 0
      %736 = vmatmul.mubr.bf16.gmra.mrb[0].mxu0 %v506
      %v737 = vpop.f32.mrb[0].mxu0
      %v738 = vadd.f32 %v256, %v737
      %v739 = vpop.f32.mrb[0].mxu0
      %v740 = vpop.f32.mrb[0].mxu0
      %v741 = vadd.f32 %v256, %v740
      %v742 = vpop.f32.mrb[0].mxu0
      %743 = vmatprep.mubr.bf16.mxu0 0
      %744 = vmatmul.mubr.bf16.gmra.mrb[0].mxu0 %v509
      %v745 = vpop.f32.mrb[0].mxu0
      %v746 = vadd.f32 %v256, %v745
      %v747 = vpop.f32.mrb[0].mxu0
      %v748 = vpop.f32.mrb[0].mxu0
      %v749 = vadd.f32 %v256, %v748
      %v750 = vpop.f32.mrb[0].mxu0
      %751 = vmatprep.mubr.bf16.mxu0 0
      %752 = vmatmul.mubr.bf16.gmra.mrb[0].mxu0 %v512
      %v753 = vpop.f32.mrb[0].mxu0
      %v754 = vadd.f32 %v256, %v753
      %v755 = vpop.f32.mrb[0].mxu0
      %v756 = vpop.f32.mrb[0].mxu0
      %v757 = vadd.f32 %v256, %v756
      %v758 = vpop.f32.mrb[0].mxu0
      %759 = vmatprep.mubr.bf16.mxu0 0
      %760 = vmatmul.mubr.bf16.gmra.mrb[0].mxu0 %v515
      %v761 = vpop.f32.mrb[0].mxu0
      %v762 = vadd.f32 %v256, %v761
      %v763 = vpop.f32.mrb[0].mxu0
      %v764 = vpop.f32.mrb[0].mxu0
      %v765 = vadd.f32 %v256, %v764
      %v766 = vpop.f32.mrb[0].mxu0
      %767 = vmatprep.mubr.bf16.mxu0 0
      %768 = vmatmul.mubr.bf16.gmra.mrb[0].mxu0 %v518
      %v769 = vpop.f32.mrb[0].mxu0
      %v770 = vadd.f32 %v256, %v769
      %v771 = vpop.f32.mrb[0].mxu0
      %v772 = vpop.f32.mrb[0].mxu0
      %v773 = vadd.f32 %v256, %v772
      %v774 = vpop.f32.mrb[0].mxu0
      %775 = vmatprep.mubr.bf16.mxu0 0
      %776 = vmatmul.mubr.bf16.gmra.mrb[0].mxu0 %v521
      %v777 = vpop.f32.mrb[0].mxu0
      %v778 = vadd.f32 %v256, %v777
      %v779 = vpop.f32.mrb[0].mxu0
      %v780 = vpop.f32.mrb[0].mxu0
      %v781 = vadd.f32 %v256, %v780
      %v782 = vpop.f32.mrb[0].mxu0
      %783 = vmatprep.mubr.bf16.mxu0 0
      %784 = vmatmul.mubr.bf16.gmra.mrb[0].mxu0 %v524
      %v785 = vpop.f32.mrb[0].mxu0
      %v786 = vadd.f32 %v256, %v785
      %v787 = vpop.f32.mrb[0].mxu0
      %v788 = vpop.f32.mrb[0].mxu0
      %v789 = vadd.f32 %v256, %v788
      %v790 = vpop.f32.mrb[0].mxu0
      %791 = vmatprep.mubr.bf16.mxu0 0
      %792 = vmatmul.mubr.bf16.gmra.mrb[0].mxu0 %v527
      %v793 = vpop.f32.mrb[0].mxu0
      %v794 = vadd.f32 %v256, %v793
      %v795 = vpop.f32.mrb[0].mxu0
      %v796 = vpop.f32.mrb[0].mxu0
      %v797 = vadd.f32 %v256, %v796
      %v798 = vpop.f32.mrb[0].mxu0
      %799 = vmatprep.mubr.bf16.mxu0 0
      %800 = vmatmul.mubr.bf16.gmra.mrb[0].mxu0 %v530
      %v801 = vpop.f32.mrb[0].mxu0
      %v802 = vadd.f32 %v256, %v801
      %v803 = vpop.f32.mrb[0].mxu0
      %v804 = vpop.f32.mrb[0].mxu0
      %v805 = vadd.f32 %v256, %v804
      %v806 = vpop.f32.mrb[0].mxu0
      %807 = vmatprep.mubr.bf16.mxu0 0
      %808 = vmatmul.mubr.bf16.gmra.mrb[0].mxu0 %v533
      %v809 = vpop.f32.mrb[0].mxu0
      %v810 = vadd.f32 %v256, %v809
      %v811 = vpop.f32.mrb[0].mxu0
      %v812 = vpop.f32.mrb[0].mxu0
      %v813 = vadd.f32 %v256, %v812
      %v814 = vpop.f32.mrb[0].mxu0
      %815 = vmatprep.mubr.bf16.mxu0 0
      %816 = vmatmul.mubr.bf16.gmra.mrb[0].mxu0 %v536
      %v817 = vpop.f32.mrb[0].mxu0
      %v818 = vadd.f32 %v256, %v817
      %v819 = vpop.f32.mrb[0].mxu0
      %v820 = vpop.f32.mrb[0].mxu0
      %v821 = vadd.f32 %v256, %v820
      %v822 = vpop.f32.mrb[0].mxu0
      %823 = vmatprep.mubr.bf16.mxu0 0
      %824 = vmatmul.mubr.bf16.gmra.mrb[0].mxu0 %v539
      %v825 = vpop.f32.mrb[0].mxu0
      %v826 = vadd.f32 %v256, %v825
      %v827 = vpop.f32.mrb[0].mxu0
      %v828 = vpop.f32.mrb[0].mxu0
      %v829 = vadd.f32 %v256, %v828
      %v830 = vpop.f32.mrb[0].mxu0
      %831 = vmatprep.mubr.bf16.mxu0 0
      %832 = vmatmul.mubr.bf16.gmra.mrb[0].mxu0 %v542
      %v833 = vpop.f32.mrb[0].mxu0
      %v834 = vadd.f32 %v256, %v833
      %v835 = vpop.f32.mrb[0].mxu0
      %v836 = vpop.f32.mrb[0].mxu0
      %v837 = vadd.f32 %v256, %v836
      %v838 = vpop.f32.mrb[0].mxu0
      %839 = vmatprep.mubr.bf16.mxu0 0
      %840 = vmatmul.mubr.bf16.gmra.mrb[0].mxu0 %v545
      %v841 = vpop.f32.mrb[0].mxu0
      %v842 = vadd.f32 %v256, %v841
      %v843 = vpop.f32.mrb[0].mxu0
      %v844 = vpop.f32.mrb[0].mxu0
      %v845 = vadd.f32 %v256, %v844
      %v846 = vpop.f32.mrb[0].mxu0
      %847 = vmatprep.mubr.bf16.mxu0 0
      %848 = vmatmul.mubr.bf16.gmra.mrb[0].mxu0 %v548
      %v849 = vpop.f32.mrb[0].mxu0
      %v850 = vadd.f32 %v256, %v849
      %v851 = vpop.f32.mrb[0].mxu0
      %v852 = vpop.f32.mrb[0].mxu0
      %v853 = vadd.f32 %v256, %v852
      %v854 = vpop.f32.mrb[0].mxu0
      %855 = vmatprep.mubr.bf16.mxu0 0
      %856 = vmatmul.mubr.bf16.gmra.mrb[0].mxu0 %v551
      %v857 = vpop.f32.mrb[0].mxu0
      %v858 = vadd.f32 %v256, %v857
      %v859 = vpop.f32.mrb[0].mxu0
      %v860 = vpop.f32.mrb[0].mxu0
      %v861 = vadd.f32 %v256, %v860
      %v862 = vpop.f32.mrb[0].mxu0
      %863 = vmatprep.mubr.bf16.mxu0 0
      %864 = vmatmul.mubr.bf16.gmra.mrb[0].mxu0 %v554
      %v865 = vpop.f32.mrb[0].mxu0
      %v866 = vadd.f32 %v256, %v865
      %v867 = vpop.f32.mrb[0].mxu0
      %v868 = vpop.f32.mrb[0].mxu0
      %v869 = vadd.f32 %v256, %v868
      %v870 = vpop.f32.mrb[0].mxu0
      %871 = vmatprep.mubr.bf16.mxu0 0
      %872 = vmatmul.mubr.bf16.gmra.mrb[0].mxu0 %v557
      %v873 = vpop.f32.mrb[0].mxu0
      %v874 = vadd.f32 %v256, %v873
      %v875 = vpop.f32.mrb[0].mxu0
      %v876 = vpop.f32.mrb[0].mxu0
      %v877 = vadd.f32 %v256, %v876
      %v878 = vpop.f32.mrb[0].mxu0
      %879 = vdwg.mxu0
      %v880 = vmax.f32 %v594, 0.0
      %v881 = vmax.f32 %v597, 0.0
      %v882 = vmax.f32 %v602, 0.0
      %v883 = vmax.f32 %v605, 0.0
      %v884 = vmax.f32 %v610, 0.0
      %v885 = vmax.f32 %v613, 0.0
      %v886 = vmax.f32 %v618, 0.0
      %v887 = vmax.f32 %v621, 0.0
      %v888 = vmax.f32 %v626, 0.0
      %v889 = vmax.f32 %v629, 0.0
      %v890 = vmax.f32 %v634, 0.0
      %v891 = vmax.f32 %v637, 0.0
      %v892 = vmax.f32 %v642, 0.0
      %v893 = vmax.f32 %v645, 0.0
      %v894 = vmax.f32 %v650, 0.0
      %v895 = vmax.f32 %v653, 0.0
      %v896 = vmax.f32 %v658, 0.0
      %v897 = vmax.f32 %v661, 0.0
      %v898 = vmax.f32 %v666, 0.0
      %v899 = vmax.f32 %v669, 0.0
      %v900 = vmax.f32 %v674, 0.0
      %v901 = vmax.f32 %v677, 0.0
      %v902 = vmax.f32 %v682, 0.0
      %v903 = vmax.f32 %v685, 0.0
      %v904 = vmax.f32 %v690, 0.0
      %v905 = vmax.f32 %v693, 0.0
      %v906 = vmax.f32 %v698, 0.0
      %v907 = vmax.f32 %v701, 0.0
      %v908 = vmax.f32 %v706, 0.0
      %v909 = vmax.f32 %v709, 0.0
      %v910 = vmax.f32 %v714, 0.0
      %v911 = vmax.f32 %v717, 0.0
      %v912 = vmax.f32 %v722, 0.0
      %v913 = vmax.f32 %v725, 0.0
      %v914 = vmax.f32 %v730, 0.0
      %v915 = vmax.f32 %v733, 0.0
      %v916 = vmax.f32 %v738, 0.0
      %v917 = vmax.f32 %v741, 0.0
      %v918 = vmax.f32 %v746, 0.0
      %v919 = vmax.f32 %v749, 0.0
      %v920 = vmax.f32 %v754, 0.0
      %v921 = vmax.f32 %v757, 0.0
      %v922 = vmax.f32 %v762, 0.0
      %v923 = vmax.f32 %v765, 0.0
      %v924 = vmax.f32 %v770, 0.0
      %v925 = vmax.f32 %v773, 0.0
      %v926 = vmax.f32 %v778, 0.0
      %v927 = vmax.f32 %v781, 0.0
      %v928 = vmax.f32 %v786, 0.0
      %v929 = vmax.f32 %v789, 0.0
      %v930 = vmax.f32 %v794, 0.0
      %v931 = vmax.f32 %v797, 0.0
      %v932 = vmax.f32 %v802, 0.0
      %v933 = vmax.f32 %v805, 0.0
      %v934 = vmax.f32 %v810, 0.0
      %v935 = vmax.f32 %v813, 0.0
      %v936 = vmax.f32 %v818, 0.0
      %v937 = vmax.f32 %v821, 0.0
      %v938 = vmax.f32 %v826, 0.0
      %v939 = vmax.f32 %v829, 0.0
      %v940 = vmax.f32 %v834, 0.0
      %v941 = vmax.f32 %v837, 0.0
      %v942 = vmax.f32 %v842, 0.0
      %v943 = vmax.f32 %v845, 0.0
      %v944 = vmax.f32 %v850, 0.0
      %v945 = vmax.f32 %v853, 0.0
      %v946 = vmax.f32 %v858, 0.0
      %v947 = vmax.f32 %v861, 0.0
      %v948 = vmax.f32 %v866, 0.0
      %v949 = vmax.f32 %v869, 0.0
      %v950 = vmax.f32 %v874, 0.0
      %v951 = vmax.f32 %v877, 0.0
      %v952 = vpack.c.bf16 %v881, %v880
      %v953 = vpack.c.bf16 %v883, %v882
      %v954 = vpack.c.bf16 %v885, %v884
      %v955 = vpack.c.bf16 %v887, %v886
      %v956 = vpack.c.bf16 %v889, %v888
      %v957 = vpack.c.bf16 %v891, %v890
      %v958 = vpack.c.bf16 %v893, %v892
      %v959 = vpack.c.bf16 %v895, %v894
      %v960 = vpack.c.bf16 %v897, %v896
      %v961 = vpack.c.bf16 %v899, %v898
      %v962 = vpack.c.bf16 %v901, %v900
      %v963 = vpack.c.bf16 %v903, %v902
      %v964 = vpack.c.bf16 %v905, %v904
      %v965 = vpack.c.bf16 %v907, %v906
      %v966 = vpack.c.bf16 %v909, %v908
      %v967 = vpack.c.bf16 %v911, %v910
      %v968 = vpack.c.bf16 %v913, %v912
      %v969 = vpack.c.bf16 %v915, %v914
      %v970 = vpack.c.bf16 %v917, %v916
      %v971 = vpack.c.bf16 %v919, %v918
      %v972 = vpack.c.bf16 %v921, %v920
      %v973 = vpack.c.bf16 %v923, %v922
      %v974 = vpack.c.bf16 %v925, %v924
      %v975 = vpack.c.bf16 %v927, %v926
      %v976 = vpack.c.bf16 %v929, %v928
      %v977 = vpack.c.bf16 %v931, %v930
      %v978 = vpack.c.bf16 %v933, %v932
      %v979 = vpack.c.bf16 %v935, %v934
      %v980 = vpack.c.bf16 %v937, %v936
      %v981 = vpack.c.bf16 %v939, %v938
      %v982 = vpack.c.bf16 %v941, %v940
      %v983 = vpack.c.bf16 %v943, %v942
      %v984 = vpack.c.bf16 %v945, %v944
      %v985 = vpack.c.bf16 %v947, %v946
      %v986 = vpack.c.bf16 %v949, %v948
      %v987 = vpack.c.bf16 %v951, %v950
      %v1024 = vunpack.c.l.b16 %v952
      %v1025 = vunpack.c.h.b16 %v952
      %v1026 = vunpack.c.l.b16 %v953
      %v1027 = vunpack.c.h.b16 %v953
      %v1028 = vunpack.c.l.b16 %v954
      %v1029 = vunpack.c.h.b16 %v954
      %v1030 = vunpack.c.l.b16 %v955
      %v1031 = vunpack.c.h.b16 %v955
      %v1032 = vunpack.c.l.b16 %v956
      %v1033 = vunpack.c.h.b16 %v956
      %v1034 = vunpack.c.l.b16 %v957
      %v1035 = vunpack.c.h.b16 %v957
      %v1036 = vunpack.c.l.b16 %v958
      %v1037 = vunpack.c.h.b16 %v958
      %v1038 = vunpack.c.l.b16 %v959
      %v1039 = vunpack.c.h.b16 %v959
      %v1040 = vunpack.c.l.b16 %v960
      %v1041 = vunpack.c.h.b16 %v960
      %v1042 = vunpack.c.l.b16 %v961
      %v1043 = vunpack.c.h.b16 %v961
      %v1044 = vunpack.c.l.b16 %v962
      %v1045 = vunpack.c.h.b16 %v962
      %v1046 = vunpack.c.l.b16 %v963
      %v1047 = vunpack.c.h.b16 %v963
      %v1048 = vunpack.c.l.b16 %v964
      %v1049 = vunpack.c.h.b16 %v964
      %v1050 = vunpack.c.l.b16 %v965
      %v1051 = vunpack.c.h.b16 %v965
      %v1052 = vunpack.c.l.b16 %v966
      %v1053 = vunpack.c.h.b16 %v966
      %v1054 = vunpack.c.l.b16 %v967
      %v1055 = vunpack.c.h.b16 %v967
      %v1056 = vunpack.c.l.b16 %v968
      %v1057 = vunpack.c.h.b16 %v968
      %v1058 = vunpack.c.l.b16 %v969
      %v1059 = vunpack.c.h.b16 %v969
      %v1060 = vunpack.c.l.b16 %v970
      %v1061 = vunpack.c.h.b16 %v970
      %v1062 = vunpack.c.l.b16 %v971
      %v1063 = vunpack.c.h.b16 %v971
      %v1064 = vunpack.c.l.b16 %v972
      %v1065 = vunpack.c.h.b16 %v972
      %v1066 = vunpack.c.l.b16 %v973
      %v1067 = vunpack.c.h.b16 %v973
      %v1068 = vunpack.c.l.b16 %v974
      %v1069 = vunpack.c.h.b16 %v974
      %v1070 = vunpack.c.l.b16 %v975
      %v1071 = vunpack.c.h.b16 %v975
      %v1072 = vunpack.c.l.b16 %v976
      %v1073 = vunpack.c.h.b16 %v976
      %v1074 = vunpack.c.l.b16 %v977
      %v1075 = vunpack.c.h.b16 %v977
      %v1076 = vunpack.c.l.b16 %v978
      %v1077 = vunpack.c.h.b16 %v978
      %v1078 = vunpack.c.l.b16 %v979
      %v1079 = vunpack.c.h.b16 %v979
      %v1080 = vunpack.c.l.b16 %v980
      %v1081 = vunpack.c.h.b16 %v980
      %v1082 = vunpack.c.l.b16 %v981
      %v1083 = vunpack.c.h.b16 %v981
      %v1084 = vunpack.c.l.b16 %v982
      %v1085 = vunpack.c.h.b16 %v982
      %v1086 = vunpack.c.l.b16 %v983
      %v1087 = vunpack.c.h.b16 %v983
      %v1088 = vunpack.c.l.b16 %v984
      %v1089 = vunpack.c.h.b16 %v984
      %v1090 = vunpack.c.l.b16 %v985
      %v1091 = vunpack.c.h.b16 %v985
      %v1092 = vunpack.c.l.b16 %v986
      %v1093 = vunpack.c.h.b16 %v986
      %v1094 = vunpack.c.l.b16 %v987
      %v1095 = vunpack.c.h.b16 %v987
      %v1096 = vpack.c.b16 %v1024, %v1024
      %v1097 = vpack.c.b16 %v1025, %v1025
      %v1098 = vpack.c.b16 %v1026, %v1026
      %v1099 = vpack.c.b16 %v1027, %v1027
      %v1100 = vpack.c.b16 %v1028, %v1028
      %v1101 = vpack.c.b16 %v1029, %v1029
      %v1102 = vpack.c.b16 %v1030, %v1030
      %v1103 = vpack.c.b16 %v1031, %v1031
      %v1104 = vpack.c.b16 %v1032, %v1032
      %v1105 = vpack.c.b16 %v1033, %v1033
      %v1106 = vpack.c.b16 %v1034, %v1034
      %v1107 = vpack.c.b16 %v1035, %v1035
      %v1108 = vpack.c.b16 %v1036, %v1036
      %v1109 = vpack.c.b16 %v1037, %v1037
      %v1110 = vpack.c.b16 %v1038, %v1038
      %v1111 = vpack.c.b16 %v1039, %v1039
      %v1112 = vpack.c.b16 %v1040, %v1040
      %v1113 = vpack.c.b16 %v1041, %v1041
      %v1114 = vpack.c.b16 %v1042, %v1042
      %v1115 = vpack.c.b16 %v1043, %v1043
      %v1116 = vpack.c.b16 %v1044, %v1044
      %v1117 = vpack.c.b16 %v1045, %v1045
      %v1118 = vpack.c.b16 %v1046, %v1046
      %v1119 = vpack.c.b16 %v1047, %v1047
      %v1120 = vpack.c.b16 %v1048, %v1048
      %v1121 = vpack.c.b16 %v1049, %v1049
      %v1122 = vpack.c.b16 %v1050, %v1050
      %v1123 = vpack.c.b16 %v1051, %v1051
      %v1124 = vpack.c.b16 %v1052, %v1052
      %v1125 = vpack.c.b16 %v1053, %v1053
      %v1126 = vpack.c.b16 %v1054, %v1054
      %v1127 = vpack.c.b16 %v1055, %v1055
      %v1128 = vpack.c.b16 %v1056, %v1056
      %v1129 = vpack.c.b16 %v1057, %v1057
      %v1130 = vpack.c.b16 %v1058, %v1058
      %v1131 = vpack.c.b16 %v1059, %v1059
      %v1132 = vpack.c.b16 %v1060, %v1060
      %v1133 = vpack.c.b16 %v1061, %v1061
      %v1134 = vpack.c.b16 %v1062, %v1062
      %v1135 = vpack.c.b16 %v1063, %v1063
      %v1136 = vpack.c.b16 %v1064, %v1064
      %v1137 = vpack.c.b16 %v1065, %v1065
      %v1138 = vpack.c.b16 %v1066, %v1066
      %v1139 = vpack.c.b16 %v1067, %v1067
      %v1140 = vpack.c.b16 %v1068, %v1068
      %v1141 = vpack.c.b16 %v1069, %v1069
      %v1142 = vpack.c.b16 %v1070, %v1070
      %v1143 = vpack.c.b16 %v1071, %v1071
      %v1144 = vpack.c.b16 %v1072, %v1072
      %v1145 = vpack.c.b16 %v1073, %v1073
      %v1146 = vpack.c.b16 %v1074, %v1074
      %v1147 = vpack.c.b16 %v1075, %v1075
      %v1148 = vpack.c.b16 %v1076, %v1076
      %v1149 = vpack.c.b16 %v1077, %v1077
      %v1150 = vpack.c.b16 %v1078, %v1078
      %v1151 = vpack.c.b16 %v1079, %v1079
      %v1152 = vpack.c.b16 %v1080, %v1080
      %v1153 = vpack.c.b16 %v1081, %v1081
      %v1154 = vpack.c.b16 %v1082, %v1082
      %v1155 = vpack.c.b16 %v1083, %v1083
      %v1156 = vpack.c.b16 %v1084, %v1084
      %v1157 = vpack.c.b16 %v1085, %v1085
      %v1158 = vpack.c.b16 %v1086, %v1086
      %v1159 = vpack.c.b16 %v1087, %v1087
      %v1160 = vpack.c.b16 %v1088, %v1088
      %v1161 = vpack.c.b16 %v1089, %v1089
      %v1162 = vpack.c.b16 %v1090, %v1090
      %v1163 = vpack.c.b16 %v1091, %v1091
      %v1164 = vpack.c.b16 %v1092, %v1092
      %v1165 = vpack.c.b16 %v1093, %v1093
      %v1166 = vpack.c.b16 %v1094, %v1094
      %v1167 = vpack.c.b16 %v1095, %v1095
      %vm1240 = vcmask 257024
      %1241 = vst.msk [vmem:[%s172] sm:$0xf] %vm1240, %v1096
      %1242 = vst.msk [vmem:[%s172 + $0x4] sm:$0xf] %vm1240, %v1097
      %1243 = vst.msk [vmem:[%s172 + $0x8] sm:$0xf] %vm1240, %v1098
      %1244 = vst.msk [vmem:[%s172 + $0xc] sm:$0xf] %vm1240, %v1099
      %1245 = vst.msk [vmem:[%s172 + $0x10] sm:$0xf] %vm1240, %v1100
      %1246 = vst.msk [vmem:[%s172 + $0x14] sm:$0xf] %vm1240, %v1101
      %1247 = vst.msk [vmem:[%s172 + $0x18] sm:$0xf] %vm1240, %v1102
      %1248 = vst.msk [vmem:[%s172 + $0x1c] sm:$0xf] %vm1240, %v1103
      %1249 = vst.msk [vmem:[%s172 + $0x20] sm:$0xf] %vm1240, %v1104
      %1250 = vst.msk [vmem:[%s172 + $0x24] sm:$0xf] %vm1240, %v1105
      %1251 = vst.msk [vmem:[%s172 + $0x28] sm:$0xf] %vm1240, %v1106
      %1252 = vst.msk [vmem:[%s172 + $0x2c] sm:$0xf] %vm1240, %v1107
      %1253 = vst.msk [vmem:[%s172 + $0x30] sm:$0xf] %vm1240, %v1108
      %1254 = vst.msk [vmem:[%s172 + $0x34] sm:$0xf] %vm1240, %v1109
      %1255 = vst.msk [vmem:[%s172 + $0x38] sm:$0xf] %vm1240, %v1110
      %1256 = vst.msk [vmem:[%s172 + $0x3c] sm:$0xf] %vm1240, %v1111
      %1257 = vst.msk [vmem:[%s172 + $0x40] sm:$0xf] %vm1240, %v1112
      %1258 = vst.msk [vmem:[%s172 + $0x44] sm:$0xf] %vm1240, %v1113
      %1259 = vst.msk [vmem:[%s172 + $0x48] sm:$0xf] %vm1240, %v1114
      %1260 = vst.msk [vmem:[%s172 + $0x4c] sm:$0xf] %vm1240, %v1115
      %1261 = vst.msk [vmem:[%s172 + $0x50] sm:$0xf] %vm1240, %v1116
      %1262 = vst.msk [vmem:[%s172 + $0x54] sm:$0xf] %vm1240, %v1117
      %1263 = vst.msk [vmem:[%s172 + $0x58] sm:$0xf] %vm1240, %v1118
      %1264 = vst.msk [vmem:[%s172 + $0x5c] sm:$0xf] %vm1240, %v1119
      %1265 = vst.msk [vmem:[%s172 + $0x60] sm:$0xf] %vm1240, %v1120
      %1266 = vst.msk [vmem:[%s172 + $0x64] sm:$0xf] %vm1240, %v1121
      %1267 = vst.msk [vmem:[%s172 + $0x68] sm:$0xf] %vm1240, %v1122
      %1268 = vst.msk [vmem:[%s172 + $0x6c] sm:$0xf] %vm1240, %v1123
      %1269 = vst.msk [vmem:[%s172 + $0x70] sm:$0xf] %vm1240, %v1124
      %1270 = vst.msk [vmem:[%s172 + $0x74] sm:$0xf] %vm1240, %v1125
      %1271 = vst.msk [vmem:[%s172 + $0x78] sm:$0xf] %vm1240, %v1126
      %1272 = vst.msk [vmem:[%s172 + $0x7c] sm:$0xf] %vm1240, %v1127
      %1273 = vst.msk [vmem:[%s172 + $0x80] sm:$0xf] %vm1240, %v1128
      %1274 = vst.msk [vmem:[%s172 + $0x84] sm:$0xf] %vm1240, %v1129
      %1275 = vst.msk [vmem:[%s172 + $0x88] sm:$0xf] %vm1240, %v1130
      %1276 = vst.msk [vmem:[%s172 + $0x8c] sm:$0xf] %vm1240, %v1131
      %1277 = vst.msk [vmem:[%s172 + $0x90] sm:$0xf] %vm1240, %v1132
      %1278 = vst.msk [vmem:[%s172 + $0x94] sm:$0xf] %vm1240, %v1133
      %1279 = vst.msk [vmem:[%s172 + $0x98] sm:$0xf] %vm1240, %v1134
      %1280 = vst.msk [vmem:[%s172 + $0x9c] sm:$0xf] %vm1240, %v1135
      %1281 = vst.msk [vmem:[%s172 + $0xa0] sm:$0xf] %vm1240, %v1136
      %1282 = vst.msk [vmem:[%s172 + $0xa4] sm:$0xf] %vm1240, %v1137
      %1283 = vst.msk [vmem:[%s172 + $0xa8] sm:$0xf] %vm1240, %v1138
      %1284 = vst.msk [vmem:[%s172 + $0xac] sm:$0xf] %vm1240, %v1139
      %1285 = vst.msk [vmem:[%s172 + $0xb0] sm:$0xf] %vm1240, %v1140
      %1286 = vst.msk [vmem:[%s172 + $0xb4] sm:$0xf] %vm1240, %v1141
      %1287 = vst.msk [vmem:[%s172 + $0xb8] sm:$0xf] %vm1240, %v1142
      %1288 = vst.msk [vmem:[%s172 + $0xbc] sm:$0xf] %vm1240, %v1143
      %1289 = vst.msk [vmem:[%s172 + $0xc0] sm:$0xf] %vm1240, %v1144
      %1290 = vst.msk [vmem:[%s172 + $0xc4] sm:$0xf] %vm1240, %v1145
      %1291 = vst.msk [vmem:[%s172 + $0xc8] sm:$0xf] %vm1240, %v1146
      %1292 = vst.msk [vmem:[%s172 + $0xcc] sm:$0xf] %vm1240, %v1147
      %1293 = vst.msk [vmem:[%s172 + $0xd0] sm:$0xf] %vm1240, %v1148
      %1294 = vst.msk [vmem:[%s172 + $0xd4] sm:$0xf] %vm1240, %v1149
      %1295 = vst.msk [vmem:[%s172 + $0xd8] sm:$0xf] %vm1240, %v1150
      %1296 = vst.msk [vmem:[%s172 + $0xdc] sm:$0xf] %vm1240, %v1151
      %1297 = vst.msk [vmem:[%s172 + $0xe0] sm:$0xf] %vm1240, %v1152
      %1298 = vst.msk [vmem:[%s172 + $0xe4] sm:$0xf] %vm1240, %v1153
      %1299 = vst.msk [vmem:[%s172 + $0xe8] sm:$0xf] %vm1240, %v1154
      %1300 = vst.msk [vmem:[%s172 + $0xec] sm:$0xf] %vm1240, %v1155
      %1301 = vst.msk [vmem:[%s172 + $0xf0] sm:$0xf] %vm1240, %v1156
      %1302 = vst.msk [vmem:[%s172 + $0xf4] sm:$0xf] %vm1240, %v1157
      %1303 = vst.msk [vmem:[%s172 + $0xf8] sm:$0xf] %vm1240, %v1158
      %1304 = vst.msk [vmem:[%s172 + $0xfc] sm:$0xf] %vm1240, %v1159
      %1305 = vst.msk [vmem:[%s172 + $0x100] sm:$0xf] %vm1240, %v1160
      %1306 = vst.msk [vmem:[%s172 + $0x104] sm:$0xf] %vm1240, %v1161
      %1307 = vst.msk [vmem:[%s172 + $0x108] sm:$0xf] %vm1240, %v1162
      %1308 = vst.msk [vmem:[%s172 + $0x10c] sm:$0xf] %vm1240, %v1163
      %1309 = vst.msk [vmem:[%s172 + $0x110] sm:$0xf] %vm1240, %v1164
      %1310 = vst.msk [vmem:[%s172 + $0x114] sm:$0xf] %vm1240, %v1165
      %1311 = vst.msk [vmem:[%s172 + $0x118] sm:$0xf] %vm1240, %v1166
      %1312 = vst.msk [vmem:[%s172 + $0x11c] sm:$0xf] %vm1240, %v1167
      %s1313 = smul.u32 72, %s14
      %p1314 = scmp.lt.s32.totalorder %s1313, 143
      %s1315 = scalar_select %p1314, %s1313, 143
      %s1316 = smul.addr %s1315, 4
      %s1317 = scalar_lea.vmem %s3, %s1316
      // Predicated region
      $region33: #{net_forward.5} parent=31 // pred_check
        %p1318 = pneg %p100
      $region34: #{net_forward.5} parent=31 // pred_check_branch
        %1320 = sbr.rel (%p1318) target = $region36
      $region35: #{net_forward.5} parent=31 // pred_region
        %s1321 = smul.u32 72, %s14
      $region36: #{net_forward.5} parent=31 // pred_fallthru
        _
    $region32: #{net_forward.5} parent=5 // pred_fallthru
      _
    %p1322 = scmp.le.s32.totalorder 2, %s9
    // Predicated region
    $region37: #{net_forward.5} parent=5 // pred_check
      %p1323 = pneg %p1322
    $region38: #{net_forward.5} parent=5 // pred_check_branch
      %1325 = sbr.rel (%p1323) target = $region40
    $region39: #{net_forward.5} parent=5 // pred_region
      %s1326 = ssub.s32 %s9, 2
      // Predicated region
      $region41: #{net_forward.5} parent=39 // pred_check
        %p1327 = pneg %p106
      $region42: #{net_forward.5} parent=39 // pred_check_branch
        %1329 = sbr.rel (%p1327) target = $region44
      $region43: #{net_forward.5} parent=39 // pred_region
        %s1330 = smul.u32 72, %s15
        %p1331 = scmp.lt.s32.totalorder %s1330, 143
        %s1332 = scalar_select %p1331, %s1330, 143
        %s1333 = smul.addr %s1332, 4
        %s1334 = scalar_lea.vmem %s3, %s1333
      $region44: #{net_forward.5} parent=39 // pred_fallthru
        _
    $region40: #{net_forward.5} parent=5 // pred_fallthru
      _
  $region6: #{net_forward.5} parent=0 // loop_footer
    %s13 = sadd.s32 1, %s9
  $region7: #{net_forward.5} parent=0 // loop_footer_branch
    %8 = sbr.rel target = $region3
  $region8: #{net_forward.5} parent=0 // loop_exit
    _

// kernel: net_forward.7
$region0: #{net_forward.7}
  #allocation0 [shape = 'u32[]', space=smem, size = 0x4, offset = 0x4, fixed_abs, tag = 'smem constant byte address 0x4 - core index']
  #allocation1 [shape = 'u32[144,128]{1,0:T(1,128)}', space=vmem, size = 0x12000, scoped, tag = 'internal scratch']
  %s0 = inlined_call_operand.vmem [shape: bf16[128,800], index: 0, kind: input, shape index: {}]
  %s1 = inlined_call_operand.vmem [shape: bf16[800,64], index: 1, kind: input, shape index: {}]
  %s2 = inlined_call_operand.vmem [shape: f32[1,64], index: 2, kind: input, shape index: {}]
  %s3 = inlined_call_operand.vmem [shape: bf16[128,64], index: 3, kind: output, shape index: {}]
  %s4 = sld [smem:[#allocation0]]
  $region45: #{net_forward.7} parent=0
    _
  %s6 = ssub.s32 1, %s4
  %s7 = scalar_select 0, %s6, %s4
  loop: start=0, step=1, limit=4
  $region2: #{net_forward.7} parent=0 // loop_pre_header
    _
  $region3: #{net_forward.7} parent=0 // loop_header
    %s9 = sphi 0, %s13
    %p10 = scmp.ge.s32.totalorder %s9, 4
    %s19 = sphi 0, %s21
    %s22 = sphi 0, %s19
    %s23 = sphi 0, %s22
    %s39 = sphi 0, %s23
    %s43 = sphi 0, %s43
    %s45 = sphi 0, %s43
    %s46 = sphi 0, %s45
    %s60 = sphi 0, %s46
    %s64 = sphi 0, %s64
    %s66 = sphi 0, %s64
    %s67 = sphi 0, %s66
    %s81 = sphi 0, %s67
    %s87 = sphi 0, %s89
    %s90 = sphi 0, %s87
    %s91 = sphi 0, %s90
    %s107 = sphi 0, %s91
  $region4: #{net_forward.7} parent=0 // loop_header_branch
    %12 = sbr.rel (%p10) target = $region8
  $region5: #{net_forward.7} parent=0 // loop_body
    %s14 = ssub.s32 %s9, 1
    %s15 = ssub.s32 %s9, 2
    %s16 = sadd.s32 %s9, 1
    %s17 = ssub.s32 %s9, %s16
    %p18 = scmp.eq.s32.totalorder %s17, 0
    %s20 = sadd.s32 %s19, 1
    %s21 = scalar_select %p18, %s19, %s20
    %p24 = pneg %p18
    %p25 = scmp.eq.s32.totalorder %s9, 1
    %p26 = por %p24, %p25
    %p27 = scmp.ne.s32.totalorder %s19, %s22
    %p28 = scmp.eq.s32.totalorder %s9, 0
    %p29 = por %p27, %p28
    %p30 = scmp.ne.s32.totalorder %s19, %s22
    %p31 = scmp.eq.s32.totalorder %s14, 1
    %p32 = por %p30, %p31
    %p33 = scmp.ne.s32.totalorder %s22, %s23
    %p34 = scmp.eq.s32.totalorder %s14, 0
    %p35 = por %p33, %p34
    %p36 = scmp.ne.s32.totalorder %s22, %s23
    %p37 = scmp.eq.s32.totalorder %s15, 1
    %p38 = por %p36, %p37
    %p40 = scmp.ne.s32.totalorder %s23, %s39
    %p41 = scmp.eq.s32.totalorder %s15, 0
    %p42 = por %p40, %p41
    %s44 = sadd.s32 %s43, 1
    %p47 = scmp.eq.s32.totalorder %s9, 1
    %p48 = scmp.ne.s32.totalorder %s43, %s45
    %p49 = scmp.eq.s32.totalorder %s9, 0
    %p50 = por %p48, %p49
    %p51 = scmp.ne.s32.totalorder %s43, %s45
    %p52 = scmp.eq.s32.totalorder %s14, 1
    %p53 = por %p51, %p52
    %p54 = scmp.ne.s32.totalorder %s45, %s46
    %p55 = scmp.eq.s32.totalorder %s14, 0
    %p56 = por %p54, %p55
    %p57 = scmp.ne.s32.totalorder %s45, %s46
    %p58 = scmp.eq.s32.totalorder %s15, 1
    %p59 = por %p57, %p58
    %p61 = scmp.ne.s32.totalorder %s46, %s60
    %p62 = scmp.eq.s32.totalorder %s15, 0
    %p63 = por %p61, %p62
    %s65 = sadd.s32 %s64, 1
    %p68 = scmp.eq.s32.totalorder %s9, 1
    %p69 = scmp.ne.s32.totalorder %s64, %s66
    %p70 = scmp.eq.s32.totalorder %s9, 0
    %p71 = por %p69, %p70
    %p72 = scmp.ne.s32.totalorder %s64, %s66
    %p73 = scmp.eq.s32.totalorder %s14, 1
    %p74 = por %p72, %p73
    %p75 = scmp.ne.s32.totalorder %s66, %s67
    %p76 = scmp.eq.s32.totalorder %s14, 0
    %p77 = por %p75, %p76
    %p78 = scmp.ne.s32.totalorder %s66, %s67
    %p79 = scmp.eq.s32.totalorder %s15, 1
    %p80 = por %p78, %p79
    %p82 = scmp.ne.s32.totalorder %s67, %s81
    %p83 = scmp.eq.s32.totalorder %s15, 0
    %p84 = por %p82, %p83
    %s85 = ssub.s32 %s9, %s16
    %p86 = scmp.eq.s32.totalorder %s85, 0
    %s88 = sadd.s32 %s87, 1
    %s89 = scalar_select %p86, %s87, %s88
    %p92 = pneg %p86
    %p93 = scmp.eq.s32.totalorder %s9, 1
    %p94 = por %p92, %p93
    %p95 = scmp.ne.s32.totalorder %s87, %s90
    %p96 = scmp.eq.s32.totalorder %s9, 0
    %p97 = por %p95, %p96
    %p98 = scmp.ne.s32.totalorder %s87, %s90
    %p99 = scmp.eq.s32.totalorder %s14, 1
    %p100 = por %p98, %p99
    %p101 = scmp.ne.s32.totalorder %s90, %s91
    %p102 = scmp.eq.s32.totalorder %s14, 0
    %p103 = por %p101, %p102
    %p104 = scmp.ne.s32.totalorder %s90, %s91
    %p105 = scmp.eq.s32.totalorder %s15, 1
    %p106 = por %p104, %p105
    %p108 = scmp.ne.s32.totalorder %s91, %s107
    %p109 = scmp.eq.s32.totalorder %s15, 0
    %p110 = por %p108, %p109
    %p111 = scmp.le.s32.totalorder 1, %s9
    %p112 = scmp.lt.s32.totalorder %s9, 3
    %p113 = pnand %p111, %p112
    %p114 = pneg %p113
    // Predicated region
    $region9: #{net_forward.7} parent=5 // pred_check
      _
    $region10: #{net_forward.7} parent=5 // pred_check_branch
      %116 = sbr.rel (%p113) target = $region12
    $region11: #{net_forward.7} parent=5 // pred_region
      %s117 = ssub.s32 %s9, 1
      // Predicated region
      $region13: #{net_forward.7} parent=11 // pred_check
        %p118 = pneg %p56
      $region14: #{net_forward.7} parent=11 // pred_check_branch
        %120 = sbr.rel (%p118) target = $region16
      $region15: #{net_forward.7} parent=11 // pred_region
        _
      $region16: #{net_forward.7} parent=11 // pred_fallthru
        _
      // Predicated region
      $region17: #{net_forward.7} parent=11 // pred_check
        %p121 = pneg %p77
      $region18: #{net_forward.7} parent=11 // pred_check_branch
        %123 = sbr.rel (%p121) target = $region20
      $region19: #{net_forward.7} parent=11 // pred_region
        _
      $region20: #{net_forward.7} parent=11 // pred_fallthru
        _
    $region12: #{net_forward.7} parent=5 // pred_fallthru
      _
    %p124 = scmp.lt.s32.totalorder %s9, 2
    // Predicated region
    $region21: #{net_forward.7} parent=5 // pred_check
      %p125 = pneg %p124
    $region22: #{net_forward.7} parent=5 // pred_check_branch
      %127 = sbr.rel (%p125) target = $region24
    $region23: #{net_forward.7} parent=5 // pred_region
      // Predicated region
      $region25: #{net_forward.7} parent=23 // pred_check
        %p128 = pneg %p29
      $region26: #{net_forward.7} parent=23 // pred_check_branch
        %130 = sbr.rel (%p128) target = $region28
      $region27: #{net_forward.7} parent=23 // pred_region
        %s131 = smul.u32 8, %s9
        %p132 = scmp.lt.s32.totalorder %s131, 15
        %s133 = scalar_select %p132, %s131, 15
        %s134 = smul.addr %s133, 7
        %s135 = smul.addr %s134, 4
        %s136 = scalar_lea.vmem %s0, %s135
        %s137 = smul.u32 8, %s9
      $region28: #{net_forward.7} parent=23 // pred_fallthru
        _
    $region24: #{net_forward.7} parent=5 // pred_fallthru
      _
    %p138 = scmp.le.s32.totalorder 1, %s9
    %p139 = scmp.lt.s32.totalorder %s9, 3
    %p140 = pnand %p138, %p139
    %p141 = pneg %p140
    // Predicated region
    $region29: #{net_forward.7} parent=5 // pred_check
      _
    $region30: #{net_forward.7} parent=5 // pred_check_branch
      %143 = sbr.rel (%p140) target = $region32
    $region31: #{net_forward.7} parent=5 // pred_region
      %s144 = ssub.s32 %s9, 1
      %s145 = smul.u32 8, %s14
      %p146 = scmp.lt.s32.totalorder %s145, 15
      %s147 = scalar_select %p146, %s145, 15
      %s148 = smul.addr %s147, 7
      %s149 = smul.addr %s148, 4
      %s150 = scalar_lea.vmem %s0, %s149
      %p151 = pneg %p35
      %p152 = pneg %p32
      %p153 = pneg %p56
      %p154 = pneg %p53
      %p155 = pneg %p77
      %p156 = pneg %p74
      %p157 = pneg %p103
      %p158 = pneg %p100
      %s159 = smul.u32 8, %s14
      %p160 = scmp.lt.s32.totalorder %s159, 15
      %s161 = scalar_select %p160, %s159, 15
      %s162 = smul.addr %s161, 4
      %s163 = scalar_lea.vmem %s3, %s162
      %s164 = smul.u32 8, %s14
      %p165 = scmp.lt.s32.totalorder %s164, 15
      %s166 = scalar_select %p165, %s164, 15
      %s167 = smul.addr %s166, 7
      %s168 = smul.addr %s167, 4
      %s169 = scalar_lea.vmem %s0, %s168
      %s170 = smul.u32 8, %s14
      %s171 = smul.u32 8, %s14
      %p172 = scmp.lt.s32.totalorder %s171, 15
      %s173 = scalar_select %p172, %s171, 15
      %s174 = smul.addr %s173, 4
      %s175 = scalar_lea.vmem %s3, %s174
      %s176 = smul.u32 8, %s14
      %v178 = vld [vmem:[%s169] sm:$0xff]
      %v179 = vld [vmem:[%s169 + $0x8] sm:$0xff]
      %v180 = vld [vmem:[%s169 + $0x10] sm:$0xff]
      %v181 = vld [vmem:[%s169 + $0x18] sm:$0xf]
      %v182 = vld [vmem:[%s169 + $0x1c] sm:$0xff]
      %v183 = vld [vmem:[%s169 + $0x24] sm:$0xff]
      %v184 = vld [vmem:[%s169 + $0x2c] sm:$0xff]
      %v185 = vld [vmem:[%s169 + $0x34] sm:$0xf]
      %v186 = vld [vmem:[%s169 + $0x38] sm:$0xff]
      %v187 = vld [vmem:[%s169 + $0x40] sm:$0xff]
      %v188 = vld [vmem:[%s169 + $0x48] sm:$0xff]
      %v189 = vld [vmem:[%s169 + $0x50] sm:$0xf]
      %v190 = vld [vmem:[%s169 + $0x54] sm:$0xff]
      %v191 = vld [vmem:[%s169 + $0x5c] sm:$0xff]
      %v192 = vld [vmem:[%s169 + $0x64] sm:$0xff]
      %v193 = vld [vmem:[%s169 + $0x6c] sm:$0xf]
      %v194 = vld [vmem:[%s169 + $0x70] sm:$0xff]
      %v195 = vld [vmem:[%s169 + $0x78] sm:$0xff]
      %v196 = vld [vmem:[%s169 + $0x80] sm:$0xff]
      %v197 = vld [vmem:[%s169 + $0x88] sm:$0xf]
      %v198 = vld [vmem:[%s169 + $0x8c] sm:$0xff]
      %v199 = vld [vmem:[%s169 + $0x94] sm:$0xff]
      %v200 = vld [vmem:[%s169 + $0x9c] sm:$0xff]
      %v201 = vld [vmem:[%s169 + $0xa4] sm:$0xf]
      %v202 = vld [vmem:[%s169 + $0xa8] sm:$0xff]
      %v203 = vld [vmem:[%s169 + $0xb0] sm:$0xff]
      %v204 = vld [vmem:[%s169 + $0xb8] sm:$0xff]
      %v205 = vld [vmem:[%s169 + $0xc0] sm:$0xf]
      %v206 = vld [vmem:[%s169 + $0xc4] sm:$0xff]
      %v207 = vld [vmem:[%s169 + $0xcc] sm:$0xff]
      %v208 = vld [vmem:[%s169 + $0xd4] sm:$0xff]
      %v209 = vld [vmem:[%s169 + $0xdc] sm:$0xf]
      %v210 = vld [vmem:[%s1] sm:$0xf]
      %v211 = vld [vmem:[%s1 + $0x4] sm:$0xf]
      %v212 = vld [vmem:[%s1 + $0x8] sm:$0xf]
      %v213 = vld [vmem:[%s1 + $0xc] sm:$0xf]
      %v214 = vld [vmem:[%s1 + $0x10] sm:$0xf]
      %v215 = vld [vmem:[%s1 + $0x14] sm:$0xf]
      %v216 = vld [vmem:[%s1 + $0x18] sm:$0xf]
      %v217 = vld [vmem:[%s1 + $0x1c] sm:$0xf]
      %v218 = vld [vmem:[%s1 + $0x20] sm:$0xf]
      %v219 = vld [vmem:[%s1 + $0x24] sm:$0xf]
      %v220 = vld [vmem:[%s1 + $0x28] sm:$0xf]
      %v221 = vld [vmem:[%s1 + $0x2c] sm:$0xf]
      %v222 = vld [vmem:[%s1 + $0x30] sm:$0xf]
      %v223 = vld [vmem:[%s1 + $0x34] sm:$0xf]
      %v224 = vld [vmem:[%s1 + $0x38] sm:$0xf]
      %v225 = vld [vmem:[%s1 + $0x3c] sm:$0xf]
      %v226 = vld [vmem:[%s1 + $0x40] sm:$0xf]
      %v227 = vld [vmem:[%s1 + $0x44] sm:$0xf]
      %v228 = vld [vmem:[%s1 + $0x48] sm:$0xf]
      %v229 = vld [vmem:[%s1 + $0x4c] sm:$0xf]
      %v230 = vld [vmem:[%s1 + $0x50] sm:$0xf]
      %v231 = vld [vmem:[%s1 + $0x54] sm:$0xf]
      %v232 = vld [vmem:[%s1 + $0x58] sm:$0xf]
      %v233 = vld [vmem:[%s1 + $0x5c] sm:$0xf]
      %v234 = vld [vmem:[%s1 + $0x60] sm:$0xf]
      %v235 = vld [vmem:[%s1 + $0x64] sm:$0xf]
      %v236 = vld [vmem:[%s1 + $0x68] sm:$0xf]
      %v237 = vld [vmem:[%s1 + $0x6c] sm:$0xf]
      %v238 = vld [vmem:[%s1 + $0x70] sm:$0xf]
      %v239 = vld [vmem:[%s1 + $0x74] sm:$0xf]
      %v240 = vld [vmem:[%s1 + $0x78] sm:$0xf]
      %v241 = vld [vmem:[%s1 + $0x7c] sm:$0xf]
      %v242 = vld [vmem:[%s1 + $0x80] sm:$0xf]
      %v243 = vld [vmem:[%s1 + $0x84] sm:$0xf]
      %v244 = vld [vmem:[%s1 + $0x88] sm:$0xf]
      %v245 = vld [vmem:[%s1 + $0x8c] sm:$0xf]
      %v246 = vld [vmem:[%s1 + $0x90] sm:$0xf]
      %v247 = vld [vmem:[%s1 + $0x94] sm:$0xf]
      %v248 = vld [vmem:[%s1 + $0x98] sm:$0xf]
      %v249 = vld [vmem:[%s1 + $0x9c] sm:$0xf]
      %v250 = vld [vmem:[%s1 + $0xa0] sm:$0xf]
      %v251 = vld [vmem:[%s1 + $0xa4] sm:$0xf]
      %v252 = vld [vmem:[%s1 + $0xa8] sm:$0xf]
      %v253 = vld [vmem:[%s1 + $0xac] sm:$0xf]
      %v254 = vld [vmem:[%s1 + $0xb0] sm:$0xf]
      %v255 = vld [vmem:[%s1 + $0xb4] sm:$0xf]
      %v256 = vld [vmem:[%s1 + $0xb8] sm:$0xf]
      %v257 = vld [vmem:[%s1 + $0xbc] sm:$0xf]
      %v258 = vld [vmem:[%s1 + $0xc0] sm:$0xf]
      %v259 = vld [vmem:[%s1 + $0xc4] sm:$0xf]
      %v260 = vld [vmem:[%s1 + $0xc8] sm:$0xf]
      %v261 = vld [vmem:[%s1 + $0xcc] sm:$0xf]
      %v262 = vld [vmem:[%s1 + $0xd0] sm:$0xf]
      %v263 = vld [vmem:[%s1 + $0xd4] sm:$0xf]
      %v264 = vld [vmem:[%s1 + $0xd8] sm:$0xf]
      %v265 = vld [vmem:[%s1 + $0xdc] sm:$0xf]
      %v266 = vld [vmem:[%s1 + $0xe0] sm:$0xf]
      %v267 = vld [vmem:[%s1 + $0xe4] sm:$0xf]
      %v268 = vld [vmem:[%s1 + $0xe8] sm:$0xf]
      %v269 = vld [vmem:[%s1 + $0xec] sm:$0xf]
      %v270 = vld [vmem:[%s1 + $0xf0] sm:$0xf]
      %v271 = vld [vmem:[%s1 + $0xf4] sm:$0xf]
      %v272 = vld [vmem:[%s1 + $0xf8] sm:$0xf]
      %v273 = vld [vmem:[%s1 + $0xfc] sm:$0xf]
      %v274 = vld [vmem:[%s1 + $0x100] sm:$0xf]
      %v275 = vld [vmem:[%s1 + $0x104] sm:$0xf]
      %v276 = vld [vmem:[%s1 + $0x108] sm:$0xf]
      %v277 = vld [vmem:[%s1 + $0x10c] sm:$0xf]
      %v278 = vld [vmem:[%s1 + $0x110] sm:$0xf]
      %v279 = vld [vmem:[%s1 + $0x114] sm:$0xf]
      %v280 = vld [vmem:[%s1 + $0x118] sm:$0xf]
      %v281 = vld [vmem:[%s1 + $0x11c] sm:$0xf]
      %v282 = vld [vmem:[%s1 + $0x120] sm:$0xf]
      %v283 = vld [vmem:[%s1 + $0x124] sm:$0xf]
      %v284 = vld [vmem:[%s1 + $0x128] sm:$0xf]
      %v285 = vld [vmem:[%s1 + $0x12c] sm:$0xf]
      %v286 = vld [vmem:[%s1 + $0x130] sm:$0xf]
      %v287 = vld [vmem:[%s1 + $0x134] sm:$0xf]
      %v288 = vld [vmem:[%s1 + $0x138] sm:$0xf]
      %v289 = vld [vmem:[%s1 + $0x13c] sm:$0xf]
      %v290 = vld [vmem:[%s1 + $0x140] sm:$0xf]
      %v291 = vld [vmem:[%s1 + $0x144] sm:$0xf]
      %v292 = vld [vmem:[%s1 + $0x148] sm:$0xf]
      %v293 = vld [vmem:[%s1 + $0x14c] sm:$0xf]
      %v294 = vld [vmem:[%s1 + $0x150] sm:$0xf]
      %v295 = vld [vmem:[%s1 + $0x154] sm:$0xf]
      %v296 = vld [vmem:[%s1 + $0x158] sm:$0xf]
      %v297 = vld [vmem:[%s1 + $0x15c] sm:$0xf]
      %v298 = vld [vmem:[%s1 + $0x160] sm:$0xf]
      %v299 = vld [vmem:[%s1 + $0x164] sm:$0xf]
      %v300 = vld [vmem:[%s1 + $0x168] sm:$0xf]
      %v301 = vld [vmem:[%s1 + $0x16c] sm:$0xf]
      %v302 = vld [vmem:[%s1 + $0x170] sm:$0xf]
      %v303 = vld [vmem:[%s1 + $0x174] sm:$0xf]
      %v304 = vld [vmem:[%s1 + $0x178] sm:$0xf]
      %v305 = vld [vmem:[%s1 + $0x17c] sm:$0xf]
      %v306 = vld [vmem:[%s1 + $0x180] sm:$0xf]
      %v307 = vld [vmem:[%s1 + $0x184] sm:$0xf]
      %v308 = vld [vmem:[%s1 + $0x188] sm:$0xf]
      %v309 = vld [vmem:[%s1 + $0x18c] sm:$0xf]
      %v310 = vld [vmem:[%s2] sm:$0x1]
      %v312 = vlaneseq
      %v313 = vshrl.u32 %v312, 7
      %v314 = vsub.s32 0, %v313
      %v315 = vrot.slane %v310, %v314
      %v349 = vunpack.c.l.b16 %v178
      %v350 = vunpack.c.h.b16 %v178
      %v351 = vunpack.c.l.b16 %v179
      %v352 = vunpack.c.h.b16 %v179
      %v353 = vunpack.c.l.b16 %v180
      %v354 = vunpack.c.h.b16 %v180
      %v355 = vunpack.c.l.b16 %v181
      %v356 = vunpack.c.l.b16 %v182
      %v357 = vunpack.c.h.b16 %v182
      %v358 = vunpack.c.l.b16 %v183
      %v359 = vunpack.c.h.b16 %v183
      %v360 = vunpack.c.l.b16 %v184
      %v361 = vunpack.c.h.b16 %v184
      %v362 = vunpack.c.l.b16 %v185
      %v363 = vunpack.c.l.b16 %v186
      %v364 = vunpack.c.h.b16 %v186
      %v365 = vunpack.c.l.b16 %v187
      %v366 = vunpack.c.h.b16 %v187
      %v367 = vunpack.c.l.b16 %v188
      %v368 = vunpack.c.h.b16 %v188
      %v369 = vunpack.c.l.b16 %v189
      %v370 = vunpack.c.l.b16 %v190
      %v371 = vunpack.c.h.b16 %v190
      %v372 = vunpack.c.l.b16 %v191
      %v373 = vunpack.c.h.b16 %v191
      %v374 = vunpack.c.l.b16 %v192
      %v375 = vunpack.c.h.b16 %v192
      %v376 = vunpack.c.l.b16 %v193
      %v377 = vunpack.c.l.b16 %v194
      %v378 = vunpack.c.h.b16 %v194
      %v379 = vunpack.c.l.b16 %v195
      %v380 = vunpack.c.h.b16 %v195
      %v381 = vunpack.c.l.b16 %v196
      %v382 = vunpack.c.h.b16 %v196
      %v383 = vunpack.c.l.b16 %v197
      %v384 = vunpack.c.l.b16 %v198
      %v385 = vunpack.c.h.b16 %v198
      %v386 = vunpack.c.l.b16 %v199
      %v387 = vunpack.c.h.b16 %v199
      %v388 = vunpack.c.l.b16 %v200
      %v389 = vunpack.c.h.b16 %v200
      %v390 = vunpack.c.l.b16 %v201
      %v391 = vunpack.c.l.b16 %v202
      %v392 = vunpack.c.h.b16 %v202
      %v393 = vunpack.c.l.b16 %v203
      %v394 = vunpack.c.h.b16 %v203
      %v395 = vunpack.c.l.b16 %v204
      %v396 = vunpack.c.h.b16 %v204
      %v397 = vunpack.c.l.b16 %v205
      %v398 = vunpack.c.l.b16 %v206
      %v399 = vunpack.c.h.b16 %v206
      %v400 = vunpack.c.l.b16 %v207
      %v401 = vunpack.c.h.b16 %v207
      %v402 = vunpack.c.l.b16 %v208
      %v403 = vunpack.c.h.b16 %v208
      %v404 = vunpack.c.l.b16 %v209
      %v405 = vpack.c.b16 %v356, %v349
      %v406 = vpack.c.b16 %v357, %v350
      %v407 = vpack.c.b16 %v358, %v351
      %v408 = vpack.c.b16 %v359, %v352
      %v409 = vpack.c.b16 %v360, %v353
      %v410 = vpack.c.b16 %v361, %v354
      %v411 = vpack.c.b16 %v362, %v355
      %v412 = vpack.c.b16 %v370, %v363
      %v413 = vpack.c.b16 %v371, %v364
      %v414 = vpack.c.b16 %v372, %v365
      %v415 = vpack.c.b16 %v373, %v366
      %v416 = vpack.c.b16 %v374, %v367
      %v417 = vpack.c.b16 %v375, %v368
      %v418 = vpack.c.b16 %v376, %v369
      %v419 = vpack.c.b16 %v384, %v377
      %v420 = vpack.c.b16 %v385, %v378
      %v421 = vpack.c.b16 %v386, %v379
      %v422 = vpack.c.b16 %v387, %v380
      %v423 = vpack.c.b16 %v388, %v381
      %v424 = vpack.c.b16 %v389, %v382
      %v425 = vpack.c.b16 %v390, %v383
      %v426 = vpack.c.b16 %v398, %v391
      %v427 = vpack.c.b16 %v399, %v392
      %v428 = vpack.c.b16 %v400, %v393
      %v429 = vpack.c.b16 %v401, %v394
      %v430 = vpack.c.b16 %v402, %v395
      %v431 = vpack.c.b16 %v403, %v396
      %v432 = vpack.c.b16 %v404, %v397
      %v557 = vunpack.c.l.b16 %v210
      %v558 = vunpack.c.l.b16 %v211
      %v559 = vunpack.c.l.b16 %v212
      %v560 = vunpack.c.l.b16 %v213
      %v561 = vunpack.c.l.b16 %v214
      %v562 = vunpack.c.l.b16 %v215
      %v563 = vunpack.c.l.b16 %v216
      %v564 = vunpack.c.l.b16 %v217
      %v565 = vunpack.c.l.b16 %v218
      %v566 = vunpack.c.l.b16 %v219
      %v567 = vunpack.c.l.b16 %v220
      %v568 = vunpack.c.l.b16 %v221
      %v569 = vunpack.c.l.b16 %v222
      %v570 = vunpack.c.l.b16 %v223
      %v571 = vunpack.c.l.b16 %v224
      %v572 = vunpack.c.l.b16 %v225
      %v573 = vunpack.c.l.b16 %v226
      %v574 = vunpack.c.l.b16 %v227
      %v575 = vunpack.c.l.b16 %v228
      %v576 = vunpack.c.l.b16 %v229
      %v577 = vunpack.c.l.b16 %v230
      %v578 = vunpack.c.l.b16 %v231
      %v579 = vunpack.c.l.b16 %v232
      %v580 = vunpack.c.l.b16 %v233
      %v581 = vunpack.c.l.b16 %v234
      %v582 = vunpack.c.l.b16 %v235
      %v583 = vunpack.c.l.b16 %v236
      %v584 = vunpack.c.l.b16 %v237
      %v585 = vunpack.c.l.b16 %v238
      %v586 = vunpack.c.l.b16 %v239
      %v587 = vunpack.c.l.b16 %v240
      %v588 = vunpack.c.l.b16 %v241
      %v589 = vunpack.c.l.b16 %v242
      %v590 = vunpack.c.l.b16 %v243
      %v591 = vunpack.c.l.b16 %v244
      %v592 = vunpack.c.l.b16 %v245
      %v593 = vunpack.c.l.b16 %v246
      %v594 = vunpack.c.l.b16 %v247
      %v595 = vunpack.c.l.b16 %v248
      %v596 = vunpack.c.l.b16 %v249
      %v597 = vunpack.c.l.b16 %v250
      %v598 = vunpack.c.l.b16 %v251
      %v599 = vunpack.c.l.b16 %v252
      %v600 = vunpack.c.l.b16 %v253
      %v601 = vunpack.c.l.b16 %v254
      %v602 = vunpack.c.l.b16 %v255
      %v603 = vunpack.c.l.b16 %v256
      %v604 = vunpack.c.l.b16 %v257
      %v605 = vunpack.c.l.b16 %v258
      %v606 = vunpack.c.l.b16 %v259
      %v607 = vunpack.c.l.b16 %v260
      %v608 = vunpack.c.l.b16 %v261
      %v609 = vunpack.c.l.b16 %v262
      %v610 = vunpack.c.l.b16 %v263
      %v611 = vunpack.c.l.b16 %v264
      %v612 = vunpack.c.l.b16 %v265
      %v613 = vunpack.c.l.b16 %v266
      %v614 = vunpack.c.l.b16 %v267
      %v615 = vunpack.c.l.b16 %v268
      %v616 = vunpack.c.l.b16 %v269
      %v617 = vunpack.c.l.b16 %v270
      %v618 = vunpack.c.l.b16 %v271
      %v619 = vunpack.c.l.b16 %v272
      %v620 = vunpack.c.l.b16 %v273
      %v621 = vunpack.c.l.b16 %v274
      %v622 = vunpack.c.l.b16 %v275
      %v623 = vunpack.c.l.b16 %v276
      %v624 = vunpack.c.l.b16 %v277
      %v625 = vunpack.c.l.b16 %v278
      %v626 = vunpack.c.l.b16 %v279
      %v627 = vunpack.c.l.b16 %v280
      %v628 = vunpack.c.l.b16 %v281
      %v629 = vunpack.c.l.b16 %v282
      %v630 = vunpack.c.l.b16 %v283
      %v631 = vunpack.c.l.b16 %v284
      %v632 = vunpack.c.l.b16 %v285
      %v633 = vunpack.c.l.b16 %v286
      %v634 = vunpack.c.l.b16 %v287
      %v635 = vunpack.c.l.b16 %v288
      %v636 = vunpack.c.l.b16 %v289
      %v637 = vunpack.c.l.b16 %v290
      %v638 = vunpack.c.l.b16 %v291
      %v639 = vunpack.c.l.b16 %v292
      %v640 = vunpack.c.l.b16 %v293
      %v641 = vunpack.c.l.b16 %v294
      %v642 = vunpack.c.l.b16 %v295
      %v643 = vunpack.c.l.b16 %v296
      %v644 = vunpack.c.l.b16 %v297
      %v645 = vunpack.c.l.b16 %v298
      %v646 = vunpack.c.l.b16 %v299
      %v647 = vunpack.c.l.b16 %v300
      %v648 = vunpack.c.l.b16 %v301
      %v649 = vunpack.c.l.b16 %v302
      %v650 = vunpack.c.l.b16 %v303
      %v651 = vunpack.c.l.b16 %v304
      %v652 = vunpack.c.l.b16 %v305
      %v653 = vunpack.c.l.b16 %v306
      %v654 = vunpack.c.l.b16 %v307
      %v655 = vunpack.c.l.b16 %v308
      %v656 = vunpack.c.l.b16 %v309
      %v657 = vpack.c.b16 %v558, %v557
      %v658 = vpack.c.b16 %v560, %v559
      %v659 = vpack.c.b16 %v562, %v561
      %v660 = vpack.c.b16 %v564, %v563
      %v661 = vpack.c.b16 %v566, %v565
      %v662 = vpack.c.b16 %v568, %v567
      %v663 = vpack.c.b16 %v570, %v569
      %v664 = vpack.c.b16 %v572, %v571
      %v665 = vpack.c.b16 %v574, %v573
      %v666 = vpack.c.b16 %v576, %v575
      %v667 = vpack.c.b16 %v578, %v577
      %v668 = vpack.c.b16 %v580, %v579
      %v669 = vpack.c.b16 %v582, %v581
      %v670 = vpack.c.b16 %v584, %v583
      %v671 = vpack.c.b16 %v586, %v585
      %v672 = vpack.c.b16 %v588, %v587
      %v673 = vpack.c.b16 %v590, %v589
      %v674 = vpack.c.b16 %v592, %v591
      %v675 = vpack.c.b16 %v594, %v593
      %v676 = vpack.c.b16 %v596, %v595
      %v677 = vpack.c.b16 %v598, %v597
      %v678 = vpack.c.b16 %v600, %v599
      %v679 = vpack.c.b16 %v602, %v601
      %v680 = vpack.c.b16 %v604, %v603
      %v681 = vpack.c.b16 %v606, %v605
      %v682 = vpack.c.b16 %v608, %v607
      %v683 = vpack.c.b16 %v610, %v609
      %v684 = vpack.c.b16 %v612, %v611
      %v685 = vpack.c.b16 %v614, %v613
      %v686 = vpack.c.b16 %v616, %v615
      %v687 = vpack.c.b16 %v618, %v617
      %v688 = vpack.c.b16 %v620, %v619
      %v689 = vpack.c.b16 %v622, %v621
      %v690 = vpack.c.b16 %v624, %v623
      %v691 = vpack.c.b16 %v626, %v625
      %v692 = vpack.c.b16 %v628, %v627
      %v693 = vpack.c.b16 %v630, %v629
      %v694 = vpack.c.b16 %v632, %v631
      %v695 = vpack.c.b16 %v634, %v633
      %v696 = vpack.c.b16 %v636, %v635
      %v697 = vpack.c.b16 %v638, %v637
      %v698 = vpack.c.b16 %v640, %v639
      %v699 = vpack.c.b16 %v642, %v641
      %v700 = vpack.c.b16 %v644, %v643
      %v701 = vpack.c.b16 %v646, %v645
      %v702 = vpack.c.b16 %v648, %v647
      %v703 = vpack.c.b16 %v650, %v649
      %v704 = vpack.c.b16 %v652, %v651
      %v705 = vpack.c.b16 %v654, %v653
      %v706 = vpack.c.b16 %v656, %v655
      %vm757 = vcmask 261120
      %v759 = vsel %vm757, %v411, 0
      %v762 = vsel %vm757, %v418, 0
      %v765 = vsel %vm757, %v425, 0
      %v768 = vsel %vm757, %v432, 0
      %770 = vmatprep.subr.bf16.mxu0 0
      %771 = vmatpush1.bf16.msra.mxu0 %v657
      %772 = vmatprep.subr.bf16.mxu0 0
      %773 = vmatpush1.bf16.msra.mxu0 %v658
      %774 = vmatprep.subr.bf16.mxu0 0
      %775 = vmatpush1.bf16.msra.mxu0 %v659
      %776 = vmatprep.subr.bf16.mxu0 0
      %777 = vmatpush1.bf16.msra.mxu0 %v660
      %778 = vmatprep.subr.bf16.mxu0 0
      %779 = vmatpush1.bf16.msra.mxu0 %v661
      %780 = vmatprep.subr.bf16.mxu0 0
      %781 = vmatpush1.bf16.msra.mxu0 %v662
      %782 = vmatprep.subr.bf16.mxu0 0
      %783 = vmatpush1.bf16.msra.mxu0 %v663
      %784 = vmatprep.subr.bf16.mxu0 0
      %785 = vmatpush1.bf16.msra.mxu0 %v664
      %786 = vmatprep.subr.bf16.mxu0 0
      %787 = vmatpush1.bf16.msra.mxu0 %v665
      %788 = vmatprep.subr.bf16.mxu0 0
      %789 = vmatpush1.bf16.msra.mxu0 %v666
      %790 = vmatprep.subr.bf16.mxu0 0
      %791 = vmatpush1.bf16.msra.mxu0 %v667
      %792 = vmatprep.subr.bf16.mxu0 0
      %793 = vmatpush1.bf16.msra.mxu0 %v668
      %794 = vmatprep.subr.bf16.mxu0 0
      %795 = vmatpush1.bf16.msra.mxu0 %v669
      %796 = vmatprep.subr.bf16.mxu0 0
      %797 = vmatpush1.bf16.msra.mxu0 %v670
      %798 = vmatprep.subr.bf16.mxu0 0
      %799 = vmatpush1.bf16.msra.mxu0 %v671
      %800 = vmatprep.subr.bf16.mxu0 0
      %801 = vmatpush1.bf16.msra.mxu0 %v672
      %802 = vmatprep.mubr.bf16.mxu0 %v406
      %803 = vmatmul.mubr.bf16.gmra.mrb[0].mxu0 %v405
      %v804 = vpop.f32.mrb[0].mxu0
      %v805 = vadd.f32 %v315, %v804
      %v806 = vpop.f32.mrb[0].mxu0
      %v807 = vpop.f32.mrb[0].mxu0
      %v808 = vadd.f32 %v315, %v807
      %v809 = vpop.f32.mrb[0].mxu0
      %810 = vmatprep.mubr.bf16.mxu0 %v413
      %811 = vmatmul.mubr.bf16.gmra.mrb[0].mxu0 %v412
      %v812 = vpop.f32.mrb[0].mxu0
      %v813 = vadd.f32 %v315, %v812
      %v814 = vpop.f32.mrb[0].mxu0
      %v815 = vpop.f32.mrb[0].mxu0
      %v816 = vadd.f32 %v315, %v815
      %v817 = vpop.f32.mrb[0].mxu0
      %818 = vmatprep.mubr.bf16.mxu0 %v420
      %819 = vmatmul.mubr.bf16.gmra.mrb[0].mxu0 %v419
      %v820 = vpop.f32.mrb[0].mxu0
      %v821 = vadd.f32 %v315, %v820
      %v822 = vpop.f32.mrb[0].mxu0
      %v823 = vpop.f32.mrb[0].mxu0
      %v824 = vadd.f32 %v315, %v823
      %v825 = vpop.f32.mrb[0].mxu0
      %826 = vmatprep.mubr.bf16.mxu0 %v427
      %827 = vmatmul.mubr.bf16.gmra.mrb[0].mxu0 %v426
      %v828 = vpop.f32.mrb[0].mxu0
      %v829 = vadd.f32 %v315, %v828
      %v830 = vpop.f32.mrb[0].mxu0
      %v831 = vpop.f32.mrb[0].mxu0
      %v832 = vadd.f32 %v315, %v831
      %v833 = vpop.f32.mrb[0].mxu0
      %834 = vdwg.mxu0
      %835 = vmatprep.subr.bf16.mxu0 0
      %836 = vmatpush1.bf16.msra.mxu0 %v673
      %837 = vmatprep.subr.bf16.mxu0 0
      %838 = vmatpush1.bf16.msra.mxu0 %v674
      %839 = vmatprep.subr.bf16.mxu0 0
      %840 = vmatpush1.bf16.msra.mxu0 %v675
      %841 = vmatprep.subr.bf16.mxu0 0
      %842 = vmatpush1.bf16.msra.mxu0 %v676
      %843 = vmatprep.subr.bf16.mxu0 0
      %844 = vmatpush1.bf16.msra.mxu0 %v677
      %845 = vmatprep.subr.bf16.mxu0 0
      %846 = vmatpush1.bf16.msra.mxu0 %v678
      %847 = vmatprep.subr.bf16.mxu0 0
      %848 = vmatpush1.bf16.msra.mxu0 %v679
      %849 = vmatprep.subr.bf16.mxu0 0
      %850 = vmatpush1.bf16.msra.mxu0 %v680
      %851 = vmatprep.subr.bf16.mxu0 0
      %852 = vmatpush1.bf16.msra.mxu0 %v681
      %853 = vmatprep.subr.bf16.mxu0 0
      %854 = vmatpush1.bf16.msra.mxu0 %v682
      %855 = vmatprep.subr.bf16.mxu0 0
      %856 = vmatpush1.bf16.msra.mxu0 %v683
      %857 = vmatprep.subr.bf16.mxu0 0
      %858 = vmatpush1.bf16.msra.mxu0 %v684
      %859 = vmatprep.subr.bf16.mxu0 0
      %860 = vmatpush1.bf16.msra.mxu0 %v685
      %861 = vmatprep.subr.bf16.mxu0 0
      %862 = vmatpush1.bf16.msra.mxu0 %v686
      %863 = vmatprep.subr.bf16.mxu0 0
      %864 = vmatpush1.bf16.msra.mxu0 %v687
      %865 = vmatprep.subr.bf16.mxu0 0
      %866 = vmatpush1.bf16.msra.mxu0 %v688
      %867 = vmatprep.mubr.bf16.mxu0 %v408
      %868 = vmatmul.mubr.bf16.gmra.mrb[0].mxu0 %v407
      %v869 = vpop.f32.mrb[0].mxu0
      %v870 = vadd.f32 %v805, %v869
      %v871 = vpop.f32.mrb[0].mxu0
      %v872 = vpop.f32.mrb[0].mxu0
      %v873 = vadd.f32 %v808, %v872
      %v874 = vpop.f32.mrb[0].mxu0
      %875 = vmatprep.mubr.bf16.mxu0 %v415
      %876 = vmatmul.mubr.bf16.gmra.mrb[0].mxu0 %v414
      %v877 = vpop.f32.mrb[0].mxu0
      %v878 = vadd.f32 %v813, %v877
      %v879 = vpop.f32.mrb[0].mxu0
      %v880 = vpop.f32.mrb[0].mxu0
      %v881 = vadd.f32 %v816, %v880
      %v882 = vpop.f32.mrb[0].mxu0
      %883 = vmatprep.mubr.bf16.mxu0 %v422
      %884 = vmatmul.mubr.bf16.gmra.mrb[0].mxu0 %v421
      %v885 = vpop.f32.mrb[0].mxu0
      %v886 = vadd.f32 %v821, %v885
      %v887 = vpop.f32.mrb[0].mxu0
      %v888 = vpop.f32.mrb[0].mxu0
      %v889 = vadd.f32 %v824, %v888
      %v890 = vpop.f32.mrb[0].mxu0
      %891 = vmatprep.mubr.bf16.mxu0 %v429
      %892 = vmatmul.mubr.bf16.gmra.mrb[0].mxu0 %v428
      %v893 = vpop.f32.mrb[0].mxu0
      %v894 = vadd.f32 %v829, %v893
      %v895 = vpop.f32.mrb[0].mxu0
      %v896 = vpop.f32.mrb[0].mxu0
      %v897 = vadd.f32 %v832, %v896
      %v898 = vpop.f32.mrb[0].mxu0
      %899 = vdwg.mxu0
      %900 = vmatprep.subr.bf16.mxu0 0
      %901 = vmatpush1.bf16.msra.mxu0 %v689
      %902 = vmatprep.subr.bf16.mxu0 0
      %903 = vmatpush1.bf16.msra.mxu0 %v690
      %904 = vmatprep.subr.bf16.mxu0 0
      %905 = vmatpush1.bf16.msra.mxu0 %v691
      %906 = vmatprep.subr.bf16.mxu0 0
      %907 = vmatpush1.bf16.msra.mxu0 %v692
      %908 = vmatprep.subr.bf16.mxu0 0
      %909 = vmatpush1.bf16.msra.mxu0 %v693
      %910 = vmatprep.subr.bf16.mxu0 0
      %911 = vmatpush1.bf16.msra.mxu0 %v694
      %912 = vmatprep.subr.bf16.mxu0 0
      %913 = vmatpush1.bf16.msra.mxu0 %v695
      %914 = vmatprep.subr.bf16.mxu0 0
      %915 = vmatpush1.bf16.msra.mxu0 %v696
      %916 = vmatprep.subr.bf16.mxu0 0
      %917 = vmatpush1.bf16.msra.mxu0 %v697
      %918 = vmatprep.subr.bf16.mxu0 0
      %919 = vmatpush1.bf16.msra.mxu0 %v698
      %920 = vmatprep.subr.bf16.mxu0 0
      %921 = vmatpush1.bf16.msra.mxu0 %v699
      %922 = vmatprep.subr.bf16.mxu0 0
      %923 = vmatpush1.bf16.msra.mxu0 %v700
      %924 = vmatprep.subr.bf16.mxu0 0
      %925 = vmatpush1.bf16.msra.mxu0 %v701
      %926 = vmatprep.subr.bf16.mxu0 0
      %927 = vmatpush1.bf16.msra.mxu0 %v702
      %928 = vmatprep.subr.bf16.mxu0 0
      %929 = vmatpush1.bf16.msra.mxu0 %v703
      %930 = vmatprep.subr.bf16.mxu0 0
      %931 = vmatpush1.bf16.msra.mxu0 %v704
      %932 = vmatprep.mubr.bf16.mxu0 %v410
      %933 = vmatmul.mubr.bf16.gmra.mrb[0].mxu0 %v409
      %v934 = vpop.f32.mrb[0].mxu0
      %v935 = vadd.f32 %v870, %v934
      %v936 = vpop.f32.mrb[0].mxu0
      %v937 = vpop.f32.mrb[0].mxu0
      %v938 = vadd.f32 %v873, %v937
      %v939 = vpop.f32.mrb[0].mxu0
      %940 = vmatprep.mubr.bf16.mxu0 %v417
      %941 = vmatmul.mubr.bf16.gmra.mrb[0].mxu0 %v416
      %v942 = vpop.f32.mrb[0].mxu0
      %v943 = vadd.f32 %v878, %v942
      %v944 = vpop.f32.mrb[0].mxu0
      %v945 = vpop.f32.mrb[0].mxu0
      %v946 = vadd.f32 %v881, %v945
      %v947 = vpop.f32.mrb[0].mxu0
      %948 = vmatprep.mubr.bf16.mxu0 %v424
      %949 = vmatmul.mubr.bf16.gmra.mrb[0].mxu0 %v423
      %v950 = vpop.f32.mrb[0].mxu0
      %v951 = vadd.f32 %v886, %v950
      %v952 = vpop.f32.mrb[0].mxu0
      %v953 = vpop.f32.mrb[0].mxu0
      %v954 = vadd.f32 %v889, %v953
      %v955 = vpop.f32.mrb[0].mxu0
      %956 = vmatprep.mubr.bf16.mxu0 %v431
      %957 = vmatmul.mubr.bf16.gmra.mrb[0].mxu0 %v430
      %v958 = vpop.f32.mrb[0].mxu0
      %v959 = vadd.f32 %v894, %v958
      %v960 = vpop.f32.mrb[0].mxu0
      %v961 = vpop.f32.mrb[0].mxu0
      %v962 = vadd.f32 %v897, %v961
      %v963 = vpop.f32.mrb[0].mxu0
      %964 = vdwg.mxu0
      %965 = vmatprep.subr.bf16.mxu0 0
      %966 = vmatpush1.bf16.msra.mxu0 %v705
      %967 = vmatprep.subr.bf16.mxu0 0
      %968 = vmatpush1.bf16.msra.mxu0 %v706
      %969 = vmatprep.subr.bf16.mxu0 0
      %970 = vmatpush1.bf16.msra.mxu0 0
      %971 = vmatprep.subr.bf16.mxu0 0
      %972 = vmatpush1.bf16.msra.mxu0 0
      %973 = vmatprep.subr.bf16.mxu0 0
      %974 = vmatpush1.bf16.msra.mxu0 0
      %975 = vmatprep.subr.bf16.mxu0 0
      %976 = vmatpush1.bf16.msra.mxu0 0
      %977 = vmatprep.subr.bf16.mxu0 0
      %978 = vmatpush1.bf16.msra.mxu0 0
      %979 = vmatprep.subr.bf16.mxu0 0
      %980 = vmatpush1.bf16.msra.mxu0 0
      %981 = vmatprep.subr.bf16.mxu0 0
      %982 = vmatpush1.bf16.msra.mxu0 0
      %983 = vmatprep.subr.bf16.mxu0 0
      %984 = vmatpush1.bf16.msra.mxu0 0
      %985 = vmatprep.subr.bf16.mxu0 0
      %986 = vmatpush1.bf16.msra.mxu0 0
      %987 = vmatprep.subr.bf16.mxu0 0
      %988 = vmatpush1.bf16.msra.mxu0 0
      %989 = vmatprep.subr.bf16.mxu0 0
      %990 = vmatpush1.bf16.msra.mxu0 0
      %991 = vmatprep.subr.bf16.mxu0 0
      %992 = vmatpush1.bf16.msra.mxu0 0
      %993 = vmatprep.subr.bf16.mxu0 0
      %994 = vmatpush1.bf16.msra.mxu0 0
      %995 = vmatprep.subr.bf16.mxu0 0
      %996 = vmatpush1.bf16.msra.mxu0 0
      %997 = vmatprep.mubr.bf16.mxu0 0
      %998 = vmatmul.mubr.bf16.gmra.mrb[0].mxu0 %v759
      %v999 = vpop.f32.mrb[0].mxu0
      %v1000 = vadd.f32 %v935, %v999
      %v1001 = vpop.f32.mrb[0].mxu0
      %v1002 = vpop.f32.mrb[0].mxu0
      %v1003 = vadd.f32 %v938, %v1002
      %v1004 = vpop.f32.mrb[0].mxu0
      %1005 = vmatprep.mubr.bf16.mxu0 0
      %1006 = vmatmul.mubr.bf16.gmra.mrb[0].mxu0 %v762
      %v1007 = vpop.f32.mrb[0].mxu0
      %v1008 = vadd.f32 %v943, %v1007
      %v1009 = vpop.f32.mrb[0].mxu0
      %v1010 = vpop.f32.mrb[0].mxu0
      %v1011 = vadd.f32 %v946, %v1010
      %v1012 = vpop.f32.mrb[0].mxu0
      %1013 = vmatprep.mubr.bf16.mxu0 0
      %1014 = vmatmul.mubr.bf16.gmra.mrb[0].mxu0 %v765
      %v1015 = vpop.f32.mrb[0].mxu0
      %v1016 = vadd.f32 %v951, %v1015
      %v1017 = vpop.f32.mrb[0].mxu0
      %v1018 = vpop.f32.mrb[0].mxu0
      %v1019 = vadd.f32 %v954, %v1018
      %v1020 = vpop.f32.mrb[0].mxu0
      %1021 = vmatprep.mubr.bf16.mxu0 0
      %1022 = vmatmul.mubr.bf16.gmra.mrb[0].mxu0 %v768
      %v1023 = vpop.f32.mrb[0].mxu0
      %v1024 = vadd.f32 %v959, %v1023
      %v1025 = vpop.f32.mrb[0].mxu0
      %v1026 = vpop.f32.mrb[0].mxu0
      %v1027 = vadd.f32 %v962, %v1026
      %v1028 = vpop.f32.mrb[0].mxu0
      %1029 = vdwg.mxu0
      %v1030 = vmax.f32 %v1000, 0.0
      %v1031 = vmax.f32 %v1003, 0.0
      %v1032 = vmax.f32 %v1008, 0.0
      %v1033 = vmax.f32 %v1011, 0.0
      %v1034 = vmax.f32 %v1016, 0.0
      %v1035 = vmax.f32 %v1019, 0.0
      %v1036 = vmax.f32 %v1024, 0.0
      %v1037 = vmax.f32 %v1027, 0.0
      %v1038 = vpack.c.bf16 %v1031, %v1030
      %v1039 = vpack.c.bf16 %v1033, %v1032
      %v1040 = vpack.c.bf16 %v1035, %v1034
      %v1041 = vpack.c.bf16 %v1037, %v1036
      %v1046 = vunpack.c.l.b16 %v1038
      %v1047 = vunpack.c.h.b16 %v1038
      %v1048 = vunpack.c.l.b16 %v1039
      %v1049 = vunpack.c.h.b16 %v1039
      %v1050 = vunpack.c.l.b16 %v1040
      %v1051 = vunpack.c.h.b16 %v1040
      %v1052 = vunpack.c.l.b16 %v1041
      %v1053 = vunpack.c.h.b16 %v1041
      %v1054 = vpack.c.b16 %v1046, %v1046
      %v1055 = vpack.c.b16 %v1047, %v1047
      %v1056 = vpack.c.b16 %v1048, %v1048
      %v1057 = vpack.c.b16 %v1049, %v1049
      %v1058 = vpack.c.b16 %v1050, %v1050
      %v1059 = vpack.c.b16 %v1051, %v1051
      %v1060 = vpack.c.b16 %v1052, %v1052
      %v1061 = vpack.c.b16 %v1053, %v1053
      %vm1070 = vcmask 519168
      %1071 = vst.msk [vmem:[%s175] sm:$0xf] %vm1070, %v1054
      %1072 = vst.msk [vmem:[%s175 + $0x4] sm:$0xf] %vm1070, %v1055
      %1073 = vst.msk [vmem:[%s175 + $0x8] sm:$0xf] %vm1070, %v1056
      %1074 = vst.msk [vmem:[%s175 + $0xc] sm:$0xf] %vm1070, %v1057
      %1075 = vst.msk [vmem:[%s175 + $0x10] sm:$0xf] %vm1070, %v1058
      %1076 = vst.msk [vmem:[%s175 + $0x14] sm:$0xf] %vm1070, %v1059
      %1077 = vst.msk [vmem:[%s175 + $0x18] sm:$0xf] %vm1070, %v1060
      %1078 = vst.msk [vmem:[%s175 + $0x1c] sm:$0xf] %vm1070, %v1061
      %s1079 = smul.u32 8, %s14
      %p1080 = scmp.lt.s32.totalorder %s1079, 15
      %s1081 = scalar_select %p1080, %s1079, 15
      %s1082 = smul.addr %s1081, 4
      %s1083 = scalar_lea.vmem %s3, %s1082
      // Predicated region
      $region33: #{net_forward.7} parent=31 // pred_check
        %p1084 = pneg %p100
      $region34: #{net_forward.7} parent=31 // pred_check_branch
        %1086 = sbr.rel (%p1084) target = $region36
      $region35: #{net_forward.7} parent=31 // pred_region
        %s1087 = smul.u32 8, %s14
      $region36: #{net_forward.7} parent=31 // pred_fallthru
        _
    $region32: #{net_forward.7} parent=5 // pred_fallthru
      _
    %p1088 = scmp.le.s32.totalorder 2, %s9
    // Predicated region
    $region37: #{net_forward.7} parent=5 // pred_check
      %p1089 = pneg %p1088
    $region38: #{net_forward.7} parent=5 // pred_check_branch
      %1091 = sbr.rel (%p1089) target = $region40
    $region39: #{net_forward.7} parent=5 // pred_region
      %s1092 = ssub.s32 %s9, 2
      // Predicated region
      $region41: #{net_forward.7} parent=39 // pred_check
        %p1093 = pneg %p106
      $region42: #{net_forward.7} parent=39 // pred_check_branch
        %1095 = sbr.rel (%p1093) target = $region44
      $region43: #{net_forward.7} parent=39 // pred_region
        %s1096 = smul.u32 8, %s15
        %p1097 = scmp.lt.s32.totalorder %s1096, 15
        %s1098 = scalar_select %p1097, %s1096, 15
        %s1099 = smul.addr %s1098, 4
        %s1100 = scalar_lea.vmem %s3, %s1099
      $region44: #{net_forward.7} parent=39 // pred_fallthru
        _
    $region40: #{net_forward.7} parent=5 // pred_fallthru
      _
  $region6: #{net_forward.7} parent=0 // loop_footer
    %s13 = sadd.s32 1, %s9
  $region7: #{net_forward.7} parent=0 // loop_footer_branch
    %8 = sbr.rel target = $region3
  $region8: #{net_forward.7} parent=0 // loop_exit
    _

// kernel: net_forward.8
$region0: #{net_forward.8}
  #allocation0 [shape = 'u32[]', space=smem, size = 0x4, offset = 0x4, fixed_abs, tag = 'smem constant byte address 0x4 - core index']
  #allocation1 [shape = 'u32[144,128]{1,0:T(1,128)}', space=vmem, size = 0x12000, scoped, tag = 'internal scratch']
  %s0 = inlined_call_operand.vmem [shape: bf16[2,4,16,64], index: 0, kind: input, shape index: {}]
  %s1 = inlined_call_operand.vmem [shape: bf16[2,16,64], index: 1, kind: output, shape index: {}]
  %s2 = sld [smem:[#allocation0]]
  $region37: #{net_forward.8} parent=0
    _
  %s4 = ssub.s32 1, %s2
  %s5 = scalar_select 0, %s4, %s2
  loop: start=0, step=1, limit=4
  $region2: #{net_forward.8} parent=0 // loop_pre_header
    _
  $region3: #{net_forward.8} parent=0 // loop_header
    %s7 = sphi 0, %s11
    %p8 = scmp.ge.s32.totalorder %s7, 4
    %s17 = sphi 0, %s19
    %s20 = sphi 0, %s17
    %s21 = sphi 0, %s20
    %s37 = sphi 0, %s21
    %s43 = sphi 0, %s45
    %s46 = sphi 0, %s43
    %s47 = sphi 0, %s46
    %s63 = sphi 0, %s47
  $region4: #{net_forward.8} parent=0 // loop_header_branch
    %10 = sbr.rel (%p8) target = $region8
  $region5: #{net_forward.8} parent=0 // loop_body
    %s12 = ssub.s32 %s7, 1
    %s13 = ssub.s32 %s7, 2
    %s14 = sadd.s32 %s7, 1
    %s15 = ssub.s32 %s7, %s14
    %p16 = scmp.eq.s32.totalorder %s15, 0
    %s18 = sadd.s32 %s17, 1
    %s19 = scalar_select %p16, %s17, %s18
    %p22 = pneg %p16
    %p23 = scmp.eq.s32.totalorder %s7, 1
    %p24 = por %p22, %p23
    %p25 = scmp.ne.s32.totalorder %s17, %s20
    %p26 = scmp.eq.s32.totalorder %s7, 0
    %p27 = por %p25, %p26
    %p28 = scmp.ne.s32.totalorder %s17, %s20
    %p29 = scmp.eq.s32.totalorder %s12, 1
    %p30 = por %p28, %p29
    %p31 = scmp.ne.s32.totalorder %s20, %s21
    %p32 = scmp.eq.s32.totalorder %s12, 0
    %p33 = por %p31, %p32
    %p34 = scmp.ne.s32.totalorder %s20, %s21
    %p35 = scmp.eq.s32.totalorder %s13, 1
    %p36 = por %p34, %p35
    %p38 = scmp.ne.s32.totalorder %s21, %s37
    %p39 = scmp.eq.s32.totalorder %s13, 0
    %p40 = por %p38, %p39
    %s41 = ssub.s32 %s7, %s14
    %p42 = scmp.eq.s32.totalorder %s41, 0
    %s44 = sadd.s32 %s43, 1
    %s45 = scalar_select %p42, %s43, %s44
    %p48 = pneg %p42
    %p49 = scmp.eq.s32.totalorder %s7, 1
    %p50 = por %p48, %p49
    %p51 = scmp.ne.s32.totalorder %s43, %s46
    %p52 = scmp.eq.s32.totalorder %s7, 0
    %p53 = por %p51, %p52
    %p54 = scmp.ne.s32.totalorder %s43, %s46
    %p55 = scmp.eq.s32.totalorder %s12, 1
    %p56 = por %p54, %p55
    %p57 = scmp.ne.s32.totalorder %s46, %s47
    %p58 = scmp.eq.s32.totalorder %s12, 0
    %p59 = por %p57, %p58
    %p60 = scmp.ne.s32.totalorder %s46, %s47
    %p61 = scmp.eq.s32.totalorder %s13, 1
    %p62 = por %p60, %p61
    %p64 = scmp.ne.s32.totalorder %s47, %s63
    %p65 = scmp.eq.s32.totalorder %s13, 0
    %p66 = por %p64, %p65
    %p67 = scmp.le.s32.totalorder 1, %s7
    %p68 = scmp.lt.s32.totalorder %s7, 3
    %p69 = pnand %p67, %p68
    %p70 = pneg %p69
    // Predicated region
    $region9: #{net_forward.8} parent=5 // pred_check
      _
    $region10: #{net_forward.8} parent=5 // pred_check_branch
      %72 = sbr.rel (%p69) target = $region12
    $region11: #{net_forward.8} parent=5 // pred_region
      %s73 = ssub.s32 %s7, 1
    $region12: #{net_forward.8} parent=5 // pred_fallthru
      _
    %p74 = scmp.lt.s32.totalorder %s7, 2
    // Predicated region
    $region13: #{net_forward.8} parent=5 // pred_check
      %p75 = pneg %p74
    $region14: #{net_forward.8} parent=5 // pred_check_branch
      %77 = sbr.rel (%p75) target = $region16
    $region15: #{net_forward.8} parent=5 // pred_region
      // Predicated region
      $region17: #{net_forward.8} parent=15 // pred_check
        %p78 = pneg %p27
      $region18: #{net_forward.8} parent=15 // pred_check_branch
        %80 = sbr.rel (%p78) target = $region20
      $region19: #{net_forward.8} parent=15 // pred_region
        %p81 = scmp.lt.s32.totalorder %s7, 1
        %s82 = scalar_select %p81, %s7, 1
        %s83 = smul.addr %s82, 8
        %s84 = smul.addr %s83, 4
        %s85 = scalar_lea.vmem %s0, %s84
      $region20: #{net_forward.8} parent=15 // pred_fallthru
        _
    $region16: #{net_forward.8} parent=5 // pred_fallthru
      _
    %p86 = scmp.le.s32.totalorder 1, %s7
    %p87 = scmp.lt.s32.totalorder %s7, 3
    %p88 = pnand %p86, %p87
    %p89 = pneg %p88
    // Predicated region
    $region21: #{net_forward.8} parent=5 // pred_check
      _
    $region22: #{net_forward.8} parent=5 // pred_check_branch
      %91 = sbr.rel (%p88) target = $region24
    $region23: #{net_forward.8} parent=5 // pred_region
      %s92 = ssub.s32 %s7, 1
      %p93 = scmp.lt.s32.totalorder %s12, 1
      %s94 = scalar_select %p93, %s12, 1
      %s95 = smul.addr %s94, 8
      %s96 = smul.addr %s95, 4
      %s97 = scalar_lea.vmem %s0, %s96
      %p98 = pneg %p33
      %p99 = pneg %p30
      %p100 = pneg %p59
      %p101 = pneg %p56
      %p102 = scmp.lt.s32.totalorder %s12, 1
      %s103 = scalar_select %p102, %s12, 1
      %s104 = smul.addr %s103, 2
      %s105 = smul.addr %s104, 4
      %s106 = scalar_lea.vmem %s1, %s105
      %p107 = scmp.lt.s32.totalorder %s12, 1
      %s108 = scalar_select %p107, %s12, 1
      %s109 = smul.addr %s108, 8
      %s110 = smul.addr %s109, 4
      %s111 = scalar_lea.vmem %s0, %s110
      %p112 = scmp.lt.s32.totalorder %s12, 1
      %s113 = scalar_select %p112, %s12, 1
      %s114 = smul.addr %s113, 2
      %s115 = smul.addr %s114, 4
      %s116 = scalar_lea.vmem %s1, %s115
      %v117 = vld [vmem:[%s111] sm:$0xf]
      %v118 = vld [vmem:[%s111 + $0x4] sm:$0xf]
      %s119 = scalar_lea.vmem %s111, 8
      %v120 = vld [vmem:[%s119] sm:$0xf]
      %v121 = vld [vmem:[%s119 + $0x4] sm:$0xf]
      %v122 = vmax.bf16 %v117, %v120
      %v123 = vmax.bf16 %v118, %v121
      %s124 = scalar_lea.vmem %s111, 16
      %v125 = vld [vmem:[%s124] sm:$0xf]
      %v126 = vld [vmem:[%s124 + $0x4] sm:$0xf]
      %s127 = scalar_lea.vmem %s111, 24
      %v128 = vld [vmem:[%s127] sm:$0xf]
      %v129 = vld [vmem:[%s127 + $0x4] sm:$0xf]
      %v130 = vmax.bf16 %v125, %v128
      %v131 = vmax.bf16 %v126, %v129
      %v132 = vmax.bf16 %v122, %v130
      %v133 = vmax.bf16 %v123, %v131
      %vm134 = vcmask 519168
      %135 = vst.msk [vmem:[%s116] sm:$0xf] %vm134, %v132
      %136 = vst.msk [vmem:[%s116 + $0x4] sm:$0xf] %vm134, %v133
      %p137 = scmp.lt.s32.totalorder %s12, 1
      %s138 = scalar_select %p137, %s12, 1
      %s139 = smul.addr %s138, 2
      %s140 = smul.addr %s139, 4
      %s141 = scalar_lea.vmem %s1, %s140
      // Predicated region
      $region25: #{net_forward.8} parent=23 // pred_check
        %p142 = pneg %p56
      $region26: #{net_forward.8} parent=23 // pred_check_branch
        %144 = sbr.rel (%p142) target = $region28
      $region27: #{net_forward.8} parent=23 // pred_region
        _
      $region28: #{net_forward.8} parent=23 // pred_fallthru
        _
    $region24: #{net_forward.8} parent=5 // pred_fallthru
      _
    %p145 = scmp.le.s32.totalorder 2, %s7
    // Predicated region
    $region29: #{net_forward.8} parent=5 // pred_check
      %p146 = pneg %p145
    $region30: #{net_forward.8} parent=5 // pred_check_branch
      %148 = sbr.rel (%p146) target = $region32
    $region31: #{net_forward.8} parent=5 // pred_region
      %s149 = ssub.s32 %s7, 2
      // Predicated region
      $region33: #{net_forward.8} parent=31 // pred_check
        %p150 = pneg %p62
      $region34: #{net_forward.8} parent=31 // pred_check_branch
        %152 = sbr.rel (%p150) target = $region36
      $region35: #{net_forward.8} parent=31 // pred_region
        %p153 = scmp.lt.s32.totalorder %s13, 1
        %s154 = scalar_select %p153, %s13, 1
        %s155 = smul.addr %s154, 2
        %s156 = smul.addr %s155, 4
        %s157 = scalar_lea.vmem %s1, %s156
      $region36: #{net_forward.8} parent=31 // pred_fallthru
        _
    $region32: #{net_forward.8} parent=5 // pred_fallthru
      _
  $region6: #{net_forward.8} parent=0 // loop_footer
    %s11 = sadd.s32 1, %s7
  $region7: #{net_forward.8} parent=0 // loop_footer_branch
    %6 = sbr.rel target = $region3
  $region8: #{net_forward.8} parent=0 // loop_exit
    _

// kernel: net_forward.9
$region0: #{net_forward.9}
  #allocation0 [shape = 'u32[]', space=smem, size = 0x4, offset = 0x4, fixed_abs, tag = 'smem constant byte address 0x4 - core index']
  #allocation1 [shape = 'u32[144,128]{1,0:T(1,128)}', space=vmem, size = 0x12000, scoped, tag = 'internal scratch']
  %s0 = inlined_call_operand.vmem [shape: bf16[16,1024], index: 0, kind: input, shape index: {}]
  %s1 = inlined_call_operand.vmem [shape: bf16[1024,512], index: 1, kind: input, shape index: {}]
  %s2 = inlined_call_operand.vmem [shape: f32[1,512], index: 2, kind: input, shape index: {}]
  %s3 = inlined_call_operand.vmem [shape: bf16[512,128], index: 3, kind: input, shape index: {}]
  %s4 = inlined_call_operand.vmem [shape: f32[1,128], index: 4, kind: input, shape index: {}]
  %s5 = inlined_call_operand.vmem [shape: f32[16,128], index: 5, kind: output, shape index: {}]
  %s6 = sld [smem:[#allocation0]]
  $region30: #{net_forward.9} parent=0
    _
  %s8 = ssub.s32 1, %s6
  %s9 = scalar_select 0, %s8, %s6
  // Predicated region
  $region2: #{net_forward.9} parent=0 // pred_check
    _
  $region3: #{net_forward.9} parent=0 // pred_check_branch
    %11 = sbr.rel (0) target = $region5
  $region4: #{net_forward.9} parent=0 // pred_region
    _
  $region5: #{net_forward.9} parent=0 // pred_fallthru
    _
  // Predicated region
  $region6: #{net_forward.9} parent=0 // pred_check
    _
  $region7: #{net_forward.9} parent=0 // pred_check_branch
    %13 = sbr.rel (0) target = $region9
  $region8: #{net_forward.9} parent=0 // pred_region
    _
  $region9: #{net_forward.9} parent=0 // pred_fallthru
    _
  // Predicated region
  $region10: #{net_forward.9} parent=0 // pred_check
    _
  $region11: #{net_forward.9} parent=0 // pred_check_branch
    %15 = sbr.rel (0) target = $region13
  $region12: #{net_forward.9} parent=0 // pred_region
    _
  $region13: #{net_forward.9} parent=0 // pred_fallthru
    _
  // Predicated region
  $region14: #{net_forward.9} parent=0 // pred_check
    _
  $region15: #{net_forward.9} parent=0 // pred_check_branch
    %17 = sbr.rel (0) target = $region17
  $region16: #{net_forward.9} parent=0 // pred_region
    _
  $region17: #{net_forward.9} parent=0 // pred_fallthru
    _
  // Predicated region
  $region18: #{net_forward.9} parent=0 // pred_check
    _
  $region19: #{net_forward.9} parent=0 // pred_check_branch
    %19 = sbr.rel (0) target = $region21
  $region20: #{net_forward.9} parent=0 // pred_region
    _
  $region21: #{net_forward.9} parent=0 // pred_fallthru
    _
  %v21 = vld [vmem:[%s0] sm:$0xff]
  %v22 = vld [vmem:[%s0 + $0x8] sm:$0xff]
  %v23 = vld [vmem:[%s0 + $0x10] sm:$0xff]
  %v24 = vld [vmem:[%s0 + $0x18] sm:$0xff]
  %v25 = vld [vmem:[%s0 + $0x20] sm:$0xff]
  %v26 = vld [vmem:[%s0 + $0x28] sm:$0xff]
  %v27 = vld [vmem:[%s0 + $0x30] sm:$0xff]
  %v28 = vld [vmem:[%s0 + $0x38] sm:$0xff]
  %v29 = vld [vmem:[%s1] sm:$0xff]
  %v30 = vld [vmem:[%s1 + $0x8] sm:$0xff]
  %v31 = vld [vmem:[%s1 + $0x10] sm:$0xff]
  %v32 = vld [vmem:[%s1 + $0x18] sm:$0xff]
  %v33 = vld [vmem:[%s1 + $0x20] sm:$0xff]
  %v34 = vld [vmem:[%s1 + $0x28] sm:$0xff]
  %v35 = vld [vmem:[%s1 + $0x30] sm:$0xff]
  %v36 = vld [vmem:[%s1 + $0x38] sm:$0xff]
  %v37 = vld [vmem:[%s1 + $0x40] sm:$0xff]
  %v38 = vld [vmem:[%s1 + $0x48] sm:$0xff]
  %v39 = vld [vmem:[%s1 + $0x50] sm:$0xff]
  %v40 = vld [vmem:[%s1 + $0x58] sm:$0xff]
  %v41 = vld [vmem:[%s1 + $0x60] sm:$0xff]
  %v42 = vld [vmem:[%s1 + $0x68] sm:$0xff]
  %v43 = vld [vmem:[%s1 + $0x70] sm:$0xff]
  %v44 = vld [vmem:[%s1 + $0x78] sm:$0xff]
  %v45 = vld [vmem:[%s1 + $0x80] sm:$0xff]
  %v46 = vld [vmem:[%s1 + $0x88] sm:$0xff]
  %v47 = vld [vmem:[%s1 + $0x90] sm:$0xff]
  %v48 = vld [vmem:[%s1 + $0x98] sm:$0xff]
  %v49 = vld [vmem:[%s1 + $0xa0] sm:$0xff]
  %v50 = vld [vmem:[%s1 + $0xa8] sm:$0xff]
  %v51 = vld [vmem:[%s1 + $0xb0] sm:$0xff]
  %v52 = vld [vmem:[%s1 + $0xb8] sm:$0xff]
  %v53 = vld [vmem:[%s1 + $0xc0] sm:$0xff]
  %v54 = vld [vmem:[%s1 + $0xc8] sm:$0xff]
  %v55 = vld [vmem:[%s1 + $0xd0] sm:$0xff]
  %v56 = vld [vmem:[%s1 + $0xd8] sm:$0xff]
  %v57 = vld [vmem:[%s1 + $0xe0] sm:$0xff]
  %v58 = vld [vmem:[%s1 + $0xe8] sm:$0xff]
  %v59 = vld [vmem:[%s1 + $0xf0] sm:$0xff]
  %v60 = vld [vmem:[%s1 + $0xf8] sm:$0xff]
  %v61 = vld [vmem:[%s1 + $0x100] sm:$0xff]
  %v62 = vld [vmem:[%s1 + $0x108] sm:$0xff]
  %v63 = vld [vmem:[%s1 + $0x110] sm:$0xff]
  %v64 = vld [vmem:[%s1 + $0x118] sm:$0xff]
  %v65 = vld [vmem:[%s1 + $0x120] sm:$0xff]
  %v66 = vld [vmem:[%s1 + $0x128] sm:$0xff]
  %v67 = vld [vmem:[%s1 + $0x130] sm:$0xff]
  %v68 = vld [vmem:[%s1 + $0x138] sm:$0xff]
  %v69 = vld [vmem:[%s1 + $0x140] sm:$0xff]
  %v70 = vld [vmem:[%s1 + $0x148] sm:$0xff]
  %v71 = vld [vmem:[%s1 + $0x150] sm:$0xff]
  %v72 = vld [vmem:[%s1 + $0x158] sm:$0xff]
  %v73 = vld [vmem:[%s1 + $0x160] sm:$0xff]
  %v74 = vld [vmem:[%s1 + $0x168] sm:$0xff]
  %v75 = vld [vmem:[%s1 + $0x170] sm:$0xff]
  %v76 = vld [vmem:[%s1 + $0x178] sm:$0xff]
  %v77 = vld [vmem:[%s1 + $0x180] sm:$0xff]
  %v78 = vld [vmem:[%s1 + $0x188] sm:$0xff]
  %v79 = vld [vmem:[%s1 + $0x190] sm:$0xff]
  %v80 = vld [vmem:[%s1 + $0x198] sm:$0xff]
  %v81 = vld [vmem:[%s1 + $0x1a0] sm:$0xff]
  %v82 = vld [vmem:[%s1 + $0x1a8] sm:$0xff]
  %v83 = vld [vmem:[%s1 + $0x1b0] sm:$0xff]
  %v84 = vld [vmem:[%s1 + $0x1b8] sm:$0xff]
  %v85 = vld [vmem:[%s1 + $0x1c0] sm:$0xff]
  %v86 = vld [vmem:[%s1 + $0x1c8] sm:$0xff]
  %v87 = vld [vmem:[%s1 + $0x1d0] sm:$0xff]
  %v88 = vld [vmem:[%s1 + $0x1d8] sm:$0xff]
  %v89 = vld [vmem:[%s1 + $0x1e0] sm:$0xff]
  %v90 = vld [vmem:[%s1 + $0x1e8] sm:$0xff]
  %v91 = vld [vmem:[%s1 + $0x1f0] sm:$0xff]
  %v92 = vld [vmem:[%s1 + $0x1f8] sm:$0xff]
  %v93 = vld [vmem:[%s1 + $0x200] sm:$0xff]
  %v94 = vld [vmem:[%s1 + $0x208] sm:$0xff]
  %v95 = vld [vmem:[%s1 + $0x210] sm:$0xff]
  %v96 = vld [vmem:[%s1 + $0x218] sm:$0xff]
  %v97 = vld [vmem:[%s1 + $0x220] sm:$0xff]
  %v98 = vld [vmem:[%s1 + $0x228] sm:$0xff]
  %v99 = vld [vmem:[%s1 + $0x230] sm:$0xff]
  %v100 = vld [vmem:[%s1 + $0x238] sm:$0xff]
  %v101 = vld [vmem:[%s1 + $0x240] sm:$0xff]
  %v102 = vld [vmem:[%s1 + $0x248] sm:$0xff]
  %v103 = vld [vmem:[%s1 + $0x250] sm:$0xff]
  %v104 = vld [vmem:[%s1 + $0x258] sm:$0xff]
  %v105 = vld [vmem:[%s1 + $0x260] sm:$0xff]
  %v106 = vld [vmem:[%s1 + $0x268] sm:$0xff]
  %v107 = vld [vmem:[%s1 + $0x270] sm:$0xff]
  %v108 = vld [vmem:[%s1 + $0x278] sm:$0xff]
  %v109 = vld [vmem:[%s1 + $0x280] sm:$0xff]
  %v110 = vld [vmem:[%s1 + $0x288] sm:$0xff]
  %v111 = vld [vmem:[%s1 + $0x290] sm:$0xff]
  %v112 = vld [vmem:[%s1 + $0x298] sm:$0xff]
  %v113 = vld [vmem:[%s1 + $0x2a0] sm:$0xff]
  %v114 = vld [vmem:[%s1 + $0x2a8] sm:$0xff]
  %v115 = vld [vmem:[%s1 + $0x2b0] sm:$0xff]
  %v116 = vld [vmem:[%s1 + $0x2b8] sm:$0xff]
  %v117 = vld [vmem:[%s1 + $0x2c0] sm:$0xff]
  %v118 = vld [vmem:[%s1 + $0x2c8] sm:$0xff]
  %v119 = vld [vmem:[%s1 + $0x2d0] sm:$0xff]
  %v120 = vld [vmem:[%s1 + $0x2d8] sm:$0xff]
  %v121 = vld [vmem:[%s1 + $0x2e0] sm:$0xff]
  %v122 = vld [vmem:[%s1 + $0x2e8] sm:$0xff]
  %v123 = vld [vmem:[%s1 + $0x2f0] sm:$0xff]
  %v124 = vld [vmem:[%s1 + $0x2f8] sm:$0xff]
  %v125 = vld [vmem:[%s1 + $0x300] sm:$0xff]
  %v126 = vld [vmem:[%s1 + $0x308] sm:$0xff]
  %v127 = vld [vmem:[%s1 + $0x310] sm:$0xff]
  %v128 = vld [vmem:[%s1 + $0x318] sm:$0xff]
  %v129 = vld [vmem:[%s1 + $0x320] sm:$0xff]
  %v130 = vld [vmem:[%s1 + $0x328] sm:$0xff]
  %v131 = vld [vmem:[%s1 + $0x330] sm:$0xff]
  %v132 = vld [vmem:[%s1 + $0x338] sm:$0xff]
  %v133 = vld [vmem:[%s1 + $0x340] sm:$0xff]
  %v134 = vld [vmem:[%s1 + $0x348] sm:$0xff]
  %v135 = vld [vmem:[%s1 + $0x350] sm:$0xff]
  %v136 = vld [vmem:[%s1 + $0x358] sm:$0xff]
  %v137 = vld [vmem:[%s1 + $0x360] sm:$0xff]
  %v138 = vld [vmem:[%s1 + $0x368] sm:$0xff]
  %v139 = vld [vmem:[%s1 + $0x370] sm:$0xff]
  %v140 = vld [vmem:[%s1 + $0x378] sm:$0xff]
  %v141 = vld [vmem:[%s1 + $0x380] sm:$0xff]
  %v142 = vld [vmem:[%s1 + $0x388] sm:$0xff]
  %v143 = vld [vmem:[%s1 + $0x390] sm:$0xff]
  %v144 = vld [vmem:[%s1 + $0x398] sm:$0xff]
  %v145 = vld [vmem:[%s1 + $0x3a0] sm:$0xff]
  %v146 = vld [vmem:[%s1 + $0x3a8] sm:$0xff]
  %v147 = vld [vmem:[%s1 + $0x3b0] sm:$0xff]
  %v148 = vld [vmem:[%s1 + $0x3b8] sm:$0xff]
  %v149 = vld [vmem:[%s1 + $0x3c0] sm:$0xff]
  %v150 = vld [vmem:[%s1 + $0x3c8] sm:$0xff]
  %v151 = vld [vmem:[%s1 + $0x3d0] sm:$0xff]
  %v152 = vld [vmem:[%s1 + $0x3d8] sm:$0xff]
  %v153 = vld [vmem:[%s1 + $0x3e0] sm:$0xff]
  %v154 = vld [vmem:[%s1 + $0x3e8] sm:$0xff]
  %v155 = vld [vmem:[%s1 + $0x3f0] sm:$0xff]
  %v156 = vld [vmem:[%s1 + $0x3f8] sm:$0xff]
  %v157 = vld [vmem:[%s1 + $0x400] sm:$0xff]
  %v158 = vld [vmem:[%s1 + $0x408] sm:$0xff]
  %v159 = vld [vmem:[%s1 + $0x410] sm:$0xff]
  %v160 = vld [vmem:[%s1 + $0x418] sm:$0xff]
  %v161 = vld [vmem:[%s1 + $0x420] sm:$0xff]
  %v162 = vld [vmem:[%s1 + $0x428] sm:$0xff]
  %v163 = vld [vmem:[%s1 + $0x430] sm:$0xff]
  %v164 = vld [vmem:[%s1 + $0x438] sm:$0xff]
  %v165 = vld [vmem:[%s1 + $0x440] sm:$0xff]
  %v166 = vld [vmem:[%s1 + $0x448] sm:$0xff]
  %v167 = vld [vmem:[%s1 + $0x450] sm:$0xff]
  %v168 = vld [vmem:[%s1 + $0x458] sm:$0xff]
  %v169 = vld [vmem:[%s1 + $0x460] sm:$0xff]
  %v170 = vld [vmem:[%s1 + $0x468] sm:$0xff]
  %v171 = vld [vmem:[%s1 + $0x470] sm:$0xff]
  %v172 = vld [vmem:[%s1 + $0x478] sm:$0xff]
  %v173 = vld [vmem:[%s1 + $0x480] sm:$0xff]
  %v174 = vld [vmem:[%s1 + $0x488] sm:$0xff]
  %v175 = vld [vmem:[%s1 + $0x490] sm:$0xff]
  %v176 = vld [vmem:[%s1 + $0x498] sm:$0xff]
  %v177 = vld [vmem:[%s1 + $0x4a0] sm:$0xff]
  %v178 = vld [vmem:[%s1 + $0x4a8] sm:$0xff]
  %v179 = vld [vmem:[%s1 + $0x4b0] sm:$0xff]
  %v180 = vld [vmem:[%s1 + $0x4b8] sm:$0xff]
  %v181 = vld [vmem:[%s1 + $0x4c0] sm:$0xff]
  %v182 = vld [vmem:[%s1 + $0x4c8] sm:$0xff]
  %v183 = vld [vmem:[%s1 + $0x4d0] sm:$0xff]
  %v184 = vld [vmem:[%s1 + $0x4d8] sm:$0xff]
  %v185 = vld [vmem:[%s1 + $0x4e0] sm:$0xff]
  %v186 = vld [vmem:[%s1 + $0x4e8] sm:$0xff]
  %v187 = vld [vmem:[%s1 + $0x4f0] sm:$0xff]
  %v188 = vld [vmem:[%s1 + $0x4f8] sm:$0xff]
  %v189 = vld [vmem:[%s1 + $0x500] sm:$0xff]
  %v190 = vld [vmem:[%s1 + $0x508] sm:$0xff]
  %v191 = vld [vmem:[%s1 + $0x510] sm:$0xff]
  %v192 = vld [vmem:[%s1 + $0x518] sm:$0xff]
  %v193 = vld [vmem:[%s1 + $0x520] sm:$0xff]
  %v194 = vld [vmem:[%s1 + $0x528] sm:$0xff]
  %v195 = vld [vmem:[%s1 + $0x530] sm:$0xff]
  %v196 = vld [vmem:[%s1 + $0x538] sm:$0xff]
  %v197 = vld [vmem:[%s1 + $0x540] sm:$0xff]
  %v198 = vld [vmem:[%s1 + $0x548] sm:$0xff]
  %v199 = vld [vmem:[%s1 + $0x550] sm:$0xff]
  %v200 = vld [vmem:[%s1 + $0x558] sm:$0xff]
  %v201 = vld [vmem:[%s1 + $0x560] sm:$0xff]
  %v202 = vld [vmem:[%s1 + $0x568] sm:$0xff]
  %v203 = vld [vmem:[%s1 + $0x570] sm:$0xff]
  %v204 = vld [vmem:[%s1 + $0x578] sm:$0xff]
  %v205 = vld [vmem:[%s1 + $0x580] sm:$0xff]
  %v206 = vld [vmem:[%s1 + $0x588] sm:$0xff]
  %v207 = vld [vmem:[%s1 + $0x590] sm:$0xff]
  %v208 = vld [vmem:[%s1 + $0x598] sm:$0xff]
  %v209 = vld [vmem:[%s1 + $0x5a0] sm:$0xff]
  %v210 = vld [vmem:[%s1 + $0x5a8] sm:$0xff]
  %v211 = vld [vmem:[%s1 + $0x5b0] sm:$0xff]
  %v212 = vld [vmem:[%s1 + $0x5b8] sm:$0xff]
  %v213 = vld [vmem:[%s1 + $0x5c0] sm:$0xff]
  %v214 = vld [vmem:[%s1 + $0x5c8] sm:$0xff]
  %v215 = vld [vmem:[%s1 + $0x5d0] sm:$0xff]
  %v216 = vld [vmem:[%s1 + $0x5d8] sm:$0xff]
  %v217 = vld [vmem:[%s1 + $0x5e0] sm:$0xff]
  %v218 = vld [vmem:[%s1 + $0x5e8] sm:$0xff]
  %v219 = vld [vmem:[%s1 + $0x5f0] sm:$0xff]
  %v220 = vld [vmem:[%s1 + $0x5f8] sm:$0xff]
  %v221 = vld [vmem:[%s1 + $0x600] sm:$0xff]
  %v222 = vld [vmem:[%s1 + $0x608] sm:$0xff]
  %v223 = vld [vmem:[%s1 + $0x610] sm:$0xff]
  %v224 = vld [vmem:[%s1 + $0x618] sm:$0xff]
  %v225 = vld [vmem:[%s1 + $0x620] sm:$0xff]
  %v226 = vld [vmem:[%s1 + $0x628] sm:$0xff]
  %v227 = vld [vmem:[%s1 + $0x630] sm:$0xff]
  %v228 = vld [vmem:[%s1 + $0x638] sm:$0xff]
  %v229 = vld [vmem:[%s1 + $0x640] sm:$0xff]
  %v230 = vld [vmem:[%s1 + $0x648] sm:$0xff]
  %v231 = vld [vmem:[%s1 + $0x650] sm:$0xff]
  %v232 = vld [vmem:[%s1 + $0x658] sm:$0xff]
  %v233 = vld [vmem:[%s1 + $0x660] sm:$0xff]
  %v234 = vld [vmem:[%s1 + $0x668] sm:$0xff]
  %v235 = vld [vmem:[%s1 + $0x670] sm:$0xff]
  %v236 = vld [vmem:[%s1 + $0x678] sm:$0xff]
  %v237 = vld [vmem:[%s1 + $0x680] sm:$0xff]
  %v238 = vld [vmem:[%s1 + $0x688] sm:$0xff]
  %v239 = vld [vmem:[%s1 + $0x690] sm:$0xff]
  %v240 = vld [vmem:[%s1 + $0x698] sm:$0xff]
  %v241 = vld [vmem:[%s1 + $0x6a0] sm:$0xff]
  %v242 = vld [vmem:[%s1 + $0x6a8] sm:$0xff]
  %v243 = vld [vmem:[%s1 + $0x6b0] sm:$0xff]
  %v244 = vld [vmem:[%s1 + $0x6b8] sm:$0xff]
  %v245 = vld [vmem:[%s1 + $0x6c0] sm:$0xff]
  %v246 = vld [vmem:[%s1 + $0x6c8] sm:$0xff]
  %v247 = vld [vmem:[%s1 + $0x6d0] sm:$0xff]
  %v248 = vld [vmem:[%s1 + $0x6d8] sm:$0xff]
  %v249 = vld [vmem:[%s1 + $0x6e0] sm:$0xff]
  %v250 = vld [vmem:[%s1 + $0x6e8] sm:$0xff]
  %v251 = vld [vmem:[%s1 + $0x6f0] sm:$0xff]
  %v252 = vld [vmem:[%s1 + $0x6f8] sm:$0xff]
  %v253 = vld [vmem:[%s1 + $0x700] sm:$0xff]
  %v254 = vld [vmem:[%s1 + $0x708] sm:$0xff]
  %v255 = vld [vmem:[%s1 + $0x710] sm:$0xff]
  %v256 = vld [vmem:[%s1 + $0x718] sm:$0xff]
  %v257 = vld [vmem:[%s1 + $0x720] sm:$0xff]
  %v258 = vld [vmem:[%s1 + $0x728] sm:$0xff]
  %v259 = vld [vmem:[%s1 + $0x730] sm:$0xff]
  %v260 = vld [vmem:[%s1 + $0x738] sm:$0xff]
  %v261 = vld [vmem:[%s1 + $0x740] sm:$0xff]
  %v262 = vld [vmem:[%s1 + $0x748] sm:$0xff]
  %v263 = vld [vmem:[%s1 + $0x750] sm:$0xff]
  %v264 = vld [vmem:[%s1 + $0x758] sm:$0xff]
  %v265 = vld [vmem:[%s1 + $0x760] sm:$0xff]
  %v266 = vld [vmem:[%s1 + $0x768] sm:$0xff]
  %v267 = vld [vmem:[%s1 + $0x770] sm:$0xff]
  %v268 = vld [vmem:[%s1 + $0x778] sm:$0xff]
  %v269 = vld [vmem:[%s1 + $0x780] sm:$0xff]
  %v270 = vld [vmem:[%s1 + $0x788] sm:$0xff]
  %v271 = vld [vmem:[%s1 + $0x790] sm:$0xff]
  %v272 = vld [vmem:[%s1 + $0x798] sm:$0xff]
  %v273 = vld [vmem:[%s1 + $0x7a0] sm:$0xff]
  %v274 = vld [vmem:[%s1 + $0x7a8] sm:$0xff]
  %v275 = vld [vmem:[%s1 + $0x7b0] sm:$0xff]
  %v276 = vld [vmem:[%s1 + $0x7b8] sm:$0xff]
  %v277 = vld [vmem:[%s1 + $0x7c0] sm:$0xff]
  %v278 = vld [vmem:[%s1 + $0x7c8] sm:$0xff]
  %v279 = vld [vmem:[%s1 + $0x7d0] sm:$0xff]
  %v280 = vld [vmem:[%s1 + $0x7d8] sm:$0xff]
  %v281 = vld [vmem:[%s1 + $0x7e0] sm:$0xff]
  %v282 = vld [vmem:[%s1 + $0x7e8] sm:$0xff]
  %v283 = vld [vmem:[%s1 + $0x7f0] sm:$0xff]
  %v284 = vld [vmem:[%s1 + $0x7f8] sm:$0xff]
  %v285 = vld [vmem:[%s2] sm:$0xf]
  %v287 = vlaneseq
  %v288 = vshrl.u32 %v287, 7
  %v289 = vsub.s32 0, %v288
  %v290 = vrot.slane %v285, %v289
  %v291 = vlaneseq
  %v292 = vshrl.u32 %v291, 7
  %v293 = vsub.s32 1, %v292
  %v294 = vrot.slane %v285, %v293
  %v295 = vlaneseq
  %v296 = vshrl.u32 %v295, 7
  %v297 = vsub.s32 2, %v296
  %v298 = vrot.slane %v285, %v297
  %v299 = vlaneseq
  %v300 = vshrl.u32 %v299, 7
  %v301 = vsub.s32 3, %v300
  %v302 = vrot.slane %v285, %v301
  %v315 = vunpack.c.l.b16 %v21
  %v316 = vunpack.c.h.b16 %v21
  %v317 = vunpack.c.l.b16 %v22
  %v318 = vunpack.c.h.b16 %v22
  %v319 = vunpack.c.l.b16 %v23
  %v320 = vunpack.c.h.b16 %v23
  %v321 = vunpack.c.l.b16 %v24
  %v322 = vunpack.c.h.b16 %v24
  %v323 = vunpack.c.l.b16 %v25
  %v324 = vunpack.c.h.b16 %v25
  %v325 = vunpack.c.l.b16 %v26
  %v326 = vunpack.c.h.b16 %v26
  %v327 = vunpack.c.l.b16 %v27
  %v328 = vunpack.c.h.b16 %v27
  %v329 = vunpack.c.l.b16 %v28
  %v330 = vunpack.c.h.b16 %v28
  %v331 = vpack.c.b16 %v323, %v315
  %v332 = vpack.c.b16 %v324, %v316
  %v333 = vpack.c.b16 %v325, %v317
  %v334 = vpack.c.b16 %v326, %v318
  %v335 = vpack.c.b16 %v327, %v319
  %v336 = vpack.c.b16 %v328, %v320
  %v337 = vpack.c.b16 %v329, %v321
  %v338 = vpack.c.b16 %v330, %v322
  %v603 = vunpack.c.l.b16 %v29
  %v604 = vunpack.c.h.b16 %v29
  %v605 = vunpack.c.l.b16 %v30
  %v606 = vunpack.c.h.b16 %v30
  %v607 = vunpack.c.l.b16 %v31
  %v608 = vunpack.c.h.b16 %v31
  %v609 = vunpack.c.l.b16 %v32
  %v610 = vunpack.c.h.b16 %v32
  %v611 = vunpack.c.l.b16 %v33
  %v612 = vunpack.c.h.b16 %v33
  %v613 = vunpack.c.l.b16 %v34
  %v614 = vunpack.c.h.b16 %v34
  %v615 = vunpack.c.l.b16 %v35
  %v616 = vunpack.c.h.b16 %v35
  %v617 = vunpack.c.l.b16 %v36
  %v618 = vunpack.c.h.b16 %v36
  %v619 = vunpack.c.l.b16 %v37
  %v620 = vunpack.c.h.b16 %v37
  %v621 = vunpack.c.l.b16 %v38
  %v622 = vunpack.c.h.b16 %v38
  %v623 = vunpack.c.l.b16 %v39
  %v624 = vunpack.c.h.b16 %v39
  %v625 = vunpack.c.l.b16 %v40
  %v626 = vunpack.c.h.b16 %v40
  %v627 = vunpack.c.l.b16 %v41
  %v628 = vunpack.c.h.b16 %v41
  %v629 = vunpack.c.l.b16 %v42
  %v630 = vunpack.c.h.b16 %v42
  %v631 = vunpack.c.l.b16 %v43
  %v632 = vunpack.c.h.b16 %v43
  %v633 = vunpack.c.l.b16 %v44
  %v634 = vunpack.c.h.b16 %v44
  %v635 = vunpack.c.l.b16 %v45
  %v636 = vunpack.c.h.b16 %v45
  %v637 = vunpack.c.l.b16 %v46
  %v638 = vunpack.c.h.b16 %v46
  %v639 = vunpack.c.l.b16 %v47
  %v640 = vunpack.c.h.b16 %v47
  %v641 = vunpack.c.l.b16 %v48
  %v642 = vunpack.c.h.b16 %v48
  %v643 = vunpack.c.l.b16 %v49
  %v644 = vunpack.c.h.b16 %v49
  %v645 = vunpack.c.l.b16 %v50
  %v646 = vunpack.c.h.b16 %v50
  %v647 = vunpack.c.l.b16 %v51
  %v648 = vunpack.c.h.b16 %v51
  %v649 = vunpack.c.l.b16 %v52
  %v650 = vunpack.c.h.b16 %v52
  %v651 = vunpack.c.l.b16 %v53
  %v652 = vunpack.c.h.b16 %v53
  %v653 = vunpack.c.l.b16 %v54
  %v654 = vunpack.c.h.b16 %v54
  %v655 = vunpack.c.l.b16 %v55
  %v656 = vunpack.c.h.b16 %v55
  %v657 = vunpack.c.l.b16 %v56
  %v658 = vunpack.c.h.b16 %v56
  %v659 = vunpack.c.l.b16 %v57
  %v660 = vunpack.c.h.b16 %v57
  %v661 = vunpack.c.l.b16 %v58
  %v662 = vunpack.c.h.b16 %v58
  %v663 = vunpack.c.l.b16 %v59
  %v664 = vunpack.c.h.b16 %v59
  %v665 = vunpack.c.l.b16 %v60
  %v666 = vunpack.c.h.b16 %v60
  %v667 = vunpack.c.l.b16 %v61
  %v668 = vunpack.c.h.b16 %v61
  %v669 = vunpack.c.l.b16 %v62
  %v670 = vunpack.c.h.b16 %v62
  %v671 = vunpack.c.l.b16 %v63
  %v672 = vunpack.c.h.b16 %v63
  %v673 = vunpack.c.l.b16 %v64
  %v674 = vunpack.c.h.b16 %v64
  %v675 = vunpack.c.l.b16 %v65
  %v676 = vunpack.c.h.b16 %v65
  %v677 = vunpack.c.l.b16 %v66
  %v678 = vunpack.c.h.b16 %v66
  %v679 = vunpack.c.l.b16 %v67
  %v680 = vunpack.c.h.b16 %v67
  %v681 = vunpack.c.l.b16 %v68
  %v682 = vunpack.c.h.b16 %v68
  %v683 = vunpack.c.l.b16 %v69
  %v684 = vunpack.c.h.b16 %v69
  %v685 = vunpack.c.l.b16 %v70
  %v686 = vunpack.c.h.b16 %v70
  %v687 = vunpack.c.l.b16 %v71
  %v688 = vunpack.c.h.b16 %v71
  %v689 = vunpack.c.l.b16 %v72
  %v690 = vunpack.c.h.b16 %v72
  %v691 = vunpack.c.l.b16 %v73
  %v692 = vunpack.c.h.b16 %v73
  %v693 = vunpack.c.l.b16 %v74
  %v694 = vunpack.c.h.b16 %v74
  %v695 = vunpack.c.l.b16 %v75
  %v696 = vunpack.c.h.b16 %v75
  %v697 = vunpack.c.l.b16 %v76
  %v698 = vunpack.c.h.b16 %v76
  %v699 = vunpack.c.l.b16 %v77
  %v700 = vunpack.c.h.b16 %v77
  %v701 = vunpack.c.l.b16 %v78
  %v702 = vunpack.c.h.b16 %v78
  %v703 = vunpack.c.l.b16 %v79
  %v704 = vunpack.c.h.b16 %v79
  %v705 = vunpack.c.l.b16 %v80
  %v706 = vunpack.c.h.b16 %v80
  %v707 = vunpack.c.l.b16 %v81
  %v708 = vunpack.c.h.b16 %v81
  %v709 = vunpack.c.l.b16 %v82
  %v710 = vunpack.c.h.b16 %v82
  %v711 = vunpack.c.l.b16 %v83
  %v712 = vunpack.c.h.b16 %v83
  %v713 = vunpack.c.l.b16 %v84
  %v714 = vunpack.c.h.b16 %v84
  %v715 = vunpack.c.l.b16 %v85
  %v716 = vunpack.c.h.b16 %v85
  %v717 = vunpack.c.l.b16 %v86
  %v718 = vunpack.c.h.b16 %v86
  %v719 = vunpack.c.l.b16 %v87
  %v720 = vunpack.c.h.b16 %v87
  %v721 = vunpack.c.l.b16 %v88
  %v722 = vunpack.c.h.b16 %v88
  %v723 = vunpack.c.l.b16 %v89
  %v724 = vunpack.c.h.b16 %v89
  %v725 = vunpack.c.l.b16 %v90
  %v726 = vunpack.c.h.b16 %v90
  %v727 = vunpack.c.l.b16 %v91
  %v728 = vunpack.c.h.b16 %v91
  %v729 = vunpack.c.l.b16 %v92
  %v730 = vunpack.c.h.b16 %v92
  %v731 = vunpack.c.l.b16 %v93
  %v732 = vunpack.c.h.b16 %v93
  %v733 = vunpack.c.l.b16 %v94
  %v734 = vunpack.c.h.b16 %v94
  %v735 = vunpack.c.l.b16 %v95
  %v736 = vunpack.c.h.b16 %v95
  %v737 = vunpack.c.l.b16 %v96
  %v738 = vunpack.c.h.b16 %v96
  %v739 = vunpack.c.l.b16 %v97
  %v740 = vunpack.c.h.b16 %v97
  %v741 = vunpack.c.l.b16 %v98
  %v742 = vunpack.c.h.b16 %v98
  %v743 = vunpack.c.l.b16 %v99
  %v744 = vunpack.c.h.b16 %v99
  %v745 = vunpack.c.l.b16 %v100
  %v746 = vunpack.c.h.b16 %v100
  %v747 = vunpack.c.l.b16 %v101
  %v748 = vunpack.c.h.b16 %v101
  %v749 = vunpack.c.l.b16 %v102
  %v750 = vunpack.c.h.b16 %v102
  %v751 = vunpack.c.l.b16 %v103
  %v752 = vunpack.c.h.b16 %v103
  %v753 = vunpack.c.l.b16 %v104
  %v754 = vunpack.c.h.b16 %v104
  %v755 = vunpack.c.l.b16 %v105
  %v756 = vunpack.c.h.b16 %v105
  %v757 = vunpack.c.l.b16 %v106
  %v758 = vunpack.c.h.b16 %v106
  %v759 = vunpack.c.l.b16 %v107
  %v760 = vunpack.c.h.b16 %v107
  %v761 = vunpack.c.l.b16 %v108
  %v762 = vunpack.c.h.b16 %v108
  %v763 = vunpack.c.l.b16 %v109
  %v764 = vunpack.c.h.b16 %v109
  %v765 = vunpack.c.l.b16 %v110
  %v766 = vunpack.c.h.b16 %v110
  %v767 = vunpack.c.l.b16 %v111
  %v768 = vunpack.c.h.b16 %v111
  %v769 = vunpack.c.l.b16 %v112
  %v770 = vunpack.c.h.b16 %v112
  %v771 = vunpack.c.l.b16 %v113
  %v772 = vunpack.c.h.b16 %v113
  %v773 = vunpack.c.l.b16 %v114
  %v774 = vunpack.c.h.b16 %v114
  %v775 = vunpack.c.l.b16 %v115
  %v776 = vunpack.c.h.b16 %v115
  %v777 = vunpack.c.l.b16 %v116
  %v778 = vunpack.c.h.b16 %v116
  %v779 = vunpack.c.l.b16 %v117
  %v780 = vunpack.c.h.b16 %v117
  %v781 = vunpack.c.l.b16 %v118
  %v782 = vunpack.c.h.b16 %v118
  %v783 = vunpack.c.l.b16 %v119
  %v784 = vunpack.c.h.b16 %v119
  %v785 = vunpack.c.l.b16 %v120
  %v786 = vunpack.c.h.b16 %v120
  %v787 = vunpack.c.l.b16 %v121
  %v788 = vunpack.c.h.b16 %v121
  %v789 = vunpack.c.l.b16 %v122
  %v790 = vunpack.c.h.b16 %v122
  %v791 = vunpack.c.l.b16 %v123
  %v792 = vunpack.c.h.b16 %v123
  %v793 = vunpack.c.l.b16 %v124
  %v794 = vunpack.c.h.b16 %v124
  %v795 = vunpack.c.l.b16 %v125
  %v796 = vunpack.c.h.b16 %v125
  %v797 = vunpack.c.l.b16 %v126
  %v798 = vunpack.c.h.b16 %v126
  %v799 = vunpack.c.l.b16 %v127
  %v800 = vunpack.c.h.b16 %v127
  %v801 = vunpack.c.l.b16 %v128
  %v802 = vunpack.c.h.b16 %v128
  %v803 = vunpack.c.l.b16 %v129
  %v804 = vunpack.c.h.b16 %v129
  %v805 = vunpack.c.l.b16 %v130
  %v806 = vunpack.c.h.b16 %v130
  %v807 = vunpack.c.l.b16 %v131
  %v808 = vunpack.c.h.b16 %v131
  %v809 = vunpack.c.l.b16 %v132
  %v810 = vunpack.c.h.b16 %v132
  %v811 = vunpack.c.l.b16 %v133
  %v812 = vunpack.c.h.b16 %v133
  %v813 = vunpack.c.l.b16 %v134
  %v814 = vunpack.c.h.b16 %v134
  %v815 = vunpack.c.l.b16 %v135
  %v816 = vunpack.c.h.b16 %v135
  %v817 = vunpack.c.l.b16 %v136
  %v818 = vunpack.c.h.b16 %v136
  %v819 = vunpack.c.l.b16 %v137
  %v820 = vunpack.c.h.b16 %v137
  %v821 = vunpack.c.l.b16 %v138
  %v822 = vunpack.c.h.b16 %v138
  %v823 = vunpack.c.l.b16 %v139
  %v824 = vunpack.c.h.b16 %v139
  %v825 = vunpack.c.l.b16 %v140
  %v826 = vunpack.c.h.b16 %v140
  %v827 = vunpack.c.l.b16 %v141
  %v828 = vunpack.c.h.b16 %v141
  %v829 = vunpack.c.l.b16 %v142
  %v830 = vunpack.c.h.b16 %v142
  %v831 = vunpack.c.l.b16 %v143
  %v832 = vunpack.c.h.b16 %v143
  %v833 = vunpack.c.l.b16 %v144
  %v834 = vunpack.c.h.b16 %v144
  %v835 = vunpack.c.l.b16 %v145
  %v836 = vunpack.c.h.b16 %v145
  %v837 = vunpack.c.l.b16 %v146
  %v838 = vunpack.c.h.b16 %v146
  %v839 = vunpack.c.l.b16 %v147
  %v840 = vunpack.c.h.b16 %v147
  %v841 = vunpack.c.l.b16 %v148
  %v842 = vunpack.c.h.b16 %v148
  %v843 = vunpack.c.l.b16 %v149
  %v844 = vunpack.c.h.b16 %v149
  %v845 = vunpack.c.l.b16 %v150
  %v846 = vunpack.c.h.b16 %v150
  %v847 = vunpack.c.l.b16 %v151
  %v848 = vunpack.c.h.b16 %v151
  %v849 = vunpack.c.l.b16 %v152
  %v850 = vunpack.c.h.b16 %v152
  %v851 = vunpack.c.l.b16 %v153
  %v852 = vunpack.c.h.b16 %v153
  %v853 = vunpack.c.l.b16 %v154
  %v854 = vunpack.c.h.b16 %v154
  %v855 = vunpack.c.l.b16 %v155
  %v856 = vunpack.c.h.b16 %v155
  %v857 = vunpack.c.l.b16 %v156
  %v858 = vunpack.c.h.b16 %v156
  %v859 = vunpack.c.l.b16 %v157
  %v860 = vunpack.c.h.b16 %v157
  %v861 = vunpack.c.l.b16 %v158
  %v862 = vunpack.c.h.b16 %v158
  %v863 = vunpack.c.l.b16 %v159
  %v864 = vunpack.c.h.b16 %v159
  %v865 = vunpack.c.l.b16 %v160
  %v866 = vunpack.c.h.b16 %v160
  %v867 = vunpack.c.l.b16 %v161
  %v868 = vunpack.c.h.b16 %v161
  %v869 = vunpack.c.l.b16 %v162
  %v870 = vunpack.c.h.b16 %v162
  %v871 = vunpack.c.l.b16 %v163
  %v872 = vunpack.c.h.b16 %v163
  %v873 = vunpack.c.l.b16 %v164
  %v874 = vunpack.c.h.b16 %v164
  %v875 = vunpack.c.l.b16 %v165
  %v876 = vunpack.c.h.b16 %v165
  %v877 = vunpack.c.l.b16 %v166
  %v878 = vunpack.c.h.b16 %v166
  %v879 = vunpack.c.l.b16 %v167
  %v880 = vunpack.c.h.b16 %v167
  %v881 = vunpack.c.l.b16 %v168
  %v882 = vunpack.c.h.b16 %v168
  %v883 = vunpack.c.l.b16 %v169
  %v884 = vunpack.c.h.b16 %v169
  %v885 = vunpack.c.l.b16 %v170
  %v886 = vunpack.c.h.b16 %v170
  %v887 = vunpack.c.l.b16 %v171
  %v888 = vunpack.c.h.b16 %v171
  %v889 = vunpack.c.l.b16 %v172
  %v890 = vunpack.c.h.b16 %v172
  %v891 = vunpack.c.l.b16 %v173
  %v892 = vunpack.c.h.b16 %v173
  %v893 = vunpack.c.l.b16 %v174
  %v894 = vunpack.c.h.b16 %v174
  %v895 = vunpack.c.l.b16 %v175
  %v896 = vunpack.c.h.b16 %v175
  %v897 = vunpack.c.l.b16 %v176
  %v898 = vunpack.c.h.b16 %v176
  %v899 = vunpack.c.l.b16 %v177
  %v900 = vunpack.c.h.b16 %v177
  %v901 = vunpack.c.l.b16 %v178
  %v902 = vunpack.c.h.b16 %v178
  %v903 = vunpack.c.l.b16 %v179
  %v904 = vunpack.c.h.b16 %v179
  %v905 = vunpack.c.l.b16 %v180
  %v906 = vunpack.c.h.b16 %v180
  %v907 = vunpack.c.l.b16 %v181
  %v908 = vunpack.c.h.b16 %v181
  %v909 = vunpack.c.l.b16 %v182
  %v910 = vunpack.c.h.b16 %v182
  %v911 = vunpack.c.l.b16 %v183
  %v912 = vunpack.c.h.b16 %v183
  %v913 = vunpack.c.l.b16 %v184
  %v914 = vunpack.c.h.b16 %v184
  %v915 = vunpack.c.l.b16 %v185
  %v916 = vunpack.c.h.b16 %v185
  %v917 = vunpack.c.l.b16 %v186
  %v918 = vunpack.c.h.b16 %v186
  %v919 = vunpack.c.l.b16 %v187
  %v920 = vunpack.c.h.b16 %v187
  %v921 = vunpack.c.l.b16 %v188
  %v922 = vunpack.c.h.b16 %v188
  %v923 = vunpack.c.l.b16 %v189
  %v924 = vunpack.c.h.b16 %v189
  %v925 = vunpack.c.l.b16 %v190
  %v926 = vunpack.c.h.b16 %v190
  %v927 = vunpack.c.l.b16 %v191
  %v928 = vunpack.c.h.b16 %v191
  %v929 = vunpack.c.l.b16 %v192
  %v930 = vunpack.c.h.b16 %v192
  %v931 = vunpack.c.l.b16 %v193
  %v932 = vunpack.c.h.b16 %v193
  %v933 = vunpack.c.l.b16 %v194
  %v934 = vunpack.c.h.b16 %v194
  %v935 = vunpack.c.l.b16 %v195
  %v936 = vunpack.c.h.b16 %v195
  %v937 = vunpack.c.l.b16 %v196
  %v938 = vunpack.c.h.b16 %v196
  %v939 = vunpack.c.l.b16 %v197
  %v940 = vunpack.c.h.b16 %v197
  %v941 = vunpack.c.l.b16 %v198
  %v942 = vunpack.c.h.b16 %v198
  %v943 = vunpack.c.l.b16 %v199
  %v944 = vunpack.c.h.b16 %v199
  %v945 = vunpack.c.l.b16 %v200
  %v946 = vunpack.c.h.b16 %v200
  %v947 = vunpack.c.l.b16 %v201
  %v948 = vunpack.c.h.b16 %v201
  %v949 = vunpack.c.l.b16 %v202
  %v950 = vunpack.c.h.b16 %v202
  %v951 = vunpack.c.l.b16 %v203
  %v952 = vunpack.c.h.b16 %v203
  %v953 = vunpack.c.l.b16 %v204
  %v954 = vunpack.c.h.b16 %v204
  %v955 = vunpack.c.l.b16 %v205
  %v956 = vunpack.c.h.b16 %v205
  %v957 = vunpack.c.l.b16 %v206
  %v958 = vunpack.c.h.b16 %v206
  %v959 = vunpack.c.l.b16 %v207
  %v960 = vunpack.c.h.b16 %v207
  %v961 = vunpack.c.l.b16 %v208
  %v962 = vunpack.c.h.b16 %v208
  %v963 = vunpack.c.l.b16 %v209
  %v964 = vunpack.c.h.b16 %v209
  %v965 = vunpack.c.l.b16 %v210
  %v966 = vunpack.c.h.b16 %v210
  %v967 = vunpack.c.l.b16 %v211
  %v968 = vunpack.c.h.b16 %v211
  %v969 = vunpack.c.l.b16 %v212
  %v970 = vunpack.c.h.b16 %v212
  %v971 = vunpack.c.l.b16 %v213
  %v972 = vunpack.c.h.b16 %v213
  %v973 = vunpack.c.l.b16 %v214
  %v974 = vunpack.c.h.b16 %v214
  %v975 = vunpack.c.l.b16 %v215
  %v976 = vunpack.c.h.b16 %v215
  %v977 = vunpack.c.l.b16 %v216
  %v978 = vunpack.c.h.b16 %v216
  %v979 = vunpack.c.l.b16 %v217
  %v980 = vunpack.c.h.b16 %v217
  %v981 = vunpack.c.l.b16 %v218
  %v982 = vunpack.c.h.b16 %v218
  %v983 = vunpack.c.l.b16 %v219
  %v984 = vunpack.c.h.b16 %v219
  %v985 = vunpack.c.l.b16 %v220
  %v986 = vunpack.c.h.b16 %v220
  %v987 = vunpack.c.l.b16 %v221
  %v988 = vunpack.c.h.b16 %v221
  %v989 = vunpack.c.l.b16 %v222
  %v990 = vunpack.c.h.b16 %v222
  %v991 = vunpack.c.l.b16 %v223
  %v992 = vunpack.c.h.b16 %v223
  %v993 = vunpack.c.l.b16 %v224
  %v994 = vunpack.c.h.b16 %v224
  %v995 = vunpack.c.l.b16 %v225
  %v996 = vunpack.c.h.b16 %v225
  %v997 = vunpack.c.l.b16 %v226
  %v998 = vunpack.c.h.b16 %v226
  %v999 = vunpack.c.l.b16 %v227
  %v1000 = vunpack.c.h.b16 %v227
  %v1001 = vunpack.c.l.b16 %v228
  %v1002 = vunpack.c.h.b16 %v228
  %v1003 = vunpack.c.l.b16 %v229
  %v1004 = vunpack.c.h.b16 %v229
  %v1005 = vunpack.c.l.b16 %v230
  %v1006 = vunpack.c.h.b16 %v230
  %v1007 = vunpack.c.l.b16 %v231
  %v1008 = vunpack.c.h.b16 %v231
  %v1009 = vunpack.c.l.b16 %v232
  %v1010 = vunpack.c.h.b16 %v232
  %v1011 = vunpack.c.l.b16 %v233
  %v1012 = vunpack.c.h.b16 %v233
  %v1013 = vunpack.c.l.b16 %v234
  %v1014 = vunpack.c.h.b16 %v234
  %v1015 = vunpack.c.l.b16 %v235
  %v1016 = vunpack.c.h.b16 %v235
  %v1017 = vunpack.c.l.b16 %v236
  %v1018 = vunpack.c.h.b16 %v236
  %v1019 = vunpack.c.l.b16 %v237
  %v1020 = vunpack.c.h.b16 %v237
  %v1021 = vunpack.c.l.b16 %v238
  %v1022 = vunpack.c.h.b16 %v238
  %v1023 = vunpack.c.l.b16 %v239
  %v1024 = vunpack.c.h.b16 %v239
  %v1025 = vunpack.c.l.b16 %v240
  %v1026 = vunpack.c.h.b16 %v240
  %v1027 = vunpack.c.l.b16 %v241
  %v1028 = vunpack.c.h.b16 %v241
  %v1029 = vunpack.c.l.b16 %v242
  %v1030 = vunpack.c.h.b16 %v242
  %v1031 = vunpack.c.l.b16 %v243
  %v1032 = vunpack.c.h.b16 %v243
  %v1033 = vunpack.c.l.b16 %v244
  %v1034 = vunpack.c.h.b16 %v244
  %v1035 = vunpack.c.l.b16 %v245
  %v1036 = vunpack.c.h.b16 %v245
  %v1037 = vunpack.c.l.b16 %v246
  %v1038 = vunpack.c.h.b16 %v246
  %v1039 = vunpack.c.l.b16 %v247
  %v1040 = vunpack.c.h.b16 %v247
  %v1041 = vunpack.c.l.b16 %v248
  %v1042 = vunpack.c.h.b16 %v248
  %v1043 = vunpack.c.l.b16 %v249
  %v1044 = vunpack.c.h.b16 %v249
  %v1045 = vunpack.c.l.b16 %v250
  %v1046 = vunpack.c.h.b16 %v250
  %v1047 = vunpack.c.l.b16 %v251
  %v1048 = vunpack.c.h.b16 %v251
  %v1049 = vunpack.c.l.b16 %v252
  %v1050 = vunpack.c.h.b16 %v252
  %v1051 = vunpack.c.l.b16 %v253
  %v1052 = vunpack.c.h.b16 %v253
  %v1053 = vunpack.c.l.b16 %v254
  %v1054 = vunpack.c.h.b16 %v254
  %v1055 = vunpack.c.l.b16 %v255
  %v1056 = vunpack.c.h.b16 %v255
  %v1057 = vunpack.c.l.b16 %v256
  %v1058 = vunpack.c.h.b16 %v256
  %v1059 = vunpack.c.l.b16 %v257
  %v1060 = vunpack.c.h.b16 %v257
  %v1061 = vunpack.c.l.b16 %v258
  %v1062 = vunpack.c.h.b16 %v258
  %v1063 = vunpack.c.l.b16 %v259
  %v1064 = vunpack.c.h.b16 %v259
  %v1065 = vunpack.c.l.b16 %v260
  %v1066 = vunpack.c.h.b16 %v260
  %v1067 = vunpack.c.l.b16 %v261
  %v1068 = vunpack.c.h.b16 %v261
  %v1069 = vunpack.c.l.b16 %v262
  %v1070 = vunpack.c.h.b16 %v262
  %v1071 = vunpack.c.l.b16 %v263
  %v1072 = vunpack.c.h.b16 %v263
  %v1073 = vunpack.c.l.b16 %v264
  %v1074 = vunpack.c.h.b16 %v264
  %v1075 = vunpack.c.l.b16 %v265
  %v1076 = vunpack.c.h.b16 %v265
  %v1077 = vunpack.c.l.b16 %v266
  %v1078 = vunpack.c.h.b16 %v266
  %v1079 = vunpack.c.l.b16 %v267
  %v1080 = vunpack.c.h.b16 %v267
  %v1081 = vunpack.c.l.b16 %v268
  %v1082 = vunpack.c.h.b16 %v268
  %v1083 = vunpack.c.l.b16 %v269
  %v1084 = vunpack.c.h.b16 %v269
  %v1085 = vunpack.c.l.b16 %v270
  %v1086 = vunpack.c.h.b16 %v270
  %v1087 = vunpack.c.l.b16 %v271
  %v1088 = vunpack.c.h.b16 %v271
  %v1089 = vunpack.c.l.b16 %v272
  %v1090 = vunpack.c.h.b16 %v272
  %v1091 = vunpack.c.l.b16 %v273
  %v1092 = vunpack.c.h.b16 %v273
  %v1093 = vunpack.c.l.b16 %v274
  %v1094 = vunpack.c.h.b16 %v274
  %v1095 = vunpack.c.l.b16 %v275
  %v1096 = vunpack.c.h.b16 %v275
  %v1097 = vunpack.c.l.b16 %v276
  %v1098 = vunpack.c.h.b16 %v276
  %v1099 = vunpack.c.l.b16 %v277
  %v1100 = vunpack.c.h.b16 %v277
  %v1101 = vunpack.c.l.b16 %v278
  %v1102 = vunpack.c.h.b16 %v278
  %v1103 = vunpack.c.l.b16 %v279
  %v1104 = vunpack.c.h.b16 %v279
  %v1105 = vunpack.c.l.b16 %v280
  %v1106 = vunpack.c.h.b16 %v280
  %v1107 = vunpack.c.l.b16 %v281
  %v1108 = vunpack.c.h.b16 %v281
  %v1109 = vunpack.c.l.b16 %v282
  %v1110 = vunpack.c.h.b16 %v282
  %v1111 = vunpack.c.l.b16 %v283
  %v1112 = vunpack.c.h.b16 %v283
  %v1113 = vunpack.c.l.b16 %v284
  %v1114 = vunpack.c.h.b16 %v284
  %v1115 = vpack.c.b16 %v607, %v603
  %v1116 = vpack.c.b16 %v608, %v604
  %v1117 = vpack.c.b16 %v609, %v605
  %v1118 = vpack.c.b16 %v610, %v606
  %v1119 = vpack.c.b16 %v615, %v611
  %v1120 = vpack.c.b16 %v616, %v612
  %v1121 = vpack.c.b16 %v617, %v613
  %v1122 = vpack.c.b16 %v618, %v614
  %v1123 = vpack.c.b16 %v623, %v619
  %v1124 = vpack.c.b16 %v624, %v620
  %v1125 = vpack.c.b16 %v625, %v621
  %v1126 = vpack.c.b16 %v626, %v622
  %v1127 = vpack.c.b16 %v631, %v627
  %v1128 = vpack.c.b16 %v632, %v628
  %v1129 = vpack.c.b16 %v633, %v629
  %v1130 = vpack.c.b16 %v634, %v630
  %v1131 = vpack.c.b16 %v639, %v635
  %v1132 = vpack.c.b16 %v640, %v636
  %v1133 = vpack.c.b16 %v641, %v637
  %v1134 = vpack.c.b16 %v642, %v638
  %v1135 = vpack.c.b16 %v647, %v643
  %v1136 = vpack.c.b16 %v648, %v644
  %v1137 = vpack.c.b16 %v649, %v645
  %v1138 = vpack.c.b16 %v650, %v646
  %v1139 = vpack.c.b16 %v655, %v651
  %v1140 = vpack.c.b16 %v656, %v652
  %v1141 = vpack.c.b16 %v657, %v653
  %v1142 = vpack.c.b16 %v658, %v654
  %v1143 = vpack.c.b16 %v663, %v659
  %v1144 = vpack.c.b16 %v664, %v660
  %v1145 = vpack.c.b16 %v665, %v661
  %v1146 = vpack.c.b16 %v666, %v662
  %v1147 = vpack.c.b16 %v671, %v667
  %v1148 = vpack.c.b16 %v672, %v668
  %v1149 = vpack.c.b16 %v673, %v669
  %v1150 = vpack.c.b16 %v674, %v670
  %v1151 = vpack.c.b16 %v679, %v675
  %v1152 = vpack.c.b16 %v680, %v676
  %v1153 = vpack.c.b16 %v681, %v677
  %v1154 = vpack.c.b16 %v682, %v678
  %v1155 = vpack.c.b16 %v687, %v683
  %v1156 = vpack.c.b16 %v688, %v684
  %v1157 = vpack.c.b16 %v689, %v685
  %v1158 = vpack.c.b16 %v690, %v686
  %v1159 = vpack.c.b16 %v695, %v691
  %v1160 = vpack.c.b16 %v696, %v692
  %v1161 = vpack.c.b16 %v697, %v693
  %v1162 = vpack.c.b16 %v698, %v694
  %v1163 = vpack.c.b16 %v703, %v699
  %v1164 = vpack.c.b16 %v704, %v700
  %v1165 = vpack.c.b16 %v705, %v701
  %v1166 = vpack.c.b16 %v706, %v702
  %v1167 = vpack.c.b16 %v711, %v707
  %v1168 = vpack.c.b16 %v712, %v708
  %v1169 = vpack.c.b16 %v713, %v709
  %v1170 = vpack.c.b16 %v714, %v710
  %v1171 = vpack.c.b16 %v719, %v715
  %v1172 = vpack.c.b16 %v720, %v716
  %v1173 = vpack.c.b16 %v721, %v717
  %v1174 = vpack.c.b16 %v722, %v718
  %v1175 = vpack.c.b16 %v727, %v723
  %v1176 = vpack.c.b16 %v728, %v724
  %v1177 = vpack.c.b16 %v729, %v725
  %v1178 = vpack.c.b16 %v730, %v726
  %v1179 = vpack.c.b16 %v735, %v731
  %v1180 = vpack.c.b16 %v736, %v732
  %v1181 = vpack.c.b16 %v737, %v733
  %v1182 = vpack.c.b16 %v738, %v734
  %v1183 = vpack.c.b16 %v743, %v739
  %v1184 = vpack.c.b16 %v744, %v740
  %v1185 = vpack.c.b16 %v745, %v741
  %v1186 = vpack.c.b16 %v746, %v742
  %v1187 = vpack.c.b16 %v751, %v747
  %v1188 = vpack.c.b16 %v752, %v748
  %v1189 = vpack.c.b16 %v753, %v749
  %v1190 = vpack.c.b16 %v754, %v750
  %v1191 = vpack.c.b16 %v759, %v755
  %v1192 = vpack.c.b16 %v760, %v756
  %v1193 = vpack.c.b16 %v761, %v757
  %v1194 = vpack.c.b16 %v762, %v758
  %v1195 = vpack.c.b16 %v767, %v763
  %v1196 = vpack.c.b16 %v768, %v764
  %v1197 = vpack.c.b16 %v769, %v765
  %v1198 = vpack.c.b16 %v770, %v766
  %v1199 = vpack.c.b16 %v775, %v771
  %v1200 = vpack.c.b16 %v776, %v772
  %v1201 = vpack.c.b16 %v777, %v773
  %v1202 = vpack.c.b16 %v778, %v774
  %v1203 = vpack.c.b16 %v783, %v779
  %v1204 = vpack.c.b16 %v784, %v780
  %v1205 = vpack.c.b16 %v785, %v781
  %v1206 = vpack.c.b16 %v786, %v782
  %v1207 = vpack.c.b16 %v791, %v787
  %v1208 = vpack.c.b16 %v792, %v788
  %v1209 = vpack.c.b16 %v793, %v789
  %v1210 = vpack.c.b16 %v794, %v790
  %v1211 = vpack.c.b16 %v799, %v795
  %v1212 = vpack.c.b16 %v800, %v796
  %v1213 = vpack.c.b16 %v801, %v797
  %v1214 = vpack.c.b16 %v802, %v798
  %v1215 = vpack.c.b16 %v807, %v803
  %v1216 = vpack.c.b16 %v808, %v804
  %v1217 = vpack.c.b16 %v809, %v805
  %v1218 = vpack.c.b16 %v810, %v806
  %v1219 = vpack.c.b16 %v815, %v811
  %v1220 = vpack.c.b16 %v816, %v812
  %v1221 = vpack.c.b16 %v817, %v813
  %v1222 = vpack.c.b16 %v818, %v814
  %v1223 = vpack.c.b16 %v823, %v819
  %v1224 = vpack.c.b16 %v824, %v820
  %v1225 = vpack.c.b16 %v825, %v821
  %v1226 = vpack.c.b16 %v826, %v822
  %v1227 = vpack.c.b16 %v831, %v827
  %v1228 = vpack.c.b16 %v832, %v828
  %v1229 = vpack.c.b16 %v833, %v829
  %v1230 = vpack.c.b16 %v834, %v830
  %v1231 = vpack.c.b16 %v839, %v835
  %v1232 = vpack.c.b16 %v840, %v836
  %v1233 = vpack.c.b16 %v841, %v837
  %v1234 = vpack.c.b16 %v842, %v838
  %v1235 = vpack.c.b16 %v847, %v843
  %v1236 = vpack.c.b16 %v848, %v844
  %v1237 = vpack.c.b16 %v849, %v845
  %v1238 = vpack.c.b16 %v850, %v846
  %v1239 = vpack.c.b16 %v855, %v851
  %v1240 = vpack.c.b16 %v856, %v852
  %v1241 = vpack.c.b16 %v857, %v853
  %v1242 = vpack.c.b16 %v858, %v854
  %v1243 = vpack.c.b16 %v863, %v859
  %v1244 = vpack.c.b16 %v864, %v860
  %v1245 = vpack.c.b16 %v865, %v861
  %v1246 = vpack.c.b16 %v866, %v862
  %v1247 = vpack.c.b16 %v871, %v867
  %v1248 = vpack.c.b16 %v872, %v868
  %v1249 = vpack.c.b16 %v873, %v869
  %v1250 = vpack.c.b16 %v874, %v870
  %v1251 = vpack.c.b16 %v879, %v875
  %v1252 = vpack.c.b16 %v880, %v876
  %v1253 = vpack.c.b16 %v881, %v877
  %v1254 = vpack.c.b16 %v882, %v878
  %v1255 = vpack.c.b16 %v887, %v883
  %v1256 = vpack.c.b16 %v888, %v884
  %v1257 = vpack.c.b16 %v889, %v885
  %v1258 = vpack.c.b16 %v890, %v886
  %v1259 = vpack.c.b16 %v895, %v891
  %v1260 = vpack.c.b16 %v896, %v892
  %v1261 = vpack.c.b16 %v897, %v893
  %v1262 = vpack.c.b16 %v898, %v894
  %v1263 = vpack.c.b16 %v903, %v899
  %v1264 = vpack.c.b16 %v904, %v900
  %v1265 = vpack.c.b16 %v905, %v901
  %v1266 = vpack.c.b16 %v906, %v902
  %v1267 = vpack.c.b16 %v911, %v907
  %v1268 = vpack.c.b16 %v912, %v908
  %v1269 = vpack.c.b16 %v913, %v909
  %v1270 = vpack.c.b16 %v914, %v910
  %v1271 = vpack.c.b16 %v919, %v915
  %v1272 = vpack.c.b16 %v920, %v916
  %v1273 = vpack.c.b16 %v921, %v917
  %v1274 = vpack.c.b16 %v922, %v918
  %v1275 = vpack.c.b16 %v927, %v923
  %v1276 = vpack.c.b16 %v928, %v924
  %v1277 = vpack.c.b16 %v929, %v925
  %v1278 = vpack.c.b16 %v930, %v926
  %v1279 = vpack.c.b16 %v935, %v931
  %v1280 = vpack.c.b16 %v936, %v932
  %v1281 = vpack.c.b16 %v937, %v933
  %v1282 = vpack.c.b16 %v938, %v934
  %v1283 = vpack.c.b16 %v943, %v939
  %v1284 = vpack.c.b16 %v944, %v940
  %v1285 = vpack.c.b16 %v945, %v941
  %v1286 = vpack.c.b16 %v946, %v942
  %v1287 = vpack.c.b16 %v951, %v947
  %v1288 = vpack.c.b16 %v952, %v948
  %v1289 = vpack.c.b16 %v953, %v949
  %v1290 = vpack.c.b16 %v954, %v950
  %v1291 = vpack.c.b16 %v959, %v955
  %v1292 = vpack.c.b16 %v960, %v956
  %v1293 = vpack.c.b16 %v961, %v957
  %v1294 = vpack.c.b16 %v962, %v958
  %v1295 = vpack.c.b16 %v967, %v963
  %v1296 = vpack.c.b16 %v968, %v964
  %v1297 = vpack.c.b16 %v969, %v965
  %v1298 = vpack.c.b16 %v970, %v966
  %v1299 = vpack.c.b16 %v975, %v971
  %v1300 = vpack.c.b16 %v976, %v972
  %v1301 = vpack.c.b16 %v977, %v973
  %v1302 = vpack.c.b16 %v978, %v974
  %v1303 = vpack.c.b16 %v983, %v979
  %v1304 = vpack.c.b16 %v984, %v980
  %v1305 = vpack.c.b16 %v985, %v981
  %v1306 = vpack.c.b16 %v986, %v982
  %v1307 = vpack.c.b16 %v991, %v987
  %v1308 = vpack.c.b16 %v992, %v988
  %v1309 = vpack.c.b16 %v993, %v989
  %v1310 = vpack.c.b16 %v994, %v990
  %v1311 = vpack.c.b16 %v999, %v995
  %v1312 = vpack.c.b16 %v1000, %v996
  %v1313 = vpack.c.b16 %v1001, %v997
  %v1314 = vpack.c.b16 %v1002, %v998
  %v1315 = vpack.c.b16 %v1007, %v1003
  %v1316 = vpack.c.b16 %v1008, %v1004
  %v1317 = vpack.c.b16 %v1009, %v1005
  %v1318 = vpack.c.b16 %v1010, %v1006
  %v1319 = vpack.c.b16 %v1015, %v1011
  %v1320 = vpack.c.b16 %v1016, %v1012
  %v1321 = vpack.c.b16 %v1017, %v1013
  %v1322 = vpack.c.b16 %v1018, %v1014
  %v1323 = vpack.c.b16 %v1023, %v1019
  %v1324 = vpack.c.b16 %v1024, %v1020
  %v1325 = vpack.c.b16 %v1025, %v1021
  %v1326 = vpack.c.b16 %v1026, %v1022
  %v1327 = vpack.c.b16 %v1031, %v1027
  %v1328 = vpack.c.b16 %v1032, %v1028
  %v1329 = vpack.c.b16 %v1033, %v1029
  %v1330 = vpack.c.b16 %v1034, %v1030
  %v1331 = vpack.c.b16 %v1039, %v1035
  %v1332 = vpack.c.b16 %v1040, %v1036
  %v1333 = vpack.c.b16 %v1041, %v1037
  %v1334 = vpack.c.b16 %v1042, %v1038
  %v1335 = vpack.c.b16 %v1047, %v1043
  %v1336 = vpack.c.b16 %v1048, %v1044
  %v1337 = vpack.c.b16 %v1049, %v1045
  %v1338 = vpack.c.b16 %v1050, %v1046
  %v1339 = vpack.c.b16 %v1055, %v1051
  %v1340 = vpack.c.b16 %v1056, %v1052
  %v1341 = vpack.c.b16 %v1057, %v1053
  %v1342 = vpack.c.b16 %v1058, %v1054
  %v1343 = vpack.c.b16 %v1063, %v1059
  %v1344 = vpack.c.b16 %v1064, %v1060
  %v1345 = vpack.c.b16 %v1065, %v1061
  %v1346 = vpack.c.b16 %v1066, %v1062
  %v1347 = vpack.c.b16 %v1071, %v1067
  %v1348 = vpack.c.b16 %v1072, %v1068
  %v1349 = vpack.c.b16 %v1073, %v1069
  %v1350 = vpack.c.b16 %v1074, %v1070
  %v1351 = vpack.c.b16 %v1079, %v1075
  %v1352 = vpack.c.b16 %v1080, %v1076
  %v1353 = vpack.c.b16 %v1081, %v1077
  %v1354 = vpack.c.b16 %v1082, %v1078
  %v1355 = vpack.c.b16 %v1087, %v1083
  %v1356 = vpack.c.b16 %v1088, %v1084
  %v1357 = vpack.c.b16 %v1089, %v1085
  %v1358 = vpack.c.b16 %v1090, %v1086
  %v1359 = vpack.c.b16 %v1095, %v1091
  %v1360 = vpack.c.b16 %v1096, %v1092
  %v1361 = vpack.c.b16 %v1097, %v1093
  %v1362 = vpack.c.b16 %v1098, %v1094
  %v1363 = vpack.c.b16 %v1103, %v1099
  %v1364 = vpack.c.b16 %v1104, %v1100
  %v1365 = vpack.c.b16 %v1105, %v1101
  %v1366 = vpack.c.b16 %v1106, %v1102
  %v1367 = vpack.c.b16 %v1111, %v1107
  %v1368 = vpack.c.b16 %v1112, %v1108
  %v1369 = vpack.c.b16 %v1113, %v1109
  %v1370 = vpack.c.b16 %v1114, %v1110
  %1627 = vmatprep.subr.bf16.mxu0 %v1116
  %1628 = vmatpush1.bf16.msra.mxu0 %v1115
  %1629 = vmatprep.subr.bf16.mxu0 %v1120
  %1630 = vmatpush1.bf16.msra.mxu0 %v1119
  %1631 = vmatprep.subr.bf16.mxu0 %v1124
  %1632 = vmatpush1.bf16.msra.mxu0 %v1123
  %1633 = vmatprep.subr.bf16.mxu0 %v1128
  %1634 = vmatpush1.bf16.msra.mxu0 %v1127
  %1635 = vmatprep.subr.bf16.mxu0 %v1132
  %1636 = vmatpush1.bf16.msra.mxu0 %v1131
  %1637 = vmatprep.subr.bf16.mxu0 %v1136
  %1638 = vmatpush1.bf16.msra.mxu0 %v1135
  %1639 = vmatprep.subr.bf16.mxu0 %v1140
  %1640 = vmatpush1.bf16.msra.mxu0 %v1139
  %1641 = vmatprep.subr.bf16.mxu0 %v1144
  %1642 = vmatpush1.bf16.msra.mxu0 %v1143
  %1643 = vmatprep.subr.bf16.mxu0 %v1148
  %1644 = vmatpush1.bf16.msra.mxu0 %v1147
  %1645 = vmatprep.subr.bf16.mxu0 %v1152
  %1646 = vmatpush1.bf16.msra.mxu0 %v1151
  %1647 = vmatprep.subr.bf16.mxu0 %v1156
  %1648 = vmatpush1.bf16.msra.mxu0 %v1155
  %1649 = vmatprep.subr.bf16.mxu0 %v1160
  %1650 = vmatpush1.bf16.msra.mxu0 %v1159
  %1651 = vmatprep.subr.bf16.mxu0 %v1164
  %1652 = vmatpush1.bf16.msra.mxu0 %v1163
  %1653 = vmatprep.subr.bf16.mxu0 %v1168
  %1654 = vmatpush1.bf16.msra.mxu0 %v1167
  %1655 = vmatprep.subr.bf16.mxu0 %v1172
  %1656 = vmatpush1.bf16.msra.mxu0 %v1171
  %1657 = vmatprep.subr.bf16.mxu0 %v1176
  %1658 = vmatpush1.bf16.msra.mxu0 %v1175
  %1659 = vmatprep.mubr.bf16.mxu0 %v332
  %1660 = vmatmul.mubr.bf16.gmra.mrb[0].mxu0 %v331
  %v1661 = vpop.f32.mrb[0].mxu0
  %v1662 = vadd.f32 %v290, %v1661
  %v1663 = vpop.f32.mrb[0].mxu0
  %v1664 = vadd.f32 %v294, %v1663
  %v1665 = vpop.f32.mrb[0].mxu0
  %v1666 = vadd.f32 %v290, %v1665
  %v1667 = vpop.f32.mrb[0].mxu0
  %v1668 = vadd.f32 %v294, %v1667
  %1669 = vdwg.mxu0
  %1670 = vmatprep.subr.bf16.mxu0 %v1180
  %1671 = vmatpush1.bf16.msra.mxu0 %v1179
  %1672 = vmatprep.subr.bf16.mxu0 %v1184
  %1673 = vmatpush1.bf16.msra.mxu0 %v1183
  %1674 = vmatprep.subr.bf16.mxu0 %v1188
  %1675 = vmatpush1.bf16.msra.mxu0 %v1187
  %1676 = vmatprep.subr.bf16.mxu0 %v1192
  %1677 = vmatpush1.bf16.msra.mxu0 %v1191
  %1678 = vmatprep.subr.bf16.mxu0 %v1196
  %1679 = vmatpush1.bf16.msra.mxu0 %v1195
  %1680 = vmatprep.subr.bf16.mxu0 %v1200
  %1681 = vmatpush1.bf16.msra.mxu0 %v1199
  %1682 = vmatprep.subr.bf16.mxu0 %v1204
  %1683 = vmatpush1.bf16.msra.mxu0 %v1203
  %1684 = vmatprep.subr.bf16.mxu0 %v1208
  %1685 = vmatpush1.bf16.msra.mxu0 %v1207
  %1686 = vmatprep.subr.bf16.mxu0 %v1212
  %1687 = vmatpush1.bf16.msra.mxu0 %v1211
  %1688 = vmatprep.subr.bf16.mxu0 %v1216
  %1689 = vmatpush1.bf16.msra.mxu0 %v1215
  %1690 = vmatprep.subr.bf16.mxu0 %v1220
  %1691 = vmatpush1.bf16.msra.mxu0 %v1219
  %1692 = vmatprep.subr.bf16.mxu0 %v1224
  %1693 = vmatpush1.bf16.msra.mxu0 %v1223
  %1694 = vmatprep.subr.bf16.mxu0 %v1228
  %1695 = vmatpush1.bf16.msra.mxu0 %v1227
  %1696 = vmatprep.subr.bf16.mxu0 %v1232
  %1697 = vmatpush1.bf16.msra.mxu0 %v1231
  %1698 = vmatprep.subr.bf16.mxu0 %v1236
  %1699 = vmatpush1.bf16.msra.mxu0 %v1235
  %1700 = vmatprep.subr.bf16.mxu0 %v1240
  %1701 = vmatpush1.bf16.msra.mxu0 %v1239
  %1702 = vmatprep.mubr.bf16.mxu0 %v334
  %1703 = vmatmul.mubr.bf16.gmra.mrb[0].mxu0 %v333
  %v1704 = vpop.f32.mrb[0].mxu0
  %v1705 = vadd.f32 %v1662, %v1704
  %v1706 = vpop.f32.mrb[0].mxu0
  %v1707 = vadd.f32 %v1664, %v1706
  %v1708 = vpop.f32.mrb[0].mxu0
  %v1709 = vadd.f32 %v1666, %v1708
  %v1710 = vpop.f32.mrb[0].mxu0
  %v1711 = vadd.f32 %v1668, %v1710
  %1712 = vdwg.mxu0
  %1713 = vmatprep.subr.bf16.mxu0 %v1244
  %1714 = vmatpush1.bf16.msra.mxu0 %v1243
  %1715 = vmatprep.subr.bf16.mxu0 %v1248
  %1716 = vmatpush1.bf16.msra.mxu0 %v1247
  %1717 = vmatprep.subr.bf16.mxu0 %v1252
  %1718 = vmatpush1.bf16.msra.mxu0 %v1251
  %1719 = vmatprep.subr.bf16.mxu0 %v1256
  %1720 = vmatpush1.bf16.msra.mxu0 %v1255
  %1721 = vmatprep.subr.bf16.mxu0 %v1260
  %1722 = vmatpush1.bf16.msra.mxu0 %v1259
  %1723 = vmatprep.subr.bf16.mxu0 %v1264
  %1724 = vmatpush1.bf16.msra.mxu0 %v1263
  %1725 = vmatprep.subr.bf16.mxu0 %v1268
  %1726 = vmatpush1.bf16.msra.mxu0 %v1267
  %1727 = vmatprep.subr.bf16.mxu0 %v1272
  %1728 = vmatpush1.bf16.msra.mxu0 %v1271
  %1729 = vmatprep.subr.bf16.mxu0 %v1276
  %1730 = vmatpush1.bf16.msra.mxu0 %v1275
  %1731 = vmatprep.subr.bf16.mxu0 %v1280
  %1732 = vmatpush1.bf16.msra.mxu0 %v1279
  %1733 = vmatprep.subr.bf16.mxu0 %v1284
  %1734 = vmatpush1.bf16.msra.mxu0 %v1283
  %1735 = vmatprep.subr.bf16.mxu0 %v1288
  %1736 = vmatpush1.bf16.msra.mxu0 %v1287
  %1737 = vmatprep.subr.bf16.mxu0 %v1292
  %1738 = vmatpush1.bf16.msra.mxu0 %v1291
  %1739 = vmatprep.subr.bf16.mxu0 %v1296
  %1740 = vmatpush1.bf16.msra.mxu0 %v1295
  %1741 = vmatprep.subr.bf16.mxu0 %v1300
  %1742 = vmatpush1.bf16.msra.mxu0 %v1299
  %1743 = vmatprep.subr.bf16.mxu0 %v1304
  %1744 = vmatpush1.bf16.msra.mxu0 %v1303
  %1745 = vmatprep.mubr.bf16.mxu0 %v336
  %1746 = vmatmul.mubr.bf16.gmra.mrb[0].mxu0 %v335
  %v1747 = vpop.f32.mrb[0].mxu0
  %v1748 = vadd.f32 %v1705, %v1747
  %v1749 = vpop.f32.mrb[0].mxu0
  %v1750 = vadd.f32 %v1707, %v1749
  %v1751 = vpop.f32.mrb[0].mxu0
  %v1752 = vadd.f32 %v1709, %v1751
  %v1753 = vpop.f32.mrb[0].mxu0
  %v1754 = vadd.f32 %v1711, %v1753
  %1755 = vdwg.mxu0
  %1756 = vmatprep.subr.bf16.mxu0 %v1308
  %1757 = vmatpush1.bf16.msra.mxu0 %v1307
  %1758 = vmatprep.subr.bf16.mxu0 %v1312
  %1759 = vmatpush1.bf16.msra.mxu0 %v1311
  %1760 = vmatprep.subr.bf16.mxu0 %v1316
  %1761 = vmatpush1.bf16.msra.mxu0 %v1315
  %1762 = vmatprep.subr.bf16.mxu0 %v1320
  %1763 = vmatpush1.bf16.msra.mxu0 %v1319
  %1764 = vmatprep.subr.bf16.mxu0 %v1324
  %1765 = vmatpush1.bf16.msra.mxu0 %v1323
  %1766 = vmatprep.subr.bf16.mxu0 %v1328
  %1767 = vmatpush1.bf16.msra.mxu0 %v1327
  %1768 = vmatprep.subr.bf16.mxu0 %v1332
  %1769 = vmatpush1.bf16.msra.mxu0 %v1331
  %1770 = vmatprep.subr.bf16.mxu0 %v1336
  %1771 = vmatpush1.bf16.msra.mxu0 %v1335
  %1772 = vmatprep.subr.bf16.mxu0 %v1340
  %1773 = vmatpush1.bf16.msra.mxu0 %v1339
  %1774 = vmatprep.subr.bf16.mxu0 %v1344
  %1775 = vmatpush1.bf16.msra.mxu0 %v1343
  %1776 = vmatprep.subr.bf16.mxu0 %v1348
  %1777 = vmatpush1.bf16.msra.mxu0 %v1347
  %1778 = vmatprep.subr.bf16.mxu0 %v1352
  %1779 = vmatpush1.bf16.msra.mxu0 %v1351
  %1780 = vmatprep.subr.bf16.mxu0 %v1356
  %1781 = vmatpush1.bf16.msra.mxu0 %v1355
  %1782 = vmatprep.subr.bf16.mxu0 %v1360
  %1783 = vmatpush1.bf16.msra.mxu0 %v1359
  %1784 = vmatprep.subr.bf16.mxu0 %v1364
  %1785 = vmatpush1.bf16.msra.mxu0 %v1363
  %1786 = vmatprep.subr.bf16.mxu0 %v1368
  %1787 = vmatpush1.bf16.msra.mxu0 %v1367
  %1788 = vmatprep.mubr.bf16.mxu0 %v338
  %1789 = vmatmul.mubr.bf16.gmra.mrb[0].mxu0 %v337
  %v1790 = vpop.f32.mrb[0].mxu0
  %v1791 = vadd.f32 %v1748, %v1790
  %v1792 = vpop.f32.mrb[0].mxu0
  %v1793 = vadd.f32 %v1750, %v1792
  %v1794 = vpop.f32.mrb[0].mxu0
  %v1795 = vadd.f32 %v1752, %v1794
  %v1796 = vpop.f32.mrb[0].mxu0
  %v1797 = vadd.f32 %v1754, %v1796
  %1798 = vdwg.mxu0
  %1799 = vmatprep.subr.bf16.mxu0 %v1118
  %1800 = vmatpush1.bf16.msra.mxu0 %v1117
  %1801 = vmatprep.subr.bf16.mxu0 %v1122
  %1802 = vmatpush1.bf16.msra.mxu0 %v1121
  %1803 = vmatprep.subr.bf16.mxu0 %v1126
  %1804 = vmatpush1.bf16.msra.mxu0 %v1125
  %1805 = vmatprep.subr.bf16.mxu0 %v1130
  %1806 = vmatpush1.bf16.msra.mxu0 %v1129
  %1807 = vmatprep.subr.bf16.mxu0 %v1134
  %1808 = vmatpush1.bf16.msra.mxu0 %v1133
  %1809 = vmatprep.subr.bf16.mxu0 %v1138
  %1810 = vmatpush1.bf16.msra.mxu0 %v1137
  %1811 = vmatprep.subr.bf16.mxu0 %v1142
  %1812 = vmatpush1.bf16.msra.mxu0 %v1141
  %1813 = vmatprep.subr.bf16.mxu0 %v1146
  %1814 = vmatpush1.bf16.msra.mxu0 %v1145
  %1815 = vmatprep.subr.bf16.mxu0 %v1150
  %1816 = vmatpush1.bf16.msra.mxu0 %v1149
  %1817 = vmatprep.subr.bf16.mxu0 %v1154
  %1818 = vmatpush1.bf16.msra.mxu0 %v1153
  %1819 = vmatprep.subr.bf16.mxu0 %v1158
  %1820 = vmatpush1.bf16.msra.mxu0 %v1157
  %1821 = vmatprep.subr.bf16.mxu0 %v1162
  %1822 = vmatpush1.bf16.msra.mxu0 %v1161
  %1823 = vmatprep.subr.bf16.mxu0 %v1166
  %1824 = vmatpush1.bf16.msra.mxu0 %v1165
  %1825 = vmatprep.subr.bf16.mxu0 %v1170
  %1826 = vmatpush1.bf16.msra.mxu0 %v1169
  %1827 = vmatprep.subr.bf16.mxu0 %v1174
  %1828 = vmatpush1.bf16.msra.mxu0 %v1173
  %1829 = vmatprep.subr.bf16.mxu0 %v1178
  %1830 = vmatpush1.bf16.msra.mxu0 %v1177
  %1831 = vmatprep.mubr.bf16.mxu0 %v332
  %1832 = vmatmul.mubr.bf16.gmra.mrb[0].mxu0 %v331
  %v1833 = vpop.f32.mrb[0].mxu0
  %v1834 = vadd.f32 %v298, %v1833
  %v1835 = vpop.f32.mrb[0].mxu0
  %v1836 = vadd.f32 %v302, %v1835
  %v1837 = vpop.f32.mrb[0].mxu0
  %v1838 = vadd.f32 %v298, %v1837
  %v1839 = vpop.f32.mrb[0].mxu0
  %v1840 = vadd.f32 %v302, %v1839
  %1841 = vdwg.mxu0
  %1842 = vmatprep.subr.bf16.mxu0 %v1182
  %1843 = vmatpush1.bf16.msra.mxu0 %v1181
  %1844 = vmatprep.subr.bf16.mxu0 %v1186
  %1845 = vmatpush1.bf16.msra.mxu0 %v1185
  %1846 = vmatprep.subr.bf16.mxu0 %v1190
  %1847 = vmatpush1.bf16.msra.mxu0 %v1189
  %1848 = vmatprep.subr.bf16.mxu0 %v1194
  %1849 = vmatpush1.bf16.msra.mxu0 %v1193
  %1850 = vmatprep.subr.bf16.mxu0 %v1198
  %1851 = vmatpush1.bf16.msra.mxu0 %v1197
  %1852 = vmatprep.subr.bf16.mxu0 %v1202
  %1853 = vmatpush1.bf16.msra.mxu0 %v1201
  %1854 = vmatprep.subr.bf16.mxu0 %v1206
  %1855 = vmatpush1.bf16.msra.mxu0 %v1205
  %1856 = vmatprep.subr.bf16.mxu0 %v1210
  %1857 = vmatpush1.bf16.msra.mxu0 %v1209
  %1858 = vmatprep.subr.bf16.mxu0 %v1214
  %1859 = vmatpush1.bf16.msra.mxu0 %v1213
  %1860 = vmatprep.subr.bf16.mxu0 %v1218
  %1861 = vmatpush1.bf16.msra.mxu0 %v1217
  %1862 = vmatprep.subr.bf16.mxu0 %v1222
  %1863 = vmatpush1.bf16.msra.mxu0 %v1221
  %1864 = vmatprep.subr.bf16.mxu0 %v1226
  %1865 = vmatpush1.bf16.msra.mxu0 %v1225
  %1866 = vmatprep.subr.bf16.mxu0 %v1230
  %1867 = vmatpush1.bf16.msra.mxu0 %v1229
  %1868 = vmatprep.subr.bf16.mxu0 %v1234
  %1869 = vmatpush1.bf16.msra.mxu0 %v1233
  %1870 = vmatprep.subr.bf16.mxu0 %v1238
  %1871 = vmatpush1.bf16.msra.mxu0 %v1237
  %1872 = vmatprep.subr.bf16.mxu0 %v1242
  %1873 = vmatpush1.bf16.msra.mxu0 %v1241
  %1874 = vmatprep.mubr.bf16.mxu0 %v334
  %1875 = vmatmul.mubr.bf16.gmra.mrb[0].mxu0 %v333
  %v1876 = vpop.f32.mrb[0].mxu0
  %v1877 = vadd.f32 %v1834, %v1876
  %v1878 = vpop.f32.mrb[0].mxu0
  %v1879 = vadd.f32 %v1836, %v1878
  %v1880 = vpop.f32.mrb[0].mxu0
  %v1881 = vadd.f32 %v1838, %v1880
  %v1882 = vpop.f32.mrb[0].mxu0
  %v1883 = vadd.f32 %v1840, %v1882
  %1884 = vdwg.mxu0
  %1885 = vmatprep.subr.bf16.mxu0 %v1246
  %1886 = vmatpush1.bf16.msra.mxu0 %v1245
  %1887 = vmatprep.subr.bf16.mxu0 %v1250
  %1888 = vmatpush1.bf16.msra.mxu0 %v1249
  %1889 = vmatprep.subr.bf16.mxu0 %v1254
  %1890 = vmatpush1.bf16.msra.mxu0 %v1253
  %1891 = vmatprep.subr.bf16.mxu0 %v1258
  %1892 = vmatpush1.bf16.msra.mxu0 %v1257
  %1893 = vmatprep.subr.bf16.mxu0 %v1262
  %1894 = vmatpush1.bf16.msra.mxu0 %v1261
  %1895 = vmatprep.subr.bf16.mxu0 %v1266
  %1896 = vmatpush1.bf16.msra.mxu0 %v1265
  %1897 = vmatprep.subr.bf16.mxu0 %v1270
  %1898 = vmatpush1.bf16.msra.mxu0 %v1269
  %1899 = vmatprep.subr.bf16.mxu0 %v1274
  %1900 = vmatpush1.bf16.msra.mxu0 %v1273
  %1901 = vmatprep.subr.bf16.mxu0 %v1278
  %1902 = vmatpush1.bf16.msra.mxu0 %v1277
  %1903 = vmatprep.subr.bf16.mxu0 %v1282
  %1904 = vmatpush1.bf16.msra.mxu0 %v1281
  %1905 = vmatprep.subr.bf16.mxu0 %v1286
  %1906 = vmatpush1.bf16.msra.mxu0 %v1285
  %1907 = vmatprep.subr.bf16.mxu0 %v1290
  %1908 = vmatpush1.bf16.msra.mxu0 %v1289
  %1909 = vmatprep.subr.bf16.mxu0 %v1294
  %1910 = vmatpush1.bf16.msra.mxu0 %v1293
  %1911 = vmatprep.subr.bf16.mxu0 %v1298
  %1912 = vmatpush1.bf16.msra.mxu0 %v1297
  %1913 = vmatprep.subr.bf16.mxu0 %v1302
  %1914 = vmatpush1.bf16.msra.mxu0 %v1301
  %1915 = vmatprep.subr.bf16.mxu0 %v1306
  %1916 = vmatpush1.bf16.msra.mxu0 %v1305
  %1917 = vmatprep.mubr.bf16.mxu0 %v336
  %1918 = vmatmul.mubr.bf16.gmra.mrb[0].mxu0 %v335
  %v1919 = vpop.f32.mrb[0].mxu0
  %v1920 = vadd.f32 %v1877, %v1919
  %v1921 = vpop.f32.mrb[0].mxu0
  %v1922 = vadd.f32 %v1879, %v1921
  %v1923 = vpop.f32.mrb[0].mxu0
  %v1924 = vadd.f32 %v1881, %v1923
  %v1925 = vpop.f32.mrb[0].mxu0
  %v1926 = vadd.f32 %v1883, %v1925
  %1927 = vdwg.mxu0
  %1928 = vmatprep.subr.bf16.mxu0 %v1310
  %1929 = vmatpush1.bf16.msra.mxu0 %v1309
  %1930 = vmatprep.subr.bf16.mxu0 %v1314
  %1931 = vmatpush1.bf16.msra.mxu0 %v1313
  %1932 = vmatprep.subr.bf16.mxu0 %v1318
  %1933 = vmatpush1.bf16.msra.mxu0 %v1317
  %1934 = vmatprep.subr.bf16.mxu0 %v1322
  %1935 = vmatpush1.bf16.msra.mxu0 %v1321
  %1936 = vmatprep.subr.bf16.mxu0 %v1326
  %1937 = vmatpush1.bf16.msra.mxu0 %v1325
  %1938 = vmatprep.subr.bf16.mxu0 %v1330
  %1939 = vmatpush1.bf16.msra.mxu0 %v1329
  %1940 = vmatprep.subr.bf16.mxu0 %v1334
  %1941 = vmatpush1.bf16.msra.mxu0 %v1333
  %1942 = vmatprep.subr.bf16.mxu0 %v1338
  %1943 = vmatpush1.bf16.msra.mxu0 %v1337
  %1944 = vmatprep.subr.bf16.mxu0 %v1342
  %1945 = vmatpush1.bf16.msra.mxu0 %v1341
  %1946 = vmatprep.subr.bf16.mxu0 %v1346
  %1947 = vmatpush1.bf16.msra.mxu0 %v1345
  %1948 = vmatprep.subr.bf16.mxu0 %v1350
  %1949 = vmatpush1.bf16.msra.mxu0 %v1349
  %1950 = vmatprep.subr.bf16.mxu0 %v1354
  %1951 = vmatpush1.bf16.msra.mxu0 %v1353
  %1952 = vmatprep.subr.bf16.mxu0 %v1358
  %1953 = vmatpush1.bf16.msra.mxu0 %v1357
  %1954 = vmatprep.subr.bf16.mxu0 %v1362
  %1955 = vmatpush1.bf16.msra.mxu0 %v1361
  %1956 = vmatprep.subr.bf16.mxu0 %v1366
  %1957 = vmatpush1.bf16.msra.mxu0 %v1365
  %1958 = vmatprep.subr.bf16.mxu0 %v1370
  %1959 = vmatpush1.bf16.msra.mxu0 %v1369
  %1960 = vmatprep.mubr.bf16.mxu0 %v338
  %1961 = vmatmul.mubr.bf16.gmra.mrb[0].mxu0 %v337
  %v1962 = vpop.f32.mrb[0].mxu0
  %v1963 = vadd.f32 %v1920, %v1962
  %v1964 = vpop.f32.mrb[0].mxu0
  %v1965 = vadd.f32 %v1922, %v1964
  %v1966 = vpop.f32.mrb[0].mxu0
  %v1967 = vadd.f32 %v1924, %v1966
  %v1968 = vpop.f32.mrb[0].mxu0
  %v1969 = vadd.f32 %v1926, %v1968
  %1970 = vdwg.mxu0
  %v1971 = vmax.f32 %v1791, 0.0
  %v1972 = vmax.f32 %v1793, 0.0
  %v1973 = vmax.f32 %v1963, 0.0
  %v1974 = vmax.f32 %v1965, 0.0
  %v1975 = vmax.f32 %v1795, 0.0
  %v1976 = vmax.f32 %v1797, 0.0
  %v1977 = vmax.f32 %v1967, 0.0
  %v1978 = vmax.f32 %v1969, 0.0
  %v1979 = vpack.c.bf16 %v1975, %v1971
  %v1980 = vpack.c.bf16 %v1976, %v1972
  %v1981 = vpack.c.bf16 %v1977, %v1973
  %v1982 = vpack.c.bf16 %v1978, %v1974
  %v1983 = vld [vmem:[%s3] sm:$0xf]
  %v1984 = vld [vmem:[%s3 + $0x4] sm:$0xf]
  %v1985 = vld [vmem:[%s3 + $0x8] sm:$0xf]
  %v1986 = vld [vmem:[%s3 + $0xc] sm:$0xf]
  %v1987 = vld [vmem:[%s3 + $0x10] sm:$0xf]
  %v1988 = vld [vmem:[%s3 + $0x14] sm:$0xf]
  %v1989 = vld [vmem:[%s3 + $0x18] sm:$0xf]
  %v1990 = vld [vmem:[%s3 + $0x1c] sm:$0xf]
  %v1991 = vld [vmem:[%s3 + $0x20] sm:$0xf]
  %v1992 = vld [vmem:[%s3 + $0x24] sm:$0xf]
  %v1993 = vld [vmem:[%s3 + $0x28] sm:$0xf]
  %v1994 = vld [vmem:[%s3 + $0x2c] sm:$0xf]
  %v1995 = vld [vmem:[%s3 + $0x30] sm:$0xf]
  %v1996 = vld [vmem:[%s3 + $0x34] sm:$0xf]
  %v1997 = vld [vmem:[%s3 + $0x38] sm:$0xf]
  %v1998 = vld [vmem:[%s3 + $0x3c] sm:$0xf]
  %v1999 = vld [vmem:[%s3 + $0x40] sm:$0xf]
  %v2000 = vld [vmem:[%s3 + $0x44] sm:$0xf]
  %v2001 = vld [vmem:[%s3 + $0x48] sm:$0xf]
  %v2002 = vld [vmem:[%s3 + $0x4c] sm:$0xf]
  %v2003 = vld [vmem:[%s3 + $0x50] sm:$0xf]
  %v2004 = vld [vmem:[%s3 + $0x54] sm:$0xf]
  %v2005 = vld [vmem:[%s3 + $0x58] sm:$0xf]
  %v2006 = vld [vmem:[%s3 + $0x5c] sm:$0xf]
  %v2007 = vld [vmem:[%s3 + $0x60] sm:$0xf]
  %v2008 = vld [vmem:[%s3 + $0x64] sm:$0xf]
  %v2009 = vld [vmem:[%s3 + $0x68] sm:$0xf]
  %v2010 = vld [vmem:[%s3 + $0x6c] sm:$0xf]
  %v2011 = vld [vmem:[%s3 + $0x70] sm:$0xf]
  %v2012 = vld [vmem:[%s3 + $0x74] sm:$0xf]
  %v2013 = vld [vmem:[%s3 + $0x78] sm:$0xf]
  %v2014 = vld [vmem:[%s3 + $0x7c] sm:$0xf]
  %v2015 = vld [vmem:[%s3 + $0x80] sm:$0xf]
  %v2016 = vld [vmem:[%s3 + $0x84] sm:$0xf]
  %v2017 = vld [vmem:[%s3 + $0x88] sm:$0xf]
  %v2018 = vld [vmem:[%s3 + $0x8c] sm:$0xf]
  %v2019 = vld [vmem:[%s3 + $0x90] sm:$0xf]
  %v2020 = vld [vmem:[%s3 + $0x94] sm:$0xf]
  %v2021 = vld [vmem:[%s3 + $0x98] sm:$0xf]
  %v2022 = vld [vmem:[%s3 + $0x9c] sm:$0xf]
  %v2023 = vld [vmem:[%s3 + $0xa0] sm:$0xf]
  %v2024 = vld [vmem:[%s3 + $0xa4] sm:$0xf]
  %v2025 = vld [vmem:[%s3 + $0xa8] sm:$0xf]
  %v2026 = vld [vmem:[%s3 + $0xac] sm:$0xf]
  %v2027 = vld [vmem:[%s3 + $0xb0] sm:$0xf]
  %v2028 = vld [vmem:[%s3 + $0xb4] sm:$0xf]
  %v2029 = vld [vmem:[%s3 + $0xb8] sm:$0xf]
  %v2030 = vld [vmem:[%s3 + $0xbc] sm:$0xf]
  %v2031 = vld [vmem:[%s3 + $0xc0] sm:$0xf]
  %v2032 = vld [vmem:[%s3 + $0xc4] sm:$0xf]
  %v2033 = vld [vmem:[%s3 + $0xc8] sm:$0xf]
  %v2034 = vld [vmem:[%s3 + $0xcc] sm:$0xf]
  %v2035 = vld [vmem:[%s3 + $0xd0] sm:$0xf]
  %v2036 = vld [vmem:[%s3 + $0xd4] sm:$0xf]
  %v2037 = vld [vmem:[%s3 + $0xd8] sm:$0xf]
  %v2038 = vld [vmem:[%s3 + $0xdc] sm:$0xf]
  %v2039 = vld [vmem:[%s3 + $0xe0] sm:$0xf]
  %v2040 = vld [vmem:[%s3 + $0xe4] sm:$0xf]
  %v2041 = vld [vmem:[%s3 + $0xe8] sm:$0xf]
  %v2042 = vld [vmem:[%s3 + $0xec] sm:$0xf]
  %v2043 = vld [vmem:[%s3 + $0xf0] sm:$0xf]
  %v2044 = vld [vmem:[%s3 + $0xf4] sm:$0xf]
  %v2045 = vld [vmem:[%s3 + $0xf8] sm:$0xf]
  %v2046 = vld [vmem:[%s3 + $0xfc] sm:$0xf]
  %v2047 = vld [vmem:[%s4] sm:$0x1]
  %v2049 = vlaneseq
  %v2050 = vshrl.u32 %v2049, 7
  %v2051 = vsub.s32 0, %v2050
  %v2052 = vrot.slane %v2047, %v2051
  %v2118 = vunpack.c.l.b16 %v1983
  %v2119 = vunpack.c.l.b16 %v1984
  %v2120 = vunpack.c.l.b16 %v1985
  %v2121 = vunpack.c.l.b16 %v1986
  %v2122 = vunpack.c.l.b16 %v1987
  %v2123 = vunpack.c.l.b16 %v1988
  %v2124 = vunpack.c.l.b16 %v1989
  %v2125 = vunpack.c.l.b16 %v1990
  %v2126 = vunpack.c.l.b16 %v1991
  %v2127 = vunpack.c.l.b16 %v1992
  %v2128 = vunpack.c.l.b16 %v1993
  %v2129 = vunpack.c.l.b16 %v1994
  %v2130 = vunpack.c.l.b16 %v1995
  %v2131 = vunpack.c.l.b16 %v1996
  %v2132 = vunpack.c.l.b16 %v1997
  %v2133 = vunpack.c.l.b16 %v1998
  %v2134 = vunpack.c.l.b16 %v1999
  %v2135 = vunpack.c.l.b16 %v2000
  %v2136 = vunpack.c.l.b16 %v2001
  %v2137 = vunpack.c.l.b16 %v2002
  %v2138 = vunpack.c.l.b16 %v2003
  %v2139 = vunpack.c.l.b16 %v2004
  %v2140 = vunpack.c.l.b16 %v2005
  %v2141 = vunpack.c.l.b16 %v2006
  %v2142 = vunpack.c.l.b16 %v2007
  %v2143 = vunpack.c.l.b16 %v2008
  %v2144 = vunpack.c.l.b16 %v2009
  %v2145 = vunpack.c.l.b16 %v2010
  %v2146 = vunpack.c.l.b16 %v2011
  %v2147 = vunpack.c.l.b16 %v2012
  %v2148 = vunpack.c.l.b16 %v2013
  %v2149 = vunpack.c.l.b16 %v2014
  %v2150 = vunpack.c.l.b16 %v2015
  %v2151 = vunpack.c.l.b16 %v2016
  %v2152 = vunpack.c.l.b16 %v2017
  %v2153 = vunpack.c.l.b16 %v2018
  %v2154 = vunpack.c.l.b16 %v2019
  %v2155 = vunpack.c.l.b16 %v2020
  %v2156 = vunpack.c.l.b16 %v2021
  %v2157 = vunpack.c.l.b16 %v2022
  %v2158 = vunpack.c.l.b16 %v2023
  %v2159 = vunpack.c.l.b16 %v2024
  %v2160 = vunpack.c.l.b16 %v2025
  %v2161 = vunpack.c.l.b16 %v2026
  %v2162 = vunpack.c.l.b16 %v2027
  %v2163 = vunpack.c.l.b16 %v2028
  %v2164 = vunpack.c.l.b16 %v2029
  %v2165 = vunpack.c.l.b16 %v2030
  %v2166 = vunpack.c.l.b16 %v2031
  %v2167 = vunpack.c.l.b16 %v2032
  %v2168 = vunpack.c.l.b16 %v2033
  %v2169 = vunpack.c.l.b16 %v2034
  %v2170 = vunpack.c.l.b16 %v2035
  %v2171 = vunpack.c.l.b16 %v2036
  %v2172 = vunpack.c.l.b16 %v2037
  %v2173 = vunpack.c.l.b16 %v2038
  %v2174 = vunpack.c.l.b16 %v2039
  %v2175 = vunpack.c.l.b16 %v2040
  %v2176 = vunpack.c.l.b16 %v2041
  %v2177 = vunpack.c.l.b16 %v2042
  %v2178 = vunpack.c.l.b16 %v2043
  %v2179 = vunpack.c.l.b16 %v2044
  %v2180 = vunpack.c.l.b16 %v2045
  %v2181 = vunpack.c.l.b16 %v2046
  %v2182 = vpack.c.b16 %v2119, %v2118
  %v2183 = vpack.c.b16 %v2121, %v2120
  %v2184 = vpack.c.b16 %v2123, %v2122
  %v2185 = vpack.c.b16 %v2125, %v2124
  %v2186 = vpack.c.b16 %v2127, %v2126
  %v2187 = vpack.c.b16 %v2129, %v2128
  %v2188 = vpack.c.b16 %v2131, %v2130
  %v2189 = vpack.c.b16 %v2133, %v2132
  %v2190 = vpack.c.b16 %v2135, %v2134
  %v2191 = vpack.c.b16 %v2137, %v2136
  %v2192 = vpack.c.b16 %v2139, %v2138
  %v2193 = vpack.c.b16 %v2141, %v2140
  %v2194 = vpack.c.b16 %v2143, %v2142
  %v2195 = vpack.c.b16 %v2145, %v2144
  %v2196 = vpack.c.b16 %v2147, %v2146
  %v2197 = vpack.c.b16 %v2149, %v2148
  %v2198 = vpack.c.b16 %v2151, %v2150
  %v2199 = vpack.c.b16 %v2153, %v2152
  %v2200 = vpack.c.b16 %v2155, %v2154
  %v2201 = vpack.c.b16 %v2157, %v2156
  %v2202 = vpack.c.b16 %v2159, %v2158
  %v2203 = vpack.c.b16 %v2161, %v2160
  %v2204 = vpack.c.b16 %v2163, %v2162
  %v2205 = vpack.c.b16 %v2165, %v2164
  %v2206 = vpack.c.b16 %v2167, %v2166
  %v2207 = vpack.c.b16 %v2169, %v2168
  %v2208 = vpack.c.b16 %v2171, %v2170
  %v2209 = vpack.c.b16 %v2173, %v2172
  %v2210 = vpack.c.b16 %v2175, %v2174
  %v2211 = vpack.c.b16 %v2177, %v2176
  %v2212 = vpack.c.b16 %v2179, %v2178
  %v2213 = vpack.c.b16 %v2181, %v2180
  %2246 = vmatprep.subr.bf16.mxu0 0
  %2247 = vmatpush1.bf16.msra.mxu0 %v2182
  %2248 = vmatprep.subr.bf16.mxu0 0
  %2249 = vmatpush1.bf16.msra.mxu0 %v2183
  %2250 = vmatprep.subr.bf16.mxu0 0
  %2251 = vmatpush1.bf16.msra.mxu0 %v2184
  %2252 = vmatprep.subr.bf16.mxu0 0
  %2253 = vmatpush1.bf16.msra.mxu0 %v2185
  %2254 = vmatprep.subr.bf16.mxu0 0
  %2255 = vmatpush1.bf16.msra.mxu0 %v2186
  %2256 = vmatprep.subr.bf16.mxu0 0
  %2257 = vmatpush1.bf16.msra.mxu0 %v2187
  %2258 = vmatprep.subr.bf16.mxu0 0
  %2259 = vmatpush1.bf16.msra.mxu0 %v2188
  %2260 = vmatprep.subr.bf16.mxu0 0
  %2261 = vmatpush1.bf16.msra.mxu0 %v2189
  %2262 = vmatprep.subr.bf16.mxu0 0
  %2263 = vmatpush1.bf16.msra.mxu0 %v2190
  %2264 = vmatprep.subr.bf16.mxu0 0
  %2265 = vmatpush1.bf16.msra.mxu0 %v2191
  %2266 = vmatprep.subr.bf16.mxu0 0
  %2267 = vmatpush1.bf16.msra.mxu0 %v2192
  %2268 = vmatprep.subr.bf16.mxu0 0
  %2269 = vmatpush1.bf16.msra.mxu0 %v2193
  %2270 = vmatprep.subr.bf16.mxu0 0
  %2271 = vmatpush1.bf16.msra.mxu0 %v2194
  %2272 = vmatprep.subr.bf16.mxu0 0
  %2273 = vmatpush1.bf16.msra.mxu0 %v2195
  %2274 = vmatprep.subr.bf16.mxu0 0
  %2275 = vmatpush1.bf16.msra.mxu0 %v2196
  %2276 = vmatprep.subr.bf16.mxu0 0
  %2277 = vmatpush1.bf16.msra.mxu0 %v2197
  %2278 = vmatprep.mubr.bf16.mxu0 %v1980
  %2279 = vmatmul.mubr.bf16.gmra.mrb[0].mxu0 %v1979
  %v2280 = vpop.f32.mrb[0].mxu0
  %v2281 = vadd.f32 %v2052, %v2280
  %v2282 = vpop.f32.mrb[0].mxu0
  %v2283 = vpop.f32.mrb[0].mxu0
  %v2284 = vadd.f32 %v2052, %v2283
  %v2285 = vpop.f32.mrb[0].mxu0
  %2286 = vdwg.mxu0
  %2287 = vmatprep.subr.bf16.mxu0 0
  %2288 = vmatpush1.bf16.msra.mxu0 %v2198
  %2289 = vmatprep.subr.bf16.mxu0 0
  %2290 = vmatpush1.bf16.msra.mxu0 %v2199
  %2291 = vmatprep.subr.bf16.mxu0 0
  %2292 = vmatpush1.bf16.msra.mxu0 %v2200
  %2293 = vmatprep.subr.bf16.mxu0 0
  %2294 = vmatpush1.bf16.msra.mxu0 %v2201
  %2295 = vmatprep.subr.bf16.mxu0 0
  %2296 = vmatpush1.bf16.msra.mxu0 %v2202
  %2297 = vmatprep.subr.bf16.mxu0 0
  %2298 = vmatpush1.bf16.msra.mxu0 %v2203
  %2299 = vmatprep.subr.bf16.mxu0 0
  %2300 = vmatpush1.bf16.msra.mxu0 %v2204
  %2301 = vmatprep.subr.bf16.mxu0 0
  %2302 = vmatpush1.bf16.msra.mxu0 %v2205
  %2303 = vmatprep.subr.bf16.mxu0 0
  %2304 = vmatpush1.bf16.msra.mxu0 %v2206
  %2305 = vmatprep.subr.bf16.mxu0 0
  %2306 = vmatpush1.bf16.msra.mxu0 %v2207
  %2307 = vmatprep.subr.bf16.mxu0 0
  %2308 = vmatpush1.bf16.msra.mxu0 %v2208
  %2309 = vmatprep.subr.bf16.mxu0 0
  %2310 = vmatpush1.bf16.msra.mxu0 %v2209
  %2311 = vmatprep.subr.bf16.mxu0 0
  %2312 = vmatpush1.bf16.msra.mxu0 %v2210
  %2313 = vmatprep.subr.bf16.mxu0 0
  %2314 = vmatpush1.bf16.msra.mxu0 %v2211
  %2315 = vmatprep.subr.bf16.mxu0 0
  %2316 = vmatpush1.bf16.msra.mxu0 %v2212
  %2317 = vmatprep.subr.bf16.mxu0 0
  %2318 = vmatpush1.bf16.msra.mxu0 %v2213
  %2319 = vmatprep.mubr.bf16.mxu0 %v1982
  %2320 = vmatmul.mubr.bf16.gmra.mrb[0].mxu0 %v1981
  %v2321 = vpop.f32.mrb[0].mxu0
  %v2322 = vadd.f32 %v2281, %v2321
  %v2323 = vpop.f32.mrb[0].mxu0
  %v2324 = vpop.f32.mrb[0].mxu0
  %v2325 = vadd.f32 %v2284, %v2324
  %v2326 = vpop.f32.mrb[0].mxu0
  %2327 = vdwg.mxu0
  %2328 = vmax.xlane.f32.xlu0 %v2322
  %v2329 = vpop.xlane.xlu0 %2328
  %2330 = vmax.xlane.f32.xlu0 %v2325
  %v2331 = vpop.xlane.xlu0 %2330
  %v2332 = vsub.f32 %v2322, %v2329
  %v2333 = vsub.f32 %v2325, %v2331
  %v2334 = vmul.f32 %v2332, 1.442695
  %v2335 = vpow.pop %v2334
  %v2336 = vmul.f32 %v2333, 1.442695
  %v2337 = vpow.pop %v2336
  %2338 = vadd.xlane.f32.xlu0 %v2335
  %v2339 = vpop.xlane.xlu0 %2338
  %2340 = vadd.xlane.f32.xlu0 %v2337
  %v2341 = vpop.xlane.xlu0 %2340
  %v2342 = vlog2.pop %v2339
  %v2343 = vmul.f32 %v2342, 0.6931472
  %v2344 = vlog2.pop %v2341
  %v2345 = vmul.f32 %v2344, 0.6931472
  %v2346 = vsub.f32 %v2332, %v2343
  %v2347 = vsub.f32 %v2333, %v2345
  %2348 = vst [vmem:[%s5] sm:$0xff] %v2346
  %2349 = vst [vmem:[%s5 + $0x8] sm:$0xff] %v2347
  // Predicated region
  $region22: #{net_forward.9} parent=0 // pred_check
    _
  $region23: #{net_forward.9} parent=0 // pred_check_branch
    %2351 = sbr.rel (0) target = $region25
  $region24: #{net_forward.9} parent=0 // pred_region
    _
  $region25: #{net_forward.9} parent=0 // pred_fallthru
    _
  // Predicated region
  $region26: #{net_forward.9} parent=0 // pred_check
    _
  $region27: #{net_forward.9} parent=0 // pred_check_branch
    %2353 = sbr.rel (0) target = $region29
  $region28: #{net_forward.9} parent=0 // pred_region
    _
  $region29: #{net_forward.9} parent=0 // pred_fallthru
    _

</llo_original>
